<compile_context>
chip_gen: v7x
topology: tpu7x:2x2x1
jax: 0.10.0
libtpu: 0.0.40
codegen_flags: <defaults>
</compile_context>

<pallas_src>
from functools import partial

import jax
import jax.numpy as jnp
from jax.experimental import pallas as pl
from jax.experimental.pallas import tpu as pltpu

EMBED = 100                        # embedding_size in the PyTorch module
CONV_CH = 64                       # out channels of every Conv1d
SEQ_LEN = 52                       # sentence/shortest length -> 64*98 fc1 input
HALF = SEQ_LEN // 2                # 26 even / odd time rows
HALFP = HALF + 1                   # +1 zero pad row so K=5 windows never run off
P3 = (SEQ_LEN - 3 + 1) // 2        # 25 pooled positions of the K=3 conv
P5 = (SEQ_LEN - 5 + 1) // 2        # 24 pooled positions of the K=5 conv
NPOS = P3                          # rows of the fused conv output per branch
CMB = 2 * CONV_CH                  # 128 = [conv3 | conv5] channels (lane-dense)
FEAT = 2 * (P3 + P5) * CONV_CH     # 6272 == 64 * 98  (torch fc1 in-features)
FEATK = 2 * NPOS * CMB             # 6400 kernel-layout features (128 zero rows)
HID1, HID2 = 100, 64


# ----------------------------------------------------------------------------
# Kernel 1: fused Conv1d(K=3)+Conv1d(K=5) + bias + ReLU + MaxPool1d(2),
#           one branch per grid step (parallel -> one branch per TC on v7x).
# ----------------------------------------------------------------------------
def _conv_pool_kernel(xe_ref, xo_ref, wc_ref, bc_ref, o_ref, *, B):
    # xe_ref/xo_ref: (1, B, HALFP, E) f32   even / odd time rows (+1 zero row)
    # wc_ref: (1, 5E, 128) bf16   columns 0:64 = padded K=3 weight, 64:128 = K=5
    # bc_ref: (1, 1, 128) f32     [b3 | b5]
    # o_ref : (B, 1, NPOS, 128) bf16  pooled features, time-major
    bf = jnp.bfloat16
    wc = wc_ref[0]                      # (5E, 128)
    bc = bc_ref[0]                      # (1, 128)
    for b in range(B):                  # B is tiny -> static unroll
        xe = xe_ref[0, b]               # (HALFP, E)  rows 0,2,4,... (+pad)
        xo = xo_ref[0, b]               # (HALFP, E)  rows 1,3,5,... (+pad)
        # K=5 im2col windows per output parity; their first 3 chunks are
        # exactly the K=3 windows, so one matmul yields both convs.
        le = jnp.concatenate([xe[0:NPOS], xo[0:NPOS], xe[1:NPOS + 1],
                              xo[1:NPOS + 1], xe[2:NPOS + 2]], axis=-1)
        lo = jnp.concatenate([xo[0:NPOS], xe[1:NPOS + 1], xo[1:NPOS + 1],
                              xe[2:NPOS + 2], xo[2:NPOS + 2]], axis=-1)
        ye = jnp.dot(le.astype(bf), wc, preferred_element_type=jnp.float32)
        yo = jnp.dot(lo.astype(bf), wc, preferred_element_type=jnp.float32)
        # MaxPool1d(2) == max over the even/odd pair; bias-add & ReLU commute.
        p = jnp.maximum(jnp.maximum(ye, yo) + bc, 0.0)       # (NPOS, 128) f32
        o_ref[b, 0, :, :] = p.astype(bf)
    # (row p=24 of the K=5 half is computed from the zero-pad row; it is finite
    #  and its matching fc1 weight rows are zero, so it never contributes.)


def conv_pool_fused(xe, xo, wc, bc):
    """xe/xo: (2, B, HALFP, E) f32; wc/bc stacked per branch. -> (B,2,NPOS,128)."""
    _, B, _, _ = xe.shape
    kern = partial(_conv_pool_kernel, B=B)
    return pl.pallas_call(
        kern,
        out_shape=jax.ShapeDtypeStruct((B, 2, NPOS, CMB), jnp.bfloat16),
        grid=(2,),                                 # one step per branch
        in_specs=[
            pl.BlockSpec((1, B, HALFP, EMBED), lambda i: (i, 0, 0, 0)),
            pl.BlockSpec((1, B, HALFP, EMBED), lambda i: (i, 0, 0, 0)),
            pl.BlockSpec((1, 5 * EMBED, CMB), lambda i: (i, 0, 0)),
            pl.BlockSpec((1, 1, CMB), lambda i: (i, 0, 0)),
        ],
        out_specs=pl.BlockSpec((B, 1, NPOS, CMB), lambda i: (0, i, 0, 0)),
        compiler_params=pltpu.CompilerParams(
            dimension_semantics=("parallel",)),    # v7x: one branch per TC
    )(xe, xo, wc, bc)


# ----------------------------------------------------------------------------
# Kernel 2: fused MLP head  fc1 -> relu -> fc2 -> relu -> fc3 -> sigmoid
# ----------------------------------------------------------------------------
def _mlp_kernel(x_ref, w1_ref, b1_ref, w2_ref, b2_ref, w3_ref, b3_ref, o_ref):
    h1 = jnp.dot(x_ref[...], w1_ref[...],
                 preferred_element_type=jnp.float32) + b1_ref[...]
    h1 = jnp.maximum(h1, 0.0)
    h2 = jnp.dot(h1.astype(jnp.bfloat16), w2_ref[...],
                 preferred_element_type=jnp.float32) + b2_ref[...]
    h2 = jnp.maximum(h2, 0.0)
    # fc3 is a (64 -> 1) projection: do it on the VPU/XLU as a lane reduction.
    z = jnp.sum(h2 * w3_ref[...], axis=-1, keepdims=True) + b3_ref[...]
    o_ref[...] = 1.0 / (1.0 + jnp.exp(-z))


def mlp_head(x, w1, b1, w2, b2, w3_row, b3):
    B = x.shape[0]
    vmem = pl.BlockSpec(memory_space=pltpu.MemorySpace.VMEM)
    # TODO(synk): if batch ever grows, tile B per grid step with fc1_w resident.
    return pl.pallas_call(
        _mlp_kernel,
        out_shape=jax.ShapeDtypeStruct((B, 1), jnp.float32),
        in_specs=[vmem] * 7,
        out_specs=vmem,
    )(x, w1, b1, w2, b2, w3_row, b3)


# ----------------------------------------------------------------------------
# Parameters (synthetic, deterministic) + one-time kernel-layout preparation
# ----------------------------------------------------------------------------
def init_params(key, vocab_size):
    ks = jax.random.split(key, 16)

    def u(k, shape, scale):
        return jax.random.uniform(k, shape, jnp.float32, -1.0, 1.0) * scale

    return {
        "emb":       jax.random.normal(ks[0], (vocab_size, EMBED)) * 0.1,
        "s_emb":     jax.random.normal(ks[1], (vocab_size, EMBED)) * 0.1,
        # conv weights stored in im2col layout (K*E, C): row k*E+e == W[c,e,k]
        "conv1_w":   u(ks[2], (3 * EMBED, CONV_CH), 0.05),
        "conv1_b":   u(ks[3], (1, CONV_CH), 0.05),
        "conv2_w":   u(ks[4], (5 * EMBED, CONV_CH), 0.05),
        "conv2_b":   u(ks[5], (1, CONV_CH), 0.05),
        "s_conv1_w": u(ks[6], (3 * EMBED, CONV_CH), 0.05),
        "s_conv1_b": u(ks[7], (1, CONV_CH), 0.05),
        "s_conv2_w": u(ks[8], (5 * EMBED, CONV_CH), 0.05),
        "s_conv2_b": u(ks[9], (1, CONV_CH), 0.05),
        # fc1 rows follow the torch cat order (channel-major flatten per branch)
        "fc1_w":     u(ks[10], (FEAT, HID1), 0.02),
        "fc1_b":     u(ks[11], (1, HID1), 0.02),
        "fc2_w":     u(ks[12], (HID1, HID2), 0.1),
        "fc2_b":     u(ks[13], (1, HID2), 0.1),
        "fc3_w":     u(ks[14], (HID2, 1), 0.1),
        "fc3_b":     u(ks[15], (1, 1), 0.1),
    }


def _fc1_weight_for_kernel(w):
    """Re-order torch-cat-ordered fc1 rows (FEAT, H) to the kernel feature
    layout (FEATK, H): index br*NPOS*CMB + p*CMB + c, with c<64 -> K=3 conv,
    c>=64 -> K=5 conv (rows for the unused K=5 position p=24 are zero)."""
    outs = []
    for br in range(2):
        base = br * (P3 + P5) * CONV_CH
        blk3 = w[base: base + P3 * CONV_CH]
        blk3 = blk3.reshape(CONV_CH, P3, HID1).transpose(1, 0, 2)   # (P3,64,H)
        blk5 = w[base + P3 * CONV_CH: base + (P3 + P5) * CONV_CH]
        blk5 = blk5.reshape(CONV_CH, P5, HID1).transpose(1, 0, 2)   # (P5,64,H)
        blk5 = jnp.pad(blk5, ((0, P3 - P5), (0, 0), (0, 0)))        # zero p=24
        outs.append(jnp.concatenate([blk3, blk5], axis=1))          # (P3,128,H)
    return jnp.stack(outs, 0).reshape(FEATK, HID1)


def prepare_params(p):
    """One-time re-layout/cast of the logical (torch-style) params for kernels."""
    bf = jnp.bfloat16

    def comb_w(w3, w5):   # (3E,C),(5E,C) -> (5E, 2C): [padded K=3 | K=5]
        return jnp.concatenate([jnp.pad(w3, ((0, 2 * EMBED), (0, 0))), w5], 1)

    def comb_b(b3, b5):   # (1,C),(1,C) -> (1, 2C)
        return jnp.concatenate([b3, b5], axis=1)

    return {
        "emb":   p["emb"],
        "s_emb": p["s_emb"],
        "wc": jnp.stack([comb_w(p["conv1_w"], p["conv2_w"]),
                         comb_w(p["s_conv1_w"], p["s_conv2_w"])], 0).astype(bf),
        "bc": jnp.stack([comb_b(p["conv1_b"], p["conv2_b"]),
                         comb_b(p["s_conv1_b"], p["s_conv2_b"])], 0),
        "fc1_w": _fc1_weight_for_kernel(p["fc1_w"]).astype(bf),
        "fc1_b": p["fc1_b"],
        "fc2_w": p["fc2_w"].astype(bf),
        "fc2_b": p["fc2_b"],
        "fc3_w": p["fc3_w"].T,                    # (1, C) row vector, f32
        "fc3_b": p["fc3_b"],
    }


# ----------------------------------------------------------------------------
# Full forward (mirrors MultiCnn.forward; `features` is unused, as in torch)
# ----------------------------------------------------------------------------
def multi_cnn_forward(prep, sentence, features, shortest):
    del features  # unused by the PyTorch forward as well
    B = sentence.shape[0]
    emb = jnp.take(prep["emb"], sentence, axis=0)        # (B, L, E) f32
    s_emb = jnp.take(prep["s_emb"], shortest, axis=0)    # (B, L, E)

    # Even/odd time split (free XLA slices) + one zero pad row + branch stack.
    def split(x):
        xe = jnp.pad(x[:, 0::2, :], ((0, 0), (0, 1), (0, 0)))
        xo = jnp.pad(x[:, 1::2, :], ((0, 0), (0, 1), (0, 0)))
        return xe, xo

    e_e, e_o = split(emb)
    s_e, s_o = split(s_emb)
    xe = jnp.stack([e_e, s_e], axis=0)                   # (2, B, HALFP, E)
    xo = jnp.stack([e_o, s_o], axis=0)

    pooled = conv_pool_fused(xe, xo, prep["wc"], prep["bc"])  # (B,2,NPOS,128) bf16

    # Row-major collapse (bitcast reshape); fc1_w rows were permuted to match.
    cat = pooled.reshape(B, FEATK)

    # Dropout layers (drop1/2, s_drop1/2, drop4/5) are identity at inference.
    return mlp_head(cat, prep["fc1_w"], prep["fc1_b"],
                    prep["fc2_w"], prep["fc2_b"],
                    prep["fc3_w"], prep["fc3_b"])


# ----------------------------------------------------------------------------
# Pure-JAX reference mirroring the PyTorch forward (same bf16 operand casts)
# ----------------------------------------------------------------------------
def reference_forward(params, sentence, features, shortest):
    del features
    bf = jnp.bfloat16

    def conv_relu(x, w_flat, bias, K):
        L_out = x.shape[1] - K + 1
        acc = jnp.zeros((x.shape[0], L_out, CONV_CH), jnp.float32)
        for k in range(K):
            acc = acc + jnp.einsum(
                "ble,ec->blc",
                x[:, k:k + L_out, :].astype(bf),
                w_flat[k * EMBED:(k + 1) * EMBED, :].astype(bf),
                preferred_element_type=jnp.float32)
        return jnp.maximum(acc + bias, 0.0)

    def pool_flatten_torch(y):                       # MaxPool1d(2) + Flatten
        Bx, Lo, C = y.shape
        P = Lo // 2
        p = jnp.max(y[:, :2 * P, :].reshape(Bx, P, 2, C), axis=2)
        return jnp.transpose(p, (0, 2, 1)).reshape(Bx, C * P)  # channel-major

    emb = jnp.take(params["emb"], sentence, axis=0)
    s_emb = jnp.take(params["s_emb"], shortest, axis=0)
    f1 = pool_flatten_torch(conv_relu(emb, params["conv1_w"], params["conv1_b"], 3))
    f2 = pool_flatten_torch(conv_relu(emb, params["conv2_w"], params["conv2_b"], 5))
    f3 = pool_flatten_torch(conv_relu(s_emb, params["s_conv1_w"], params["s_conv1_b"], 3))
    f4 = pool_flatten_torch(conv_relu(s_emb, params["s_conv2_w"], params["s_conv2_b"], 5))
    cat = jnp.concatenate([f1, f2, f3, f4], axis=1)           # (B, 6272)

    h1 = jnp.maximum(
        jnp.dot(cat.astype(bf), params["fc1_w"].astype(bf),
                preferred_element_type=jnp.float32) + params["fc1_b"], 0.0)
    h2 = jnp.maximum(
        jnp.dot(h1.astype(bf), params["fc2_w"].astype(bf),
                preferred_element_type=jnp.float32) + params["fc2_b"], 0.0)
    z = jnp.dot(h2, params["fc3_w"]) + params["fc3_b"]
    return jax.nn.sigmoid(z)


if __name__ == "__main__":
    # L = 52 for both inputs makes the flattened feature size 64*98 = 6272,
    # matching fc1 = nn.Linear(64*98, 100) in the PyTorch module.
    B, VOCAB = 2, 50

    key = jax.random.PRNGKey(0)
    kp, ksent, kfeat, kshort = jax.random.split(key, 4)
    params = init_params(kp, VOCAB)
    prep = prepare_params(params)            # one-time weight re-layout / cast

    sentence = jax.random.randint(ksent, (B, SEQ_LEN), 0, VOCAB, dtype=jnp.int32)
    shortest = jax.random.randint(kshort, (B, SEQ_LEN), 0, VOCAB, dtype=jnp.int32)
    features = jax.random.normal(kfeat, (B, 8), jnp.float32)   # unused, as in torch

    fwd = jax.jit(multi_cnn_forward)
    out = jax.block_until_ready(fwd(prep, sentence, features, shortest))

    ref = reference_forward(params, sentence, features, shortest)
    assert out.shape == (B, 1), out.shape
    max_err = float(jnp.max(jnp.abs(out - ref)))
    if not bool(jnp.all(jnp.isfinite(out))) or max_err > 1e-3:
        raise RuntimeError(f"mismatch vs reference, max_err={max_err}")
    print("KERNEL_OK")
</pallas_src>

<mosaic_0001>
module attributes {stable_mosaic.version = 11 : i64} {
  func.func @_conv_pool_kernel(%arg0: i32, %arg1: memref<1x2x27x100xf32, #tpu.memory_space<vmem>>, %arg2: memref<1x2x27x100xf32, #tpu.memory_space<vmem>>, %arg3: memref<1x500x128xbf16, #tpu.memory_space<vmem>>, %arg4: memref<1x1x128xf32, #tpu.memory_space<vmem>>, %arg5: memref<2x1x25x128xbf16, #tpu.memory_space<vmem>>) attributes {dimension_semantics = [#tpu.dimension_semantics<parallel>], iteration_bounds = array<i64: 2>, scalar_prefetch = 0 : i64, scratch_operands = 0 : i64, tpu.core_type = #tpu.core_type<tc>, window_params = [{transform_indices = @transform_0, window_bounds = array<i64: 1, 2, 27, 100>}, {transform_indices = @transform_1, window_bounds = array<i64: 1, 2, 27, 100>}, {transform_indices = @transform_2, window_bounds = array<i64: 1, 500, 128>}, {transform_indices = @transform_3, window_bounds = array<i64: 1, 1, 128>}, {transform_indices = @transform_4, window_bounds = array<i64: 2, 1, 25, 128>}]} {
    %c0 = arith.constant 0 : index
    %c0_0 = arith.constant 0 : index
    %c0_1 = arith.constant 0 : index
    %0 = vector.load %arg3[%c0, %c0_0, %c0_1] : memref<1x500x128xbf16, #tpu.memory_space<vmem>>, vector<1x500x128xbf16>
    %1 = vector.shape_cast %0 : vector<1x500x128xbf16> to vector<500x128xbf16>
    %c0_2 = arith.constant 0 : index
    %c0_3 = arith.constant 0 : index
    %c0_4 = arith.constant 0 : index
    %2 = vector.load %arg4[%c0_2, %c0_3, %c0_4] : memref<1x1x128xf32, #tpu.memory_space<vmem>>, vector<1x1x128xf32>
    %3 = vector.shape_cast %2 : vector<1x1x128xf32> to vector<1x128xf32>
    %c0_5 = arith.constant 0 : index
    %c0_6 = arith.constant 0 : index
    %c0_7 = arith.constant 0 : index
    %c0_8 = arith.constant 0 : index
    %4 = vector.load %arg1[%c0_5, %c0_6, %c0_7, %c0_8] : memref<1x2x27x100xf32, #tpu.memory_space<vmem>>, vector<1x1x27x100xf32>
    %5 = vector.shape_cast %4 : vector<1x1x27x100xf32> to vector<27x100xf32>
    %c0_9 = arith.constant 0 : index
    %c0_10 = arith.constant 0 : index
    %c0_11 = arith.constant 0 : index
    %c0_12 = arith.constant 0 : index
    %6 = vector.load %arg2[%c0_9, %c0_10, %c0_11, %c0_12] : memref<1x2x27x100xf32, #tpu.memory_space<vmem>>, vector<1x1x27x100xf32>
    %7 = vector.shape_cast %6 : vector<1x1x27x100xf32> to vector<27x100xf32>
    %8 = vector.extract_strided_slice %5 {offsets = [0, 0], sizes = [25, 100], strides = [1, 1]} : vector<27x100xf32> to vector<25x100xf32>
    %9 = vector.extract_strided_slice %7 {offsets = [0, 0], sizes = [25, 100], strides = [1, 1]} : vector<27x100xf32> to vector<25x100xf32>
    %10 = vector.extract_strided_slice %5 {offsets = [1, 0], sizes = [25, 100], strides = [1, 1]} : vector<27x100xf32> to vector<25x100xf32>
    %11 = vector.extract_strided_slice %7 {offsets = [1, 0], sizes = [25, 100], strides = [1, 1]} : vector<27x100xf32> to vector<25x100xf32>
    %12 = vector.extract_strided_slice %5 {offsets = [2, 0], sizes = [25, 100], strides = [1, 1]} : vector<27x100xf32> to vector<25x100xf32>
    %13 = tpu.concatenate %8, %9, %10, %11, %12 in 1 : vector<25x100xf32>, vector<25x100xf32>, vector<25x100xf32>, vector<25x100xf32>, vector<25x100xf32> -> vector<25x500xf32>
    %14 = vector.extract_strided_slice %7 {offsets = [0, 0], sizes = [25, 100], strides = [1, 1]} : vector<27x100xf32> to vector<25x100xf32>
    %15 = vector.extract_strided_slice %5 {offsets = [1, 0], sizes = [25, 100], strides = [1, 1]} : vector<27x100xf32> to vector<25x100xf32>
    %16 = vector.extract_strided_slice %7 {offsets = [1, 0], sizes = [25, 100], strides = [1, 1]} : vector<27x100xf32> to vector<25x100xf32>
    %17 = vector.extract_strided_slice %5 {offsets = [2, 0], sizes = [25, 100], strides = [1, 1]} : vector<27x100xf32> to vector<25x100xf32>
    %18 = vector.extract_strided_slice %7 {offsets = [2, 0], sizes = [25, 100], strides = [1, 1]} : vector<27x100xf32> to vector<25x100xf32>
    %19 = tpu.concatenate %14, %15, %16, %17, %18 in 1 : vector<25x100xf32>, vector<25x100xf32>, vector<25x100xf32>, vector<25x100xf32>, vector<25x100xf32> -> vector<25x500xf32>
    %20 = arith.truncf %13 : vector<25x500xf32> to vector<25x500xbf16>
    %cst = arith.constant dense<0.000000e+00> : vector<25x128xf32>
    %21 = tpu.matmul %20, %1, %cst {dimension_numbers = #tpu.dot_dimension_numbers<[1], [0], [0], [1], [0, 0, 1, 1], [], []>} : vector<25x500xbf16>, vector<500x128xbf16>, vector<25x128xf32> -> vector<25x128xf32>
    %22 = arith.truncf %19 : vector<25x500xf32> to vector<25x500xbf16>
    %cst_13 = arith.constant dense<0.000000e+00> : vector<25x128xf32>
    %23 = tpu.matmul %22, %1, %cst_13 {dimension_numbers = #tpu.dot_dimension_numbers<[1], [0], [0], [1], [0, 0, 1, 1], [], []>} : vector<25x500xbf16>, vector<500x128xbf16>, vector<25x128xf32> -> vector<25x128xf32>
    %24 = arith.maximumf %21, %23 : vector<25x128xf32>
    %25 = vector.broadcast %3 : vector<1x128xf32> to vector<25x128xf32>
    %26 = arith.addf %24, %25 : vector<25x128xf32>
    %cst_14 = arith.constant 0.000000e+00 : f32
    %27 = vector.broadcast %cst_14 : f32 to vector<25x128xf32>
    %28 = arith.maximumf %26, %27 : vector<25x128xf32>
    %29 = arith.truncf %28 : vector<25x128xf32> to vector<25x128xbf16>
    %c0_15 = arith.constant 0 : index
    %c0_16 = arith.constant 0 : index
    %c0_17 = arith.constant 0 : index
    %c0_18 = arith.constant 0 : index
    %30 = vector.load %arg5[%c0_15, %c0_16, %c0_17, %c0_18] : memref<2x1x25x128xbf16, #tpu.memory_space<vmem>>, vector<1x1x25x128xbf16>
    %31 = vector.shape_cast %30 : vector<1x1x25x128xbf16> to vector<25x128xbf16>
    %32 = vector.shape_cast %29 : vector<25x128xbf16> to vector<1x1x25x128xbf16>
    tpu.vector_store %arg5[%c0_15, %c0_16, %c0_17, %c0_18], %32 {strides = array<i32>} : memref<2x1x25x128xbf16, #tpu.memory_space<vmem>>, vector<1x1x25x128xbf16>,
    %c0_19 = arith.constant 0 : index
    %c1 = arith.constant 1 : index
    %c0_20 = arith.constant 0 : index
    %c0_21 = arith.constant 0 : index
    %33 = vector.load %arg1[%c0_19, %c1, %c0_20, %c0_21] : memref<1x2x27x100xf32, #tpu.memory_space<vmem>>, vector<1x1x27x100xf32>
    %34 = vector.shape_cast %33 : vector<1x1x27x100xf32> to vector<27x100xf32>
    %c0_22 = arith.constant 0 : index
    %c1_23 = arith.constant 1 : index
    %c0_24 = arith.constant 0 : index
    %c0_25 = arith.constant 0 : index
    %35 = vector.load %arg2[%c0_22, %c1_23, %c0_24, %c0_25] : memref<1x2x27x100xf32, #tpu.memory_space<vmem>>, vector<1x1x27x100xf32>
    %36 = vector.shape_cast %35 : vector<1x1x27x100xf32> to vector<27x100xf32>
    %37 = vector.extract_strided_slice %34 {offsets = [0, 0], sizes = [25, 100], strides = [1, 1]} : vector<27x100xf32> to vector<25x100xf32>
    %38 = vector.extract_strided_slice %36 {offsets = [0, 0], sizes = [25, 100], strides = [1, 1]} : vector<27x100xf32> to vector<25x100xf32>
    %39 = vector.extract_strided_slice %34 {offsets = [1, 0], sizes = [25, 100], strides = [1, 1]} : vector<27x100xf32> to vector<25x100xf32>
    %40 = vector.extract_strided_slice %36 {offsets = [1, 0], sizes = [25, 100], strides = [1, 1]} : vector<27x100xf32> to vector<25x100xf32>
    %41 = vector.extract_strided_slice %34 {offsets = [2, 0], sizes = [25, 100], strides = [1, 1]} : vector<27x100xf32> to vector<25x100xf32>
    %42 = tpu.concatenate %37, %38, %39, %40, %41 in 1 : vector<25x100xf32>, vector<25x100xf32>, vector<25x100xf32>, vector<25x100xf32>, vector<25x100xf32> -> vector<25x500xf32>
    %43 = vector.extract_strided_slice %36 {offsets = [0, 0], sizes = [25, 100], strides = [1, 1]} : vector<27x100xf32> to vector<25x100xf32>
    %44 = vector.extract_strided_slice %34 {offsets = [1, 0], sizes = [25, 100], strides = [1, 1]} : vector<27x100xf32> to vector<25x100xf32>
    %45 = vector.extract_strided_slice %36 {offsets = [1, 0], sizes = [25, 100], strides = [1, 1]} : vector<27x100xf32> to vector<25x100xf32>
    %46 = vector.extract_strided_slice %34 {offsets = [2, 0], sizes = [25, 100], strides = [1, 1]} : vector<27x100xf32> to vector<25x100xf32>
    %47 = vector.extract_strided_slice %36 {offsets = [2, 0], sizes = [25, 100], strides = [1, 1]} : vector<27x100xf32> to vector<25x100xf32>
    %48 = tpu.concatenate %43, %44, %45, %46, %47 in 1 : vector<25x100xf32>, vector<25x100xf32>, vector<25x100xf32>, vector<25x100xf32>, vector<25x100xf32> -> vector<25x500xf32>
    %49 = arith.truncf %42 : vector<25x500xf32> to vector<25x500xbf16>
    %cst_26 = arith.constant dense<0.000000e+00> : vector<25x128xf32>
    %50 = tpu.matmul %49, %1, %cst_26 {dimension_numbers = #tpu.dot_dimension_numbers<[1], [0], [0], [1], [0, 0, 1, 1], [], []>} : vector<25x500xbf16>, vector<500x128xbf16>, vector<25x128xf32> -> vector<25x128xf32>
    %51 = arith.truncf %48 : vector<25x500xf32> to vector<25x500xbf16>
    %cst_27 = arith.constant dense<0.000000e+00> : vector<25x128xf32>
    %52 = tpu.matmul %51, %1, %cst_27 {dimension_numbers = #tpu.dot_dimension_numbers<[1], [0], [0], [1], [0, 0, 1, 1], [], []>} : vector<25x500xbf16>, vector<500x128xbf16>, vector<25x128xf32> -> vector<25x128xf32>
    %53 = arith.maximumf %50, %52 : vector<25x128xf32>
    %54 = vector.broadcast %3 : vector<1x128xf32> to vector<25x128xf32>
    %55 = arith.addf %53, %54 : vector<25x128xf32>
    %cst_28 = arith.constant 0.000000e+00 : f32
    %56 = vector.broadcast %cst_28 : f32 to vector<25x128xf32>
    %57 = arith.maximumf %55, %56 : vector<25x128xf32>
    %58 = arith.truncf %57 : vector<25x128xf32> to vector<25x128xbf16>
    %c1_29 = arith.constant 1 : index
    %c0_30 = arith.constant 0 : index
    %c0_31 = arith.constant 0 : index
    %c0_32 = arith.constant 0 : index
    %59 = vector.load %arg5[%c1_29, %c0_30, %c0_31, %c0_32] : memref<2x1x25x128xbf16, #tpu.memory_space<vmem>>, vector<1x1x25x128xbf16>
    %60 = vector.shape_cast %59 : vector<1x1x25x128xbf16> to vector<25x128xbf16>
    %61 = vector.shape_cast %58 : vector<25x128xbf16> to vector<1x1x25x128xbf16>
    tpu.vector_store %arg5[%c1_29, %c0_30, %c0_31, %c0_32], %61 {strides = array<i32>} : memref<2x1x25x128xbf16, #tpu.memory_space<vmem>>, vector<1x1x25x128xbf16>,
    return
  }
  func.func @transform_0(%arg0: i32) -> (i32, i32, i32, i32) {
    %c0_i32 = arith.constant 0 : i32
    %c0_i32_0 = arith.constant 0 : i32
    %c0_i32_1 = arith.constant 0 : i32
    %c0_i32_2 = arith.constant 0 : i32
    return %arg0, %c0_i32, %c0_i32_0, %c0_i32_1 : i32, i32, i32, i32
  }
  func.func @transform_1(%arg0: i32) -> (i32, i32, i32, i32) {
    %c0_i32 = arith.constant 0 : i32
    %c0_i32_0 = arith.constant 0 : i32
    %c0_i32_1 = arith.constant 0 : i32
    %c0_i32_2 = arith.constant 0 : i32
    return %arg0, %c0_i32, %c0_i32_0, %c0_i32_1 : i32, i32, i32, i32
  }
  func.func @transform_2(%arg0: i32) -> (i32, i32, i32) {
    %c0_i32 = arith.constant 0 : i32
    %c0_i32_0 = arith.constant 0 : i32
    %c0_i32_1 = arith.constant 0 : i32
    return %arg0, %c0_i32, %c0_i32_0 : i32, i32, i32
  }
  func.func @transform_3(%arg0: i32) -> (i32, i32, i32) {
    %c0_i32 = arith.constant 0 : i32
    %c0_i32_0 = arith.constant 0 : i32
    %c0_i32_1 = arith.constant 0 : i32
    return %arg0, %c0_i32, %c0_i32_0 : i32, i32, i32
  }
  func.func @transform_4(%arg0: i32) -> (i32, i32, i32, i32) {
    %c0_i32 = arith.constant 0 : i32
    %c0_i32_0 = arith.constant 0 : i32
    %c0_i32_1 = arith.constant 0 : i32
    %c0_i32_2 = arith.constant 0 : i32
    return %c0_i32, %arg0, %c0_i32_0, %c0_i32_1 : i32, i32, i32, i32
  }
}

module attributes {stable_mosaic.version = 11 : i64} {
  func.func @_mlp_kernel(%arg0: memref<2x6400xbf16, #tpu.memory_space<vmem>>, %arg1: memref<6400x100xbf16, #tpu.memory_space<vmem>>, %arg2: memref<1x100xf32, #tpu.memory_space<vmem>>, %arg3: memref<100x64xbf16, #tpu.memory_space<vmem>>, %arg4: memref<1x64xf32, #tpu.memory_space<vmem>>, %arg5: memref<1x64xf32, #tpu.memory_space<vmem>>, %arg6: memref<1x1xf32, #tpu.memory_space<vmem>>, %arg7: memref<2x1xf32, #tpu.memory_space<vmem>>) attributes {dimension_semantics = [], scalar_prefetch = 0 : i64, scratch_operands = 0 : i64, tpu.core_type = #tpu.core_type<tc>} {
    %c0 = arith.constant 0 : index
    %c0_0 = arith.constant 0 : index
    %0 = vector.load %arg0[%c0, %c0_0] : memref<2x6400xbf16, #tpu.memory_space<vmem>>, vector<2x6400xbf16>
    %c0_1 = arith.constant 0 : index
    %c0_2 = arith.constant 0 : index
    %1 = vector.load %arg1[%c0_1, %c0_2] : memref<6400x100xbf16, #tpu.memory_space<vmem>>, vector<6400x100xbf16>
    %cst = arith.constant dense<0.000000e+00> : vector<2x100xf32>
    %2 = tpu.matmul %0, %1, %cst {dimension_numbers = #tpu.dot_dimension_numbers<[1], [0], [0], [1], [0, 0, 1, 1], [], []>} : vector<2x6400xbf16>, vector<6400x100xbf16>, vector<2x100xf32> -> vector<2x100xf32>
    %c0_3 = arith.constant 0 : index
    %c0_4 = arith.constant 0 : index
    %3 = vector.load %arg2[%c0_3, %c0_4] : memref<1x100xf32, #tpu.memory_space<vmem>>, vector<1x100xf32>
    %4 = vector.broadcast %3 : vector<1x100xf32> to vector<2x100xf32>
    %5 = arith.addf %2, %4 : vector<2x100xf32>
    %cst_5 = arith.constant 0.000000e+00 : f32
    %6 = vector.broadcast %cst_5 : f32 to vector<2x100xf32>
    %7 = arith.maximumf %5, %6 : vector<2x100xf32>
    %8 = arith.truncf %7 : vector<2x100xf32> to vector<2x100xbf16>
    %c0_6 = arith.constant 0 : index
    %c0_7 = arith.constant 0 : index
    %9 = vector.load %arg3[%c0_6, %c0_7] : memref<100x64xbf16, #tpu.memory_space<vmem>>, vector<100x64xbf16>
    %cst_8 = arith.constant dense<0.000000e+00> : vector<2x64xf32>
    %10 = tpu.matmul %8, %9, %cst_8 {dimension_numbers = #tpu.dot_dimension_numbers<[1], [0], [0], [1], [0, 0, 1, 1], [], []>} : vector<2x100xbf16>, vector<100x64xbf16>, vector<2x64xf32> -> vector<2x64xf32>
    %c0_9 = arith.constant 0 : index
    %c0_10 = arith.constant 0 : index
    %11 = vector.load %arg4[%c0_9, %c0_10] : memref<1x64xf32, #tpu.memory_space<vmem>>, vector<1x64xf32>
    %12 = vector.broadcast %11 : vector<1x64xf32> to vector<2x64xf32>
    %13 = arith.addf %10, %12 : vector<2x64xf32>
    %cst_11 = arith.constant 0.000000e+00 : f32
    %14 = vector.broadcast %cst_11 : f32 to vector<2x64xf32>
    %15 = arith.maximumf %13, %14 : vector<2x64xf32>
    %c0_12 = arith.constant 0 : index
    %c0_13 = arith.constant 0 : index
    %16 = vector.load %arg5[%c0_12, %c0_13] : memref<1x64xf32, #tpu.memory_space<vmem>>, vector<1x64xf32>
    %17 = vector.broadcast %16 : vector<1x64xf32> to vector<2x64xf32>
    %18 = arith.mulf %15, %17 : vector<2x64xf32>
    %cst_14 = arith.constant dense<0.000000e+00> : vector<2xf32>
    %19 = vector.multi_reduction <add>, %18, %cst_14 [1] : vector<2x64xf32> to vector<2xf32>
    %20 = vector.shape_cast %19 : vector<2xf32> to vector<2x1xf32>
    %c0_15 = arith.constant 0 : index
    %c0_16 = arith.constant 0 : index
    %21 = vector.load %arg6[%c0_15, %c0_16] : memref<1x1xf32, #tpu.memory_space<vmem>>, vector<1x1xf32>
    %22 = vector.broadcast %21 : vector<1x1xf32> to vector<2x1xf32>
    %23 = arith.addf %20, %22 : vector<2x1xf32>
    %cst_17 = arith.constant 0.000000e+00 : f32
    %24 = vector.broadcast %cst_17 : f32 to vector<2x1xf32>
    %25 = arith.subf %24, %23 : vector<2x1xf32>
    %26 = math.exp %25 : vector<2x1xf32>
    %cst_18 = arith.constant 1.000000e+00 : f32
    %27 = vector.broadcast %cst_18 : f32 to vector<2x1xf32>
    %28 = arith.addf %27, %26 : vector<2x1xf32>
    %cst_19 = arith.constant 1.000000e+00 : f32
    %29 = vector.broadcast %cst_19 : f32 to vector<2x1xf32>
    %30 = arith.divf %29, %28 : vector<2x1xf32>
    %c0_20 = arith.constant 0 : index
    %c0_21 = arith.constant 0 : index
    %31 = vector.load %arg7[%c0_20, %c0_21] : memref<2x1xf32, #tpu.memory_space<vmem>>, vector<2x1xf32>
    tpu.vector_store %arg7[%c0_20, %c0_21], %30 {strides = array<i32>} : memref<2x1xf32, #tpu.memory_space<vmem>>, vector<2x1xf32>,
    return
  }
}

</mosaic_0001>

<llo_original>
// kernel: multi_cnn_forward.2
$region0: #{multi_cnn_forward.2}
  #allocation0 [shape = 'u32[]', space=smem, size = 0x4, offset = 0x4, fixed_abs, tag = 'smem constant byte address 0x4 - core index']
  #allocation1 [shape = 'u32[144,128]{1,0:T(1,128)}', space=vmem, size = 0x12000, scoped, tag = 'internal scratch']
  %s0 = inlined_call_operand.vmem [shape: f32[2,2,27,100], index: 0, kind: input, shape index: {}]
  %s1 = inlined_call_operand.vmem [shape: f32[2,2,27,100], index: 1, kind: input, shape index: {}]
  %s2 = inlined_call_operand.vmem [shape: bf16[2,500,128], index: 2, kind: input, shape index: {}]
  %s3 = inlined_call_operand.vmem [shape: f32[2,1,128], index: 3, kind: input, shape index: {}]
  %s4 = inlined_call_operand.vmem [shape: bf16[2,2,25,128], index: 4, kind: output, shape index: {}]
  %s5 = sld [smem:[#allocation0]]
  $region86: #{multi_cnn_forward.2} parent=0
    _
  %s7 = ssub.s32 1, %s5
  %s8 = scalar_select 0, %s7, %s5
  $region1: #{multi_cnn_forward.2} parent=0
    #allocation2 [shape = 'u8[32768]{0}', space=vmem, size = 0x8000, scoped, tag = 'output window, operand 0']
    loop: start=0, step=1, limit=4
    $region2: #{multi_cnn_forward.2} parent=1 // loop_pre_header
      _
    $region3: #{multi_cnn_forward.2} parent=1 // loop_header
      %s10 = sphi 0, %s14
      %p11 = scmp.ge.s32.totalorder %s10, 4
      %s20 = sphi 0, %s22
      %s23 = sphi 0, %s20
      %s24 = sphi 0, %s23
      %s40 = sphi 0, %s24
      %s46 = sphi 0, %s48
      %s49 = sphi 0, %s46
      %s50 = sphi 0, %s49
      %s66 = sphi 0, %s50
      %s72 = sphi 0, %s74
      %s75 = sphi 0, %s72
      %s76 = sphi 0, %s75
      %s92 = sphi 0, %s76
      %s98 = sphi 0, %s100
      %s101 = sphi 0, %s98
      %s102 = sphi 0, %s101
      %s118 = sphi 0, %s102
      %s124 = sphi 0, %s126
      %s127 = sphi 0, %s124
      %s128 = sphi 0, %s127
      %s144 = sphi 0, %s128
    $region4: #{multi_cnn_forward.2} parent=1 // loop_header_branch
      %13 = sbr.rel (%p11) target = $region8
    $region5: #{multi_cnn_forward.2} parent=1 // loop_body
      %s15 = ssub.s32 %s10, 1
      %s16 = ssub.s32 %s10, 2
      %s17 = sadd.s32 %s10, 1
      %s18 = ssub.s32 %s10, %s17
      %p19 = scmp.eq.s32.totalorder %s18, 0
      %s21 = sadd.s32 %s20, 1
      %s22 = scalar_select %p19, %s20, %s21
      %p25 = pneg %p19
      %p26 = scmp.eq.s32.totalorder %s10, 1
      %p27 = por %p25, %p26
      %p28 = scmp.ne.s32.totalorder %s20, %s23
      %p29 = scmp.eq.s32.totalorder %s10, 0
      %p30 = por %p28, %p29
      %p31 = scmp.ne.s32.totalorder %s20, %s23
      %p32 = scmp.eq.s32.totalorder %s15, 1
      %p33 = por %p31, %p32
      %p34 = scmp.ne.s32.totalorder %s23, %s24
      %p35 = scmp.eq.s32.totalorder %s15, 0
      %p36 = por %p34, %p35
      %p37 = scmp.ne.s32.totalorder %s23, %s24
      %p38 = scmp.eq.s32.totalorder %s16, 1
      %p39 = por %p37, %p38
      %p41 = scmp.ne.s32.totalorder %s24, %s40
      %p42 = scmp.eq.s32.totalorder %s16, 0
      %p43 = por %p41, %p42
      %s44 = ssub.s32 %s10, %s17
      %p45 = scmp.eq.s32.totalorder %s44, 0
      %s47 = sadd.s32 %s46, 1
      %s48 = scalar_select %p45, %s46, %s47
      %p51 = pneg %p45
      %p52 = scmp.eq.s32.totalorder %s10, 1
      %p53 = por %p51, %p52
      %p54 = scmp.ne.s32.totalorder %s46, %s49
      %p55 = scmp.eq.s32.totalorder %s10, 0
      %p56 = por %p54, %p55
      %p57 = scmp.ne.s32.totalorder %s46, %s49
      %p58 = scmp.eq.s32.totalorder %s15, 1
      %p59 = por %p57, %p58
      %p60 = scmp.ne.s32.totalorder %s49, %s50
      %p61 = scmp.eq.s32.totalorder %s15, 0
      %p62 = por %p60, %p61
      %p63 = scmp.ne.s32.totalorder %s49, %s50
      %p64 = scmp.eq.s32.totalorder %s16, 1
      %p65 = por %p63, %p64
      %p67 = scmp.ne.s32.totalorder %s50, %s66
      %p68 = scmp.eq.s32.totalorder %s16, 0
      %p69 = por %p67, %p68
      %s70 = ssub.s32 %s10, %s17
      %p71 = scmp.eq.s32.totalorder %s70, 0
      %s73 = sadd.s32 %s72, 1
      %s74 = scalar_select %p71, %s72, %s73
      %p77 = pneg %p71
      %p78 = scmp.eq.s32.totalorder %s10, 1
      %p79 = por %p77, %p78
      %p80 = scmp.ne.s32.totalorder %s72, %s75
      %p81 = scmp.eq.s32.totalorder %s10, 0
      %p82 = por %p80, %p81
      %p83 = scmp.ne.s32.totalorder %s72, %s75
      %p84 = scmp.eq.s32.totalorder %s15, 1
      %p85 = por %p83, %p84
      %p86 = scmp.ne.s32.totalorder %s75, %s76
      %p87 = scmp.eq.s32.totalorder %s15, 0
      %p88 = por %p86, %p87
      %p89 = scmp.ne.s32.totalorder %s75, %s76
      %p90 = scmp.eq.s32.totalorder %s16, 1
      %p91 = por %p89, %p90
      %p93 = scmp.ne.s32.totalorder %s76, %s92
      %p94 = scmp.eq.s32.totalorder %s16, 0
      %p95 = por %p93, %p94
      %s96 = ssub.s32 %s10, %s17
      %p97 = scmp.eq.s32.totalorder %s96, 0
      %s99 = sadd.s32 %s98, 1
      %s100 = scalar_select %p97, %s98, %s99
      %p103 = pneg %p97
      %p104 = scmp.eq.s32.totalorder %s10, 1
      %p105 = por %p103, %p104
      %p106 = scmp.ne.s32.totalorder %s98, %s101
      %p107 = scmp.eq.s32.totalorder %s10, 0
      %p108 = por %p106, %p107
      %p109 = scmp.ne.s32.totalorder %s98, %s101
      %p110 = scmp.eq.s32.totalorder %s15, 1
      %p111 = por %p109, %p110
      %p112 = scmp.ne.s32.totalorder %s101, %s102
      %p113 = scmp.eq.s32.totalorder %s15, 0
      %p114 = por %p112, %p113
      %p115 = scmp.ne.s32.totalorder %s101, %s102
      %p116 = scmp.eq.s32.totalorder %s16, 1
      %p117 = por %p115, %p116
      %p119 = scmp.ne.s32.totalorder %s102, %s118
      %p120 = scmp.eq.s32.totalorder %s16, 0
      %p121 = por %p119, %p120
      %s122 = ssub.s32 %s10, %s17
      %p123 = scmp.eq.s32.totalorder %s122, 0
      %s125 = sadd.s32 %s124, 1
      %s126 = scalar_select %p123, %s124, %s125
      %p129 = pneg %p123
      %p130 = scmp.eq.s32.totalorder %s10, 1
      %p131 = por %p129, %p130
      %p132 = scmp.ne.s32.totalorder %s124, %s127
      %p133 = scmp.eq.s32.totalorder %s10, 0
      %p134 = por %p132, %p133
      %p135 = scmp.ne.s32.totalorder %s124, %s127
      %p136 = scmp.eq.s32.totalorder %s15, 1
      %p137 = por %p135, %p136
      %p138 = scmp.ne.s32.totalorder %s127, %s128
      %p139 = scmp.eq.s32.totalorder %s15, 0
      %p140 = por %p138, %p139
      %p141 = scmp.ne.s32.totalorder %s127, %s128
      %p142 = scmp.eq.s32.totalorder %s16, 1
      %p143 = por %p141, %p142
      %p145 = scmp.ne.s32.totalorder %s128, %s144
      %p146 = scmp.eq.s32.totalorder %s16, 0
      %p147 = por %p145, %p146
      %p148 = scmp.le.s32.totalorder 1, %s10
      %p149 = scmp.lt.s32.totalorder %s10, 3
      %p150 = pnand %p148, %p149
      %p151 = pneg %p150
      // Predicated region
      $region9: #{multi_cnn_forward.2} parent=5 // pred_check
        _
      $region10: #{multi_cnn_forward.2} parent=5 // pred_check_branch
        %153 = sbr.rel (%p150) target = $region12
      $region11: #{multi_cnn_forward.2} parent=5 // pred_region
        %s154 = ssub.s32 %s10, 1
      $region12: #{multi_cnn_forward.2} parent=5 // pred_fallthru
        _
      %p155 = scmp.lt.s32.totalorder %s10, 2
      // Predicated region
      $region13: #{multi_cnn_forward.2} parent=5 // pred_check
        %p156 = pneg %p155
      $region14: #{multi_cnn_forward.2} parent=5 // pred_check_branch
        %158 = sbr.rel (%p156) target = $region16
      $region15: #{multi_cnn_forward.2} parent=5 // pred_region
        // Predicated region
        $region17: #{multi_cnn_forward.2} parent=15 // pred_check
          %p159 = pneg %p30
        $region18: #{multi_cnn_forward.2} parent=15 // pred_check_branch
          %161 = sbr.rel (%p159) target = $region20
        $region19: #{multi_cnn_forward.2} parent=15 // pred_region
          %p162 = scmp.lt.s32.totalorder %s10, 1
          %s163 = scalar_select %p162, %s10, 1
          %s164 = smul.addr %s163, 8
          %s165 = smul.addr %s164, 8
          %s166 = scalar_lea.vmem %s0, %s165
        $region20: #{multi_cnn_forward.2} parent=15 // pred_fallthru
          _
        // Predicated region
        $region21: #{multi_cnn_forward.2} parent=15 // pred_check
          %p167 = pneg %p56
        $region22: #{multi_cnn_forward.2} parent=15 // pred_check_branch
          %169 = sbr.rel (%p167) target = $region24
        $region23: #{multi_cnn_forward.2} parent=15 // pred_region
          %p170 = scmp.lt.s32.totalorder %s10, 1
          %s171 = scalar_select %p170, %s10, 1
          %s172 = smul.addr %s171, 8
          %s173 = smul.addr %s172, 8
          %s174 = scalar_lea.vmem %s1, %s173
        $region24: #{multi_cnn_forward.2} parent=15 // pred_fallthru
          _
        // Predicated region
        $region25: #{multi_cnn_forward.2} parent=15 // pred_check
          %p175 = pneg %p82
        $region26: #{multi_cnn_forward.2} parent=15 // pred_check_branch
          %177 = sbr.rel (%p175) target = $region28
        $region27: #{multi_cnn_forward.2} parent=15 // pred_region
          %p178 = scmp.lt.s32.totalorder %s10, 1
          %s179 = scalar_select %p178, %s10, 1
          %s180 = smul.addr %s179, 63
          %s181 = smul.addr %s180, 4
          %s182 = scalar_lea.vmem %s2, %s181
        $region28: #{multi_cnn_forward.2} parent=15 // pred_fallthru
          _
        // Predicated region
        $region29: #{multi_cnn_forward.2} parent=15 // pred_check
          %p183 = pneg %p108
        $region30: #{multi_cnn_forward.2} parent=15 // pred_check_branch
          %185 = sbr.rel (%p183) target = $region32
        $region31: #{multi_cnn_forward.2} parent=15 // pred_region
          %p186 = scmp.lt.s32.totalorder %s10, 1
          %s187 = scalar_select %p186, %s10, 1
          %s188 = scalar_lea.vmem %s3, %s187
        $region32: #{multi_cnn_forward.2} parent=15 // pred_fallthru
          _
      $region16: #{multi_cnn_forward.2} parent=5 // pred_fallthru
        _
      %p189 = scmp.le.s32.totalorder 1, %s10
      %p190 = scmp.lt.s32.totalorder %s10, 3
      %p191 = pnand %p189, %p190
      %p192 = pneg %p191
      // Predicated region
      $region33: #{multi_cnn_forward.2} parent=5 // pred_check
        _
      $region34: #{multi_cnn_forward.2} parent=5 // pred_check_branch
        %194 = sbr.rel (%p191) target = $region36
      $region35: #{multi_cnn_forward.2} parent=5 // pred_region
        %s195 = ssub.s32 %s10, 1
        %p196 = scmp.lt.s32.totalorder %s15, 1
        %s197 = scalar_select %p196, %s15, 1
        %s198 = smul.addr %s197, 8
        %s199 = smul.addr %s198, 8
        %s200 = scalar_lea.vmem %s0, %s199
        %p201 = pneg %p36
        %p202 = pneg %p33
        %p203 = scmp.lt.s32.totalorder %s15, 1
        %s204 = scalar_select %p203, %s15, 1
        %s205 = smul.addr %s204, 8
        %s206 = smul.addr %s205, 8
        %s207 = scalar_lea.vmem %s1, %s206
        %p208 = pneg %p62
        %p209 = pneg %p59
        %p210 = scmp.lt.s32.totalorder %s15, 1
        %s211 = scalar_select %p210, %s15, 1
        %s212 = smul.addr %s211, 63
        %s213 = smul.addr %s212, 4
        %s214 = scalar_lea.vmem %s2, %s213
        %p215 = pneg %p88
        %p216 = pneg %p85
        %p217 = scmp.lt.s32.totalorder %s15, 1
        %s218 = scalar_select %p217, %s15, 1
        %s219 = scalar_lea.vmem %s3, %s218
        %p220 = pneg %p114
        %p221 = pneg %p111
        %p222 = pneg %p140
        %p223 = pneg %p137
        %s224 = sand.u32 %s127, 1
        %s225 = sand.u32 %s127, 1
        %s226 = smul.addr %s225, 32
        %s227 = scalar_lea.vmem [#allocation2], %s226
        %p228 = scmp.lt.s32.totalorder %s15, 1
        %s229 = scalar_select %p228, %s15, 1
        %s230 = smul.addr %s229, 8
        %s231 = smul.addr %s230, 8
        %s232 = scalar_lea.vmem %s0, %s231
        %p233 = scmp.lt.s32.totalorder %s15, 1
        %s234 = scalar_select %p233, %s15, 1
        %s235 = smul.addr %s234, 8
        %s236 = smul.addr %s235, 8
        %s237 = scalar_lea.vmem %s1, %s236
        %p238 = scmp.lt.s32.totalorder %s15, 1
        %s239 = scalar_select %p238, %s15, 1
        %s240 = smul.addr %s239, 63
        %s241 = smul.addr %s240, 4
        %s242 = scalar_lea.vmem %s2, %s241
        %p243 = scmp.lt.s32.totalorder %s15, 1
        %s244 = scalar_select %p243, %s15, 1
        %s245 = scalar_lea.vmem %s3, %s244
        %v247 = vld [vmem:[%s242] sm:$0xf]
        %v248 = vld [vmem:[%s242 + $0x4] sm:$0xf]
        %v249 = vld [vmem:[%s242 + $0x8] sm:$0xf]
        %v250 = vld [vmem:[%s242 + $0xc] sm:$0xf]
        %v251 = vld [vmem:[%s242 + $0x10] sm:$0xf]
        %v252 = vld [vmem:[%s242 + $0x14] sm:$0xf]
        %v253 = vld [vmem:[%s242 + $0x18] sm:$0xf]
        %v254 = vld [vmem:[%s242 + $0x1c] sm:$0xf]
        %v255 = vld [vmem:[%s242 + $0x20] sm:$0xf]
        %v256 = vld [vmem:[%s242 + $0x24] sm:$0xf]
        %v257 = vld [vmem:[%s242 + $0x28] sm:$0xf]
        %v258 = vld [vmem:[%s242 + $0x2c] sm:$0xf]
        %v259 = vld [vmem:[%s242 + $0x30] sm:$0xf]
        %v260 = vld [vmem:[%s242 + $0x34] sm:$0xf]
        %v261 = vld [vmem:[%s242 + $0x38] sm:$0xf]
        %v262 = vld [vmem:[%s242 + $0x3c] sm:$0xf]
        %v263 = vld [vmem:[%s242 + $0x40] sm:$0xf]
        %v264 = vld [vmem:[%s242 + $0x44] sm:$0xf]
        %v265 = vld [vmem:[%s242 + $0x48] sm:$0xf]
        %v266 = vld [vmem:[%s242 + $0x4c] sm:$0xf]
        %v267 = vld [vmem:[%s242 + $0x50] sm:$0xf]
        %v268 = vld [vmem:[%s242 + $0x54] sm:$0xf]
        %v269 = vld [vmem:[%s242 + $0x58] sm:$0xf]
        %v270 = vld [vmem:[%s242 + $0x5c] sm:$0xf]
        %v271 = vld [vmem:[%s242 + $0x60] sm:$0xf]
        %v272 = vld [vmem:[%s242 + $0x64] sm:$0xf]
        %v273 = vld [vmem:[%s242 + $0x68] sm:$0xf]
        %v274 = vld [vmem:[%s242 + $0x6c] sm:$0xf]
        %v275 = vld [vmem:[%s242 + $0x70] sm:$0xf]
        %v276 = vld [vmem:[%s242 + $0x74] sm:$0xf]
        %v277 = vld [vmem:[%s242 + $0x78] sm:$0xf]
        %v278 = vld [vmem:[%s242 + $0x7c] sm:$0xf]
        %v279 = vld [vmem:[%s242 + $0x80] sm:$0xf]
        %v280 = vld [vmem:[%s242 + $0x84] sm:$0xf]
        %v281 = vld [vmem:[%s242 + $0x88] sm:$0xf]
        %v282 = vld [vmem:[%s242 + $0x8c] sm:$0xf]
        %v283 = vld [vmem:[%s242 + $0x90] sm:$0xf]
        %v284 = vld [vmem:[%s242 + $0x94] sm:$0xf]
        %v285 = vld [vmem:[%s242 + $0x98] sm:$0xf]
        %v286 = vld [vmem:[%s242 + $0x9c] sm:$0xf]
        %v287 = vld [vmem:[%s242 + $0xa0] sm:$0xf]
        %v288 = vld [vmem:[%s242 + $0xa4] sm:$0xf]
        %v289 = vld [vmem:[%s242 + $0xa8] sm:$0xf]
        %v290 = vld [vmem:[%s242 + $0xac] sm:$0xf]
        %v291 = vld [vmem:[%s242 + $0xb0] sm:$0xf]
        %v292 = vld [vmem:[%s242 + $0xb4] sm:$0xf]
        %v293 = vld [vmem:[%s242 + $0xb8] sm:$0xf]
        %v294 = vld [vmem:[%s242 + $0xbc] sm:$0xf]
        %v295 = vld [vmem:[%s242 + $0xc0] sm:$0xf]
        %v296 = vld [vmem:[%s242 + $0xc4] sm:$0xf]
        %v297 = vld [vmem:[%s242 + $0xc8] sm:$0xf]
        %v298 = vld [vmem:[%s242 + $0xcc] sm:$0xf]
        %v299 = vld [vmem:[%s242 + $0xd0] sm:$0xf]
        %v300 = vld [vmem:[%s242 + $0xd4] sm:$0xf]
        %v301 = vld [vmem:[%s242 + $0xd8] sm:$0xf]
        %v302 = vld [vmem:[%s242 + $0xdc] sm:$0xf]
        %v303 = vld [vmem:[%s242 + $0xe0] sm:$0xf]
        %v304 = vld [vmem:[%s242 + $0xe4] sm:$0xf]
        %v305 = vld [vmem:[%s242 + $0xe8] sm:$0xf]
        %v306 = vld [vmem:[%s242 + $0xec] sm:$0xf]
        %v307 = vld [vmem:[%s242 + $0xf0] sm:$0xf]
        %v308 = vld [vmem:[%s242 + $0xf4] sm:$0xf]
        %v309 = vld [vmem:[%s242 + $0xf8] sm:$0x3]
        %v310 = vld [vmem:[%s245] sm:$0x1]
        %v311 = vld [vmem:[%s232] sm:$0xff]
        %v312 = vld [vmem:[%s232 + $0x8] sm:$0xff]
        %v313 = vld [vmem:[%s232 + $0x10] sm:$0xff]
        %v314 = vld [vmem:[%s232 + $0x18] sm:$0x7]
        %v315 = vld [vmem:[%s237] sm:$0xff]
        %v316 = vld [vmem:[%s237 + $0x8] sm:$0xff]
        %v317 = vld [vmem:[%s237 + $0x10] sm:$0xff]
        %v318 = vld [vmem:[%s237 + $0x18] sm:$0x7]
        %323 = vrot.lane.b32.xlu0 %v315, 100
        %v324 = vpop.permute.xlu0 %323
        %325 = vrot.lane.b32.xlu0 %v316, 100
        %v326 = vpop.permute.xlu0 %325
        %327 = vrot.lane.b32.xlu0 %v317, 100
        %v328 = vpop.permute.xlu0 %327
        %329 = vrot.lane.b32.xlu0 %v318, 100
        %v330 = vpop.permute.xlu0 %329
        %vm339 = vcmask 1046528
        %v340 = vrot.slane %v311, 1
        %v341 = vrot.slane %v312, 1
        %v342 = vsel %vm339, %v340, %v341
        %v343 = vrot.slane %v313, 1
        %v344 = vsel %vm339, %v341, %v343
        %v345 = vrot.slane %v314, 1
        %v346 = vsel %vm339, %v343, %v345
        %347 = vrot.lane.b32.xlu0 %v342, 72
        %v348 = vpop.permute.xlu0 %347
        %349 = vrot.lane.b32.xlu0 %v344, 72
        %v350 = vpop.permute.xlu0 %349
        %351 = vrot.lane.b32.xlu0 %v346, 72
        %v352 = vpop.permute.xlu0 %351
        %353 = vrot.lane.b32.xlu0 %v345, 72
        %v354 = vpop.permute.xlu0 %353
        %v359 = vrot.slane %v315, 1
        %v360 = vrot.slane %v316, 1
        %v361 = vsel %vm339, %v359, %v360
        %v362 = vrot.slane %v317, 1
        %v363 = vsel %vm339, %v360, %v362
        %v364 = vrot.slane %v318, 1
        %v365 = vsel %vm339, %v362, %v364
        %366 = vrot.lane.b32.xlu0 %v361, 44
        %v367 = vpop.permute.xlu0 %366
        %368 = vrot.lane.b32.xlu0 %v363, 44
        %v369 = vpop.permute.xlu0 %368
        %370 = vrot.lane.b32.xlu0 %v365, 44
        %v371 = vpop.permute.xlu0 %370
        %372 = vrot.lane.b32.xlu0 %v364, 44
        %v373 = vpop.permute.xlu0 %372
        %vm378 = vcmask 1045504
        %v379 = vrot.slane %v311, 2
        %v380 = vrot.slane %v312, 2
        %v381 = vsel %vm378, %v379, %v380
        %v382 = vrot.slane %v313, 2
        %v383 = vsel %vm378, %v380, %v382
        %v384 = vrot.slane %v314, 2
        %v385 = vsel %vm378, %v382, %v384
        %386 = vrot.lane.b32.xlu0 %v381, 16
        %v387 = vpop.permute.xlu0 %386
        %388 = vrot.lane.b32.xlu0 %v383, 16
        %v389 = vpop.permute.xlu0 %388
        %390 = vrot.lane.b32.xlu0 %v385, 16
        %v391 = vpop.permute.xlu0 %390
        %392 = vrot.lane.b32.xlu0 %v384, 16
        %v393 = vpop.permute.xlu0 %392
        %vm398 = vcmask 818176
        %v399 = vsel %vm398, %v311, %v324
        %v400 = vsel %vm398, %v312, %v326
        %v401 = vsel %vm398, %v313, %v328
        %v402 = vsel %vm398, %v314, %v330
        %vm403 = vcmask 588800
        %v404 = vsel %vm403, %v324, %v348
        %v405 = vsel %vm403, %v326, %v350
        %v406 = vsel %vm403, %v328, %v352
        %v407 = vsel %vm403, %v330, %v354
        %vm408 = vcmask 359424
        %v409 = vsel %vm408, %v348, %v367
        %v410 = vsel %vm408, %v350, %v369
        %v411 = vsel %vm408, %v352, %v371
        %v412 = vsel %vm408, %v354, %v373
        %vm413 = vcmask 130048
        %v414 = vsel %vm413, %v367, %v387
        %v415 = vsel %vm413, %v369, %v389
        %v416 = vsel %vm413, %v371, %v391
        %v417 = vsel %vm413, %v373, %v393
        %418 = vrot.lane.b32.xlu0 %v342, 100
        %v419 = vpop.permute.xlu0 %418
        %420 = vrot.lane.b32.xlu0 %v344, 100
        %v421 = vpop.permute.xlu0 %420
        %422 = vrot.lane.b32.xlu0 %v346, 100
        %v423 = vpop.permute.xlu0 %422
        %424 = vrot.lane.b32.xlu0 %v345, 100
        %v425 = vpop.permute.xlu0 %424
        %430 = vrot.lane.b32.xlu0 %v361, 72
        %v431 = vpop.permute.xlu0 %430
        %432 = vrot.lane.b32.xlu0 %v363, 72
        %v433 = vpop.permute.xlu0 %432
        %434 = vrot.lane.b32.xlu0 %v365, 72
        %v435 = vpop.permute.xlu0 %434
        %436 = vrot.lane.b32.xlu0 %v364, 72
        %v437 = vpop.permute.xlu0 %436
        %442 = vrot.lane.b32.xlu0 %v381, 44
        %v443 = vpop.permute.xlu0 %442
        %444 = vrot.lane.b32.xlu0 %v383, 44
        %v445 = vpop.permute.xlu0 %444
        %446 = vrot.lane.b32.xlu0 %v385, 44
        %v447 = vpop.permute.xlu0 %446
        %448 = vrot.lane.b32.xlu0 %v384, 44
        %v449 = vpop.permute.xlu0 %448
        %v454 = vrot.slane %v315, 2
        %v455 = vrot.slane %v316, 2
        %v456 = vsel %vm378, %v454, %v455
        %v457 = vrot.slane %v317, 2
        %v458 = vsel %vm378, %v455, %v457
        %v459 = vrot.slane %v318, 2
        %v460 = vsel %vm378, %v457, %v459
        %461 = vrot.lane.b32.xlu0 %v456, 16
        %v462 = vpop.permute.xlu0 %461
        %463 = vrot.lane.b32.xlu0 %v458, 16
        %v464 = vpop.permute.xlu0 %463
        %465 = vrot.lane.b32.xlu0 %v460, 16
        %v466 = vpop.permute.xlu0 %465
        %467 = vrot.lane.b32.xlu0 %v459, 16
        %v468 = vpop.permute.xlu0 %467
        %v473 = vsel %vm398, %v315, %v419
        %v474 = vsel %vm398, %v316, %v421
        %v475 = vsel %vm398, %v317, %v423
        %v476 = vsel %vm398, %v318, %v425
        %v477 = vsel %vm403, %v419, %v431
        %v478 = vsel %vm403, %v421, %v433
        %v479 = vsel %vm403, %v423, %v435
        %v480 = vsel %vm403, %v425, %v437
        %v481 = vsel %vm408, %v431, %v443
        %v482 = vsel %vm408, %v433, %v445
        %v483 = vsel %vm408, %v435, %v447
        %v484 = vsel %vm408, %v437, %v449
        %v485 = vsel %vm413, %v443, %v462
        %v486 = vsel %vm413, %v445, %v464
        %v487 = vsel %vm413, %v447, %v466
        %v488 = vsel %vm413, %v449, %v468
        %v489 = vpack.c.bf16 %v400, %v399
        %v490 = vpack.c.bf16 %v405, %v404
        %v491 = vpack.c.bf16 %v410, %v409
        %v492 = vpack.c.bf16 %v415, %v414
        %v493 = vpack.c.bf16 %v402, %v401
        %v494 = vpack.c.bf16 %v407, %v406
        %v495 = vpack.c.bf16 %v412, %v411
        %v496 = vpack.c.bf16 %v417, %v416
        %v560 = vunpack.c.l.b16 %v247
        %v561 = vunpack.c.l.b16 %v248
        %v562 = vunpack.c.l.b16 %v249
        %v563 = vunpack.c.l.b16 %v250
        %v564 = vunpack.c.l.b16 %v251
        %v565 = vunpack.c.l.b16 %v252
        %v566 = vunpack.c.l.b16 %v253
        %v567 = vunpack.c.l.b16 %v254
        %v568 = vunpack.c.l.b16 %v255
        %v569 = vunpack.c.l.b16 %v256
        %v570 = vunpack.c.l.b16 %v257
        %v571 = vunpack.c.l.b16 %v258
        %v572 = vunpack.c.l.b16 %v259
        %v573 = vunpack.c.l.b16 %v260
        %v574 = vunpack.c.l.b16 %v261
        %v575 = vunpack.c.l.b16 %v262
        %v576 = vunpack.c.l.b16 %v263
        %v577 = vunpack.c.l.b16 %v264
        %v578 = vunpack.c.l.b16 %v265
        %v579 = vunpack.c.l.b16 %v266
        %v580 = vunpack.c.l.b16 %v267
        %v581 = vunpack.c.l.b16 %v268
        %v582 = vunpack.c.l.b16 %v269
        %v583 = vunpack.c.l.b16 %v270
        %v584 = vunpack.c.l.b16 %v271
        %v585 = vunpack.c.l.b16 %v272
        %v586 = vunpack.c.l.b16 %v273
        %v587 = vunpack.c.l.b16 %v274
        %v588 = vunpack.c.l.b16 %v275
        %v589 = vunpack.c.l.b16 %v276
        %v590 = vunpack.c.l.b16 %v277
        %v591 = vunpack.c.l.b16 %v278
        %v592 = vunpack.c.l.b16 %v279
        %v593 = vunpack.c.l.b16 %v280
        %v594 = vunpack.c.l.b16 %v281
        %v595 = vunpack.c.l.b16 %v282
        %v596 = vunpack.c.l.b16 %v283
        %v597 = vunpack.c.l.b16 %v284
        %v598 = vunpack.c.l.b16 %v285
        %v599 = vunpack.c.l.b16 %v286
        %v600 = vunpack.c.l.b16 %v287
        %v601 = vunpack.c.l.b16 %v288
        %v602 = vunpack.c.l.b16 %v289
        %v603 = vunpack.c.l.b16 %v290
        %v604 = vunpack.c.l.b16 %v291
        %v605 = vunpack.c.l.b16 %v292
        %v606 = vunpack.c.l.b16 %v293
        %v607 = vunpack.c.l.b16 %v294
        %v608 = vunpack.c.l.b16 %v295
        %v609 = vunpack.c.l.b16 %v296
        %v610 = vunpack.c.l.b16 %v297
        %v611 = vunpack.c.l.b16 %v298
        %v612 = vunpack.c.l.b16 %v299
        %v613 = vunpack.c.l.b16 %v300
        %v614 = vunpack.c.l.b16 %v301
        %v615 = vunpack.c.l.b16 %v302
        %v616 = vunpack.c.l.b16 %v303
        %v617 = vunpack.c.l.b16 %v304
        %v618 = vunpack.c.l.b16 %v305
        %v619 = vunpack.c.l.b16 %v306
        %v620 = vunpack.c.l.b16 %v307
        %v621 = vunpack.c.l.b16 %v308
        %v622 = vunpack.c.l.b16 %v309
        %v623 = vpack.c.b16 %v561, %v560
        %v624 = vpack.c.b16 %v563, %v562
        %v625 = vpack.c.b16 %v565, %v564
        %v626 = vpack.c.b16 %v567, %v566
        %v627 = vpack.c.b16 %v569, %v568
        %v628 = vpack.c.b16 %v571, %v570
        %v629 = vpack.c.b16 %v573, %v572
        %v630 = vpack.c.b16 %v575, %v574
        %v631 = vpack.c.b16 %v577, %v576
        %v632 = vpack.c.b16 %v579, %v578
        %v633 = vpack.c.b16 %v581, %v580
        %v634 = vpack.c.b16 %v583, %v582
        %v635 = vpack.c.b16 %v585, %v584
        %v636 = vpack.c.b16 %v587, %v586
        %v637 = vpack.c.b16 %v589, %v588
        %v638 = vpack.c.b16 %v591, %v590
        %v639 = vpack.c.b16 %v593, %v592
        %v640 = vpack.c.b16 %v595, %v594
        %v641 = vpack.c.b16 %v597, %v596
        %v642 = vpack.c.b16 %v599, %v598
        %v643 = vpack.c.b16 %v601, %v600
        %v644 = vpack.c.b16 %v603, %v602
        %v645 = vpack.c.b16 %v605, %v604
        %v646 = vpack.c.b16 %v607, %v606
        %v647 = vpack.c.b16 %v609, %v608
        %v648 = vpack.c.b16 %v611, %v610
        %v649 = vpack.c.b16 %v613, %v612
        %v650 = vpack.c.b16 %v615, %v614
        %v651 = vpack.c.b16 %v617, %v616
        %v652 = vpack.c.b16 %v619, %v618
        %v653 = vpack.c.b16 %v621, %v620
        %v654 = vpack.c.b16 %v622, %v622
        %vm686 = vcmask 949248
        %v688 = vsel %vm686, %v492, 0
        %v691 = vsel %vm686, %v496, 0
        %vm693 = vcmask 1041408
        %v695 = vsel %vm693, %v654, 0
        %697 = vmatprep.subr.bf16.mxu0 0
        %698 = vmatpush1.bf16.msra.mxu0 %v623
        %699 = vmatprep.subr.bf16.mxu0 0
        %700 = vmatpush1.bf16.msra.mxu0 %v624
        %701 = vmatprep.subr.bf16.mxu0 0
        %702 = vmatpush1.bf16.msra.mxu0 %v625
        %703 = vmatprep.subr.bf16.mxu0 0
        %704 = vmatpush1.bf16.msra.mxu0 %v626
        %705 = vmatprep.subr.bf16.mxu0 0
        %706 = vmatpush1.bf16.msra.mxu0 %v627
        %707 = vmatprep.subr.bf16.mxu0 0
        %708 = vmatpush1.bf16.msra.mxu0 %v628
        %709 = vmatprep.subr.bf16.mxu0 0
        %710 = vmatpush1.bf16.msra.mxu0 %v629
        %711 = vmatprep.subr.bf16.mxu0 0
        %712 = vmatpush1.bf16.msra.mxu0 %v630
        %713 = vmatprep.subr.bf16.mxu0 0
        %714 = vmatpush1.bf16.msra.mxu0 %v631
        %715 = vmatprep.subr.bf16.mxu0 0
        %716 = vmatpush1.bf16.msra.mxu0 %v632
        %717 = vmatprep.subr.bf16.mxu0 0
        %718 = vmatpush1.bf16.msra.mxu0 %v633
        %719 = vmatprep.subr.bf16.mxu0 0
        %720 = vmatpush1.bf16.msra.mxu0 %v634
        %721 = vmatprep.subr.bf16.mxu0 0
        %722 = vmatpush1.bf16.msra.mxu0 %v635
        %723 = vmatprep.subr.bf16.mxu0 0
        %724 = vmatpush1.bf16.msra.mxu0 %v636
        %725 = vmatprep.subr.bf16.mxu0 0
        %726 = vmatpush1.bf16.msra.mxu0 %v637
        %727 = vmatprep.subr.bf16.mxu0 0
        %728 = vmatpush1.bf16.msra.mxu0 %v638
        %729 = vmatprep.mubr.bf16.mxu0 %v490
        %730 = vmatmul.mubr.bf16.gmra.mrb[0].mxu0 %v489
        %v731 = vpop.f32.mrb[0].mxu0
        %v732 = vadd.f32 0.0, %v731
        %v733 = vpop.f32.mrb[0].mxu0
        %v734 = vpop.f32.mrb[0].mxu0
        %v735 = vadd.f32 0.0, %v734
        %v736 = vpop.f32.mrb[0].mxu0
        %737 = vmatprep.mubr.bf16.mxu0 %v494
        %738 = vmatmul.mubr.bf16.gmra.mrb[0].mxu0 %v493
        %v739 = vpop.f32.mrb[0].mxu0
        %v740 = vadd.f32 0.0, %v739
        %v741 = vpop.f32.mrb[0].mxu0
        %v742 = vpop.f32.mrb[0].mxu0
        %v743 = vadd.f32 0.0, %v742
        %v744 = vpop.f32.mrb[0].mxu0
        %745 = vdwg.mxu0
        %746 = vmatprep.subr.bf16.mxu0 0
        %747 = vmatpush1.bf16.msra.mxu0 %v639
        %748 = vmatprep.subr.bf16.mxu0 0
        %749 = vmatpush1.bf16.msra.mxu0 %v640
        %750 = vmatprep.subr.bf16.mxu0 0
        %751 = vmatpush1.bf16.msra.mxu0 %v641
        %752 = vmatprep.subr.bf16.mxu0 0
        %753 = vmatpush1.bf16.msra.mxu0 %v642
        %754 = vmatprep.subr.bf16.mxu0 0
        %755 = vmatpush1.bf16.msra.mxu0 %v643
        %756 = vmatprep.subr.bf16.mxu0 0
        %757 = vmatpush1.bf16.msra.mxu0 %v644
        %758 = vmatprep.subr.bf16.mxu0 0
        %759 = vmatpush1.bf16.msra.mxu0 %v645
        %760 = vmatprep.subr.bf16.mxu0 0
        %761 = vmatpush1.bf16.msra.mxu0 %v646
        %762 = vmatprep.subr.bf16.mxu0 0
        %763 = vmatpush1.bf16.msra.mxu0 %v647
        %764 = vmatprep.subr.bf16.mxu0 0
        %765 = vmatpush1.bf16.msra.mxu0 %v648
        %766 = vmatprep.subr.bf16.mxu0 0
        %767 = vmatpush1.bf16.msra.mxu0 %v649
        %768 = vmatprep.subr.bf16.mxu0 0
        %769 = vmatpush1.bf16.msra.mxu0 %v650
        %770 = vmatprep.subr.bf16.mxu0 0
        %771 = vmatpush1.bf16.msra.mxu0 %v651
        %772 = vmatprep.subr.bf16.mxu0 0
        %773 = vmatpush1.bf16.msra.mxu0 %v652
        %774 = vmatprep.subr.bf16.mxu0 0
        %775 = vmatpush1.bf16.msra.mxu0 %v653
        %776 = vmatprep.subr.bf16.mxu0 0
        %777 = vmatpush1.bf16.msra.mxu0 %v695
        %778 = vmatprep.mubr.bf16.mxu0 %v688
        %779 = vmatmul.mubr.bf16.gmra.mrb[0].mxu0 %v491
        %v780 = vpop.f32.mrb[0].mxu0
        %v781 = vadd.f32 %v732, %v780
        %v782 = vpop.f32.mrb[0].mxu0
        %v783 = vpop.f32.mrb[0].mxu0
        %v784 = vadd.f32 %v735, %v783
        %v785 = vpop.f32.mrb[0].mxu0
        %786 = vmatprep.mubr.bf16.mxu0 %v691
        %787 = vmatmul.mubr.bf16.gmra.mrb[0].mxu0 %v495
        %v788 = vpop.f32.mrb[0].mxu0
        %v789 = vadd.f32 %v740, %v788
        %v790 = vpop.f32.mrb[0].mxu0
        %v791 = vpop.f32.mrb[0].mxu0
        %v792 = vadd.f32 %v743, %v791
        %v793 = vpop.f32.mrb[0].mxu0
        %794 = vdwg.mxu0
        %v795 = vpack.c.bf16 %v474, %v473
        %v796 = vpack.c.bf16 %v478, %v477
        %v797 = vpack.c.bf16 %v482, %v481
        %v798 = vpack.c.bf16 %v486, %v485
        %v799 = vpack.c.bf16 %v476, %v475
        %v800 = vpack.c.bf16 %v480, %v479
        %v801 = vpack.c.bf16 %v484, %v483
        %v802 = vpack.c.bf16 %v488, %v487
        %v804 = vsel %vm686, %v798, 0
        %v807 = vsel %vm686, %v802, 0
        %809 = vmatprep.subr.bf16.mxu0 0
        %810 = vmatpush1.bf16.msra.mxu0 %v623
        %811 = vmatprep.subr.bf16.mxu0 0
        %812 = vmatpush1.bf16.msra.mxu0 %v624
        %813 = vmatprep.subr.bf16.mxu0 0
        %814 = vmatpush1.bf16.msra.mxu0 %v625
        %815 = vmatprep.subr.bf16.mxu0 0
        %816 = vmatpush1.bf16.msra.mxu0 %v626
        %817 = vmatprep.subr.bf16.mxu0 0
        %818 = vmatpush1.bf16.msra.mxu0 %v627
        %819 = vmatprep.subr.bf16.mxu0 0
        %820 = vmatpush1.bf16.msra.mxu0 %v628
        %821 = vmatprep.subr.bf16.mxu0 0
        %822 = vmatpush1.bf16.msra.mxu0 %v629
        %823 = vmatprep.subr.bf16.mxu0 0
        %824 = vmatpush1.bf16.msra.mxu0 %v630
        %825 = vmatprep.subr.bf16.mxu0 0
        %826 = vmatpush1.bf16.msra.mxu0 %v631
        %827 = vmatprep.subr.bf16.mxu0 0
        %828 = vmatpush1.bf16.msra.mxu0 %v632
        %829 = vmatprep.subr.bf16.mxu0 0
        %830 = vmatpush1.bf16.msra.mxu0 %v633
        %831 = vmatprep.subr.bf16.mxu0 0
        %832 = vmatpush1.bf16.msra.mxu0 %v634
        %833 = vmatprep.subr.bf16.mxu0 0
        %834 = vmatpush1.bf16.msra.mxu0 %v635
        %835 = vmatprep.subr.bf16.mxu0 0
        %836 = vmatpush1.bf16.msra.mxu0 %v636
        %837 = vmatprep.subr.bf16.mxu0 0
        %838 = vmatpush1.bf16.msra.mxu0 %v637
        %839 = vmatprep.subr.bf16.mxu0 0
        %840 = vmatpush1.bf16.msra.mxu0 %v638
        %841 = vmatprep.mubr.bf16.mxu0 %v796
        %842 = vmatmul.mubr.bf16.gmra.mrb[0].mxu0 %v795
        %v843 = vpop.f32.mrb[0].mxu0
        %v844 = vadd.f32 0.0, %v843
        %v845 = vpop.f32.mrb[0].mxu0
        %v846 = vpop.f32.mrb[0].mxu0
        %v847 = vadd.f32 0.0, %v846
        %v848 = vpop.f32.mrb[0].mxu0
        %849 = vmatprep.mubr.bf16.mxu0 %v800
        %850 = vmatmul.mubr.bf16.gmra.mrb[0].mxu0 %v799
        %v851 = vpop.f32.mrb[0].mxu0
        %v852 = vadd.f32 0.0, %v851
        %v853 = vpop.f32.mrb[0].mxu0
        %v854 = vpop.f32.mrb[0].mxu0
        %v855 = vadd.f32 0.0, %v854
        %v856 = vpop.f32.mrb[0].mxu0
        %857 = vdwg.mxu0
        %858 = vmatprep.subr.bf16.mxu0 0
        %859 = vmatpush1.bf16.msra.mxu0 %v639
        %860 = vmatprep.subr.bf16.mxu0 0
        %861 = vmatpush1.bf16.msra.mxu0 %v640
        %862 = vmatprep.subr.bf16.mxu0 0
        %863 = vmatpush1.bf16.msra.mxu0 %v641
        %864 = vmatprep.subr.bf16.mxu0 0
        %865 = vmatpush1.bf16.msra.mxu0 %v642
        %866 = vmatprep.subr.bf16.mxu0 0
        %867 = vmatpush1.bf16.msra.mxu0 %v643
        %868 = vmatprep.subr.bf16.mxu0 0
        %869 = vmatpush1.bf16.msra.mxu0 %v644
        %870 = vmatprep.subr.bf16.mxu0 0
        %871 = vmatpush1.bf16.msra.mxu0 %v645
        %872 = vmatprep.subr.bf16.mxu0 0
        %873 = vmatpush1.bf16.msra.mxu0 %v646
        %874 = vmatprep.subr.bf16.mxu0 0
        %875 = vmatpush1.bf16.msra.mxu0 %v647
        %876 = vmatprep.subr.bf16.mxu0 0
        %877 = vmatpush1.bf16.msra.mxu0 %v648
        %878 = vmatprep.subr.bf16.mxu0 0
        %879 = vmatpush1.bf16.msra.mxu0 %v649
        %880 = vmatprep.subr.bf16.mxu0 0
        %881 = vmatpush1.bf16.msra.mxu0 %v650
        %882 = vmatprep.subr.bf16.mxu0 0
        %883 = vmatpush1.bf16.msra.mxu0 %v651
        %884 = vmatprep.subr.bf16.mxu0 0
        %885 = vmatpush1.bf16.msra.mxu0 %v652
        %886 = vmatprep.subr.bf16.mxu0 0
        %887 = vmatpush1.bf16.msra.mxu0 %v653
        %888 = vmatprep.subr.bf16.mxu0 0
        %889 = vmatpush1.bf16.msra.mxu0 %v695
        %890 = vmatprep.mubr.bf16.mxu0 %v804
        %891 = vmatmul.mubr.bf16.gmra.mrb[0].mxu0 %v797
        %v892 = vpop.f32.mrb[0].mxu0
        %v893 = vadd.f32 %v844, %v892
        %v894 = vpop.f32.mrb[0].mxu0
        %v895 = vpop.f32.mrb[0].mxu0
        %v896 = vadd.f32 %v847, %v895
        %v897 = vpop.f32.mrb[0].mxu0
        %898 = vmatprep.mubr.bf16.mxu0 %v807
        %899 = vmatmul.mubr.bf16.gmra.mrb[0].mxu0 %v801
        %v900 = vpop.f32.mrb[0].mxu0
        %v901 = vadd.f32 %v852, %v900
        %v902 = vpop.f32.mrb[0].mxu0
        %v903 = vpop.f32.mrb[0].mxu0
        %v904 = vadd.f32 %v855, %v903
        %v905 = vpop.f32.mrb[0].mxu0
        %906 = vdwg.mxu0
        %v907 = vmax.f32 %v781, %v893
        %v908 = vmax.f32 %v784, %v896
        %v909 = vmax.f32 %v789, %v901
        %v910 = vmax.f32 %v792, %v904
        %v912 = vlaneseq
        %v913 = vshrl.u32 %v912, 7
        %v914 = vsub.s32 0, %v913
        %v915 = vrot.slane %v310, %v914
        %v917 = vadd.f32 %v907, %v915
        %v918 = vadd.f32 %v908, %v915
        %v919 = vadd.f32 %v909, %v915
        %v920 = vadd.f32 %v910, %v915
        %v921 = vmax.f32 %v917, 0.0
        %v922 = vmax.f32 %v918, 0.0
        %v923 = vmax.f32 %v919, 0.0
        %v924 = vmax.f32 %v920, 0.0
        %v925 = vpack.c.bf16 %v922, %v921
        %v926 = vpack.c.bf16 %v924, %v923
        %v929 = vunpack.c.l.b16 %v925
        %v930 = vunpack.c.h.b16 %v925
        %v931 = vunpack.c.l.b16 %v926
        %v932 = vunpack.c.h.b16 %v926
        %v933 = vpack.c.b16 %v929, %v929
        %v934 = vpack.c.b16 %v930, %v930
        %v935 = vpack.c.b16 %v931, %v931
        %v936 = vpack.c.b16 %v932, %v932
        %941 = vst [vmem:[%s227] sm:$0xf] %v933
        %942 = vst [vmem:[%s227 + $0x4] sm:$0xf] %v934
        %943 = vst [vmem:[%s227 + $0x8] sm:$0xf] %v935
        %vm944 = vcmask 1040384
        %vm945 = vsmask.f32 256
        %vm946 = vmand %vm944, %vm945
        %v947 = vld [vmem:[%s227 + $0xc] sm:$0x1]
        %v948 = vsel %vm946, %v936, %v947
        %949 = vst [vmem:[%s227 + $0xc] sm:$0x1] %v948
        %s950 = scalar_lea.vmem %s232, 32
        %v951 = vld [vmem:[%s950] sm:$0xff]
        %v952 = vld [vmem:[%s950 + $0x8] sm:$0xff]
        %v953 = vld [vmem:[%s950 + $0x10] sm:$0xff]
        %v954 = vld [vmem:[%s950 + $0x18] sm:$0x7]
        %s955 = scalar_lea.vmem %s237, 32
        %v956 = vld [vmem:[%s955] sm:$0xff]
        %v957 = vld [vmem:[%s955 + $0x8] sm:$0xff]
        %v958 = vld [vmem:[%s955 + $0x10] sm:$0xff]
        %v959 = vld [vmem:[%s955 + $0x18] sm:$0x7]
        %964 = vrot.lane.b32.xlu0 %v956, 100
        %v965 = vpop.permute.xlu0 %964
        %966 = vrot.lane.b32.xlu0 %v957, 100
        %v967 = vpop.permute.xlu0 %966
        %968 = vrot.lane.b32.xlu0 %v958, 100
        %v969 = vpop.permute.xlu0 %968
        %970 = vrot.lane.b32.xlu0 %v959, 100
        %v971 = vpop.permute.xlu0 %970
        %v980 = vrot.slane %v951, 1
        %v981 = vrot.slane %v952, 1
        %v982 = vsel %vm339, %v980, %v981
        %v983 = vrot.slane %v953, 1
        %v984 = vsel %vm339, %v981, %v983
        %v985 = vrot.slane %v954, 1
        %v986 = vsel %vm339, %v983, %v985
        %987 = vrot.lane.b32.xlu0 %v982, 72
        %v988 = vpop.permute.xlu0 %987
        %989 = vrot.lane.b32.xlu0 %v984, 72
        %v990 = vpop.permute.xlu0 %989
        %991 = vrot.lane.b32.xlu0 %v986, 72
        %v992 = vpop.permute.xlu0 %991
        %993 = vrot.lane.b32.xlu0 %v985, 72
        %v994 = vpop.permute.xlu0 %993
        %v999 = vrot.slane %v956, 1
        %v1000 = vrot.slane %v957, 1
        %v1001 = vsel %vm339, %v999, %v1000
        %v1002 = vrot.slane %v958, 1
        %v1003 = vsel %vm339, %v1000, %v1002
        %v1004 = vrot.slane %v959, 1
        %v1005 = vsel %vm339, %v1002, %v1004
        %1006 = vrot.lane.b32.xlu0 %v1001, 44
        %v1007 = vpop.permute.xlu0 %1006
        %1008 = vrot.lane.b32.xlu0 %v1003, 44
        %v1009 = vpop.permute.xlu0 %1008
        %1010 = vrot.lane.b32.xlu0 %v1005, 44
        %v1011 = vpop.permute.xlu0 %1010
        %1012 = vrot.lane.b32.xlu0 %v1004, 44
        %v1013 = vpop.permute.xlu0 %1012
        %v1018 = vrot.slane %v951, 2
        %v1019 = vrot.slane %v952, 2
        %v1020 = vsel %vm378, %v1018, %v1019
        %v1021 = vrot.slane %v953, 2
        %v1022 = vsel %vm378, %v1019, %v1021
        %v1023 = vrot.slane %v954, 2
        %v1024 = vsel %vm378, %v1021, %v1023
        %1025 = vrot.lane.b32.xlu0 %v1020, 16
        %v1026 = vpop.permute.xlu0 %1025
        %1027 = vrot.lane.b32.xlu0 %v1022, 16
        %v1028 = vpop.permute.xlu0 %1027
        %1029 = vrot.lane.b32.xlu0 %v1024, 16
        %v1030 = vpop.permute.xlu0 %1029
        %1031 = vrot.lane.b32.xlu0 %v1023, 16
        %v1032 = vpop.permute.xlu0 %1031
        %v1037 = vsel %vm398, %v951, %v965
        %v1038 = vsel %vm398, %v952, %v967
        %v1039 = vsel %vm398, %v953, %v969
        %v1040 = vsel %vm398, %v954, %v971
        %v1041 = vsel %vm403, %v965, %v988
        %v1042 = vsel %vm403, %v967, %v990
        %v1043 = vsel %vm403, %v969, %v992
        %v1044 = vsel %vm403, %v971, %v994
        %v1045 = vsel %vm408, %v988, %v1007
        %v1046 = vsel %vm408, %v990, %v1009
        %v1047 = vsel %vm408, %v992, %v1011
        %v1048 = vsel %vm408, %v994, %v1013
        %v1049 = vsel %vm413, %v1007, %v1026
        %v1050 = vsel %vm413, %v1009, %v1028
        %v1051 = vsel %vm413, %v1011, %v1030
        %v1052 = vsel %vm413, %v1013, %v1032
        %1053 = vrot.lane.b32.xlu0 %v982, 100
        %v1054 = vpop.permute.xlu0 %1053
        %1055 = vrot.lane.b32.xlu0 %v984, 100
        %v1056 = vpop.permute.xlu0 %1055
        %1057 = vrot.lane.b32.xlu0 %v986, 100
        %v1058 = vpop.permute.xlu0 %1057
        %1059 = vrot.lane.b32.xlu0 %v985, 100
        %v1060 = vpop.permute.xlu0 %1059
        %1065 = vrot.lane.b32.xlu0 %v1001, 72
        %v1066 = vpop.permute.xlu0 %1065
        %1067 = vrot.lane.b32.xlu0 %v1003, 72
        %v1068 = vpop.permute.xlu0 %1067
        %1069 = vrot.lane.b32.xlu0 %v1005, 72
        %v1070 = vpop.permute.xlu0 %1069
        %1071 = vrot.lane.b32.xlu0 %v1004, 72
        %v1072 = vpop.permute.xlu0 %1071
        %1077 = vrot.lane.b32.xlu0 %v1020, 44
        %v1078 = vpop.permute.xlu0 %1077
        %1079 = vrot.lane.b32.xlu0 %v1022, 44
        %v1080 = vpop.permute.xlu0 %1079
        %1081 = vrot.lane.b32.xlu0 %v1024, 44
        %v1082 = vpop.permute.xlu0 %1081
        %1083 = vrot.lane.b32.xlu0 %v1023, 44
        %v1084 = vpop.permute.xlu0 %1083
        %v1089 = vrot.slane %v956, 2
        %v1090 = vrot.slane %v957, 2
        %v1091 = vsel %vm378, %v1089, %v1090
        %v1092 = vrot.slane %v958, 2
        %v1093 = vsel %vm378, %v1090, %v1092
        %v1094 = vrot.slane %v959, 2
        %v1095 = vsel %vm378, %v1092, %v1094
        %1096 = vrot.lane.b32.xlu0 %v1091, 16
        %v1097 = vpop.permute.xlu0 %1096
        %1098 = vrot.lane.b32.xlu0 %v1093, 16
        %v1099 = vpop.permute.xlu0 %1098
        %1100 = vrot.lane.b32.xlu0 %v1095, 16
        %v1101 = vpop.permute.xlu0 %1100
        %1102 = vrot.lane.b32.xlu0 %v1094, 16
        %v1103 = vpop.permute.xlu0 %1102
        %v1108 = vsel %vm398, %v956, %v1054
        %v1109 = vsel %vm398, %v957, %v1056
        %v1110 = vsel %vm398, %v958, %v1058
        %v1111 = vsel %vm398, %v959, %v1060
        %v1112 = vsel %vm403, %v1054, %v1066
        %v1113 = vsel %vm403, %v1056, %v1068
        %v1114 = vsel %vm403, %v1058, %v1070
        %v1115 = vsel %vm403, %v1060, %v1072
        %v1116 = vsel %vm408, %v1066, %v1078
        %v1117 = vsel %vm408, %v1068, %v1080
        %v1118 = vsel %vm408, %v1070, %v1082
        %v1119 = vsel %vm408, %v1072, %v1084
        %v1120 = vsel %vm413, %v1078, %v1097
        %v1121 = vsel %vm413, %v1080, %v1099
        %v1122 = vsel %vm413, %v1082, %v1101
        %v1123 = vsel %vm413, %v1084, %v1103
        %v1124 = vpack.c.bf16 %v1038, %v1037
        %v1125 = vpack.c.bf16 %v1042, %v1041
        %v1126 = vpack.c.bf16 %v1046, %v1045
        %v1127 = vpack.c.bf16 %v1050, %v1049
        %v1128 = vpack.c.bf16 %v1040, %v1039
        %v1129 = vpack.c.bf16 %v1044, %v1043
        %v1130 = vpack.c.bf16 %v1048, %v1047
        %v1131 = vpack.c.bf16 %v1052, %v1051
        %v1133 = vsel %vm686, %v1127, 0
        %v1136 = vsel %vm686, %v1131, 0
        %1138 = vmatprep.subr.bf16.mxu0 0
        %1139 = vmatpush1.bf16.msra.mxu0 %v623
        %1140 = vmatprep.subr.bf16.mxu0 0
        %1141 = vmatpush1.bf16.msra.mxu0 %v624
        %1142 = vmatprep.subr.bf16.mxu0 0
        %1143 = vmatpush1.bf16.msra.mxu0 %v625
        %1144 = vmatprep.subr.bf16.mxu0 0
        %1145 = vmatpush1.bf16.msra.mxu0 %v626
        %1146 = vmatprep.subr.bf16.mxu0 0
        %1147 = vmatpush1.bf16.msra.mxu0 %v627
        %1148 = vmatprep.subr.bf16.mxu0 0
        %1149 = vmatpush1.bf16.msra.mxu0 %v628
        %1150 = vmatprep.subr.bf16.mxu0 0
        %1151 = vmatpush1.bf16.msra.mxu0 %v629
        %1152 = vmatprep.subr.bf16.mxu0 0
        %1153 = vmatpush1.bf16.msra.mxu0 %v630
        %1154 = vmatprep.subr.bf16.mxu0 0
        %1155 = vmatpush1.bf16.msra.mxu0 %v631
        %1156 = vmatprep.subr.bf16.mxu0 0
        %1157 = vmatpush1.bf16.msra.mxu0 %v632
        %1158 = vmatprep.subr.bf16.mxu0 0
        %1159 = vmatpush1.bf16.msra.mxu0 %v633
        %1160 = vmatprep.subr.bf16.mxu0 0
        %1161 = vmatpush1.bf16.msra.mxu0 %v634
        %1162 = vmatprep.subr.bf16.mxu0 0
        %1163 = vmatpush1.bf16.msra.mxu0 %v635
        %1164 = vmatprep.subr.bf16.mxu0 0
        %1165 = vmatpush1.bf16.msra.mxu0 %v636
        %1166 = vmatprep.subr.bf16.mxu0 0
        %1167 = vmatpush1.bf16.msra.mxu0 %v637
        %1168 = vmatprep.subr.bf16.mxu0 0
        %1169 = vmatpush1.bf16.msra.mxu0 %v638
        %1170 = vmatprep.mubr.bf16.mxu0 %v1125
        %1171 = vmatmul.mubr.bf16.gmra.mrb[0].mxu0 %v1124
        %v1172 = vpop.f32.mrb[0].mxu0
        %v1173 = vadd.f32 0.0, %v1172
        %v1174 = vpop.f32.mrb[0].mxu0
        %v1175 = vpop.f32.mrb[0].mxu0
        %v1176 = vadd.f32 0.0, %v1175
        %v1177 = vpop.f32.mrb[0].mxu0
        %1178 = vmatprep.mubr.bf16.mxu0 %v1129
        %1179 = vmatmul.mubr.bf16.gmra.mrb[0].mxu0 %v1128
        %v1180 = vpop.f32.mrb[0].mxu0
        %v1181 = vadd.f32 0.0, %v1180
        %v1182 = vpop.f32.mrb[0].mxu0
        %v1183 = vpop.f32.mrb[0].mxu0
        %v1184 = vadd.f32 0.0, %v1183
        %v1185 = vpop.f32.mrb[0].mxu0
        %1186 = vdwg.mxu0
        %1187 = vmatprep.subr.bf16.mxu0 0
        %1188 = vmatpush1.bf16.msra.mxu0 %v639
        %1189 = vmatprep.subr.bf16.mxu0 0
        %1190 = vmatpush1.bf16.msra.mxu0 %v640
        %1191 = vmatprep.subr.bf16.mxu0 0
        %1192 = vmatpush1.bf16.msra.mxu0 %v641
        %1193 = vmatprep.subr.bf16.mxu0 0
        %1194 = vmatpush1.bf16.msra.mxu0 %v642
        %1195 = vmatprep.subr.bf16.mxu0 0
        %1196 = vmatpush1.bf16.msra.mxu0 %v643
        %1197 = vmatprep.subr.bf16.mxu0 0
        %1198 = vmatpush1.bf16.msra.mxu0 %v644
        %1199 = vmatprep.subr.bf16.mxu0 0
        %1200 = vmatpush1.bf16.msra.mxu0 %v645
        %1201 = vmatprep.subr.bf16.mxu0 0
        %1202 = vmatpush1.bf16.msra.mxu0 %v646
        %1203 = vmatprep.subr.bf16.mxu0 0
        %1204 = vmatpush1.bf16.msra.mxu0 %v647
        %1205 = vmatprep.subr.bf16.mxu0 0
        %1206 = vmatpush1.bf16.msra.mxu0 %v648
        %1207 = vmatprep.subr.bf16.mxu0 0
        %1208 = vmatpush1.bf16.msra.mxu0 %v649
        %1209 = vmatprep.subr.bf16.mxu0 0
        %1210 = vmatpush1.bf16.msra.mxu0 %v650
        %1211 = vmatprep.subr.bf16.mxu0 0
        %1212 = vmatpush1.bf16.msra.mxu0 %v651
        %1213 = vmatprep.subr.bf16.mxu0 0
        %1214 = vmatpush1.bf16.msra.mxu0 %v652
        %1215 = vmatprep.subr.bf16.mxu0 0
        %1216 = vmatpush1.bf16.msra.mxu0 %v653
        %1217 = vmatprep.subr.bf16.mxu0 0
        %1218 = vmatpush1.bf16.msra.mxu0 %v695
        %1219 = vmatprep.mubr.bf16.mxu0 %v1133
        %1220 = vmatmul.mubr.bf16.gmra.mrb[0].mxu0 %v1126
        %v1221 = vpop.f32.mrb[0].mxu0
        %v1222 = vadd.f32 %v1173, %v1221
        %v1223 = vpop.f32.mrb[0].mxu0
        %v1224 = vpop.f32.mrb[0].mxu0
        %v1225 = vadd.f32 %v1176, %v1224
        %v1226 = vpop.f32.mrb[0].mxu0
        %1227 = vmatprep.mubr.bf16.mxu0 %v1136
        %1228 = vmatmul.mubr.bf16.gmra.mrb[0].mxu0 %v1130
        %v1229 = vpop.f32.mrb[0].mxu0
        %v1230 = vadd.f32 %v1181, %v1229
        %v1231 = vpop.f32.mrb[0].mxu0
        %v1232 = vpop.f32.mrb[0].mxu0
        %v1233 = vadd.f32 %v1184, %v1232
        %v1234 = vpop.f32.mrb[0].mxu0
        %1235 = vdwg.mxu0
        %v1236 = vpack.c.bf16 %v1109, %v1108
        %v1237 = vpack.c.bf16 %v1113, %v1112
        %v1238 = vpack.c.bf16 %v1117, %v1116
        %v1239 = vpack.c.bf16 %v1121, %v1120
        %v1240 = vpack.c.bf16 %v1111, %v1110
        %v1241 = vpack.c.bf16 %v1115, %v1114
        %v1242 = vpack.c.bf16 %v1119, %v1118
        %v1243 = vpack.c.bf16 %v1123, %v1122
        %v1245 = vsel %vm686, %v1239, 0
        %v1248 = vsel %vm686, %v1243, 0
        %1250 = vmatprep.subr.bf16.mxu0 0
        %1251 = vmatpush1.bf16.msra.mxu0 %v623
        %1252 = vmatprep.subr.bf16.mxu0 0
        %1253 = vmatpush1.bf16.msra.mxu0 %v624
        %1254 = vmatprep.subr.bf16.mxu0 0
        %1255 = vmatpush1.bf16.msra.mxu0 %v625
        %1256 = vmatprep.subr.bf16.mxu0 0
        %1257 = vmatpush1.bf16.msra.mxu0 %v626
        %1258 = vmatprep.subr.bf16.mxu0 0
        %1259 = vmatpush1.bf16.msra.mxu0 %v627
        %1260 = vmatprep.subr.bf16.mxu0 0
        %1261 = vmatpush1.bf16.msra.mxu0 %v628
        %1262 = vmatprep.subr.bf16.mxu0 0
        %1263 = vmatpush1.bf16.msra.mxu0 %v629
        %1264 = vmatprep.subr.bf16.mxu0 0
        %1265 = vmatpush1.bf16.msra.mxu0 %v630
        %1266 = vmatprep.subr.bf16.mxu0 0
        %1267 = vmatpush1.bf16.msra.mxu0 %v631
        %1268 = vmatprep.subr.bf16.mxu0 0
        %1269 = vmatpush1.bf16.msra.mxu0 %v632
        %1270 = vmatprep.subr.bf16.mxu0 0
        %1271 = vmatpush1.bf16.msra.mxu0 %v633
        %1272 = vmatprep.subr.bf16.mxu0 0
        %1273 = vmatpush1.bf16.msra.mxu0 %v634
        %1274 = vmatprep.subr.bf16.mxu0 0
        %1275 = vmatpush1.bf16.msra.mxu0 %v635
        %1276 = vmatprep.subr.bf16.mxu0 0
        %1277 = vmatpush1.bf16.msra.mxu0 %v636
        %1278 = vmatprep.subr.bf16.mxu0 0
        %1279 = vmatpush1.bf16.msra.mxu0 %v637
        %1280 = vmatprep.subr.bf16.mxu0 0
        %1281 = vmatpush1.bf16.msra.mxu0 %v638
        %1282 = vmatprep.mubr.bf16.mxu0 %v1237
        %1283 = vmatmul.mubr.bf16.gmra.mrb[0].mxu0 %v1236
        %v1284 = vpop.f32.mrb[0].mxu0
        %v1285 = vadd.f32 0.0, %v1284
        %v1286 = vpop.f32.mrb[0].mxu0
        %v1287 = vpop.f32.mrb[0].mxu0
        %v1288 = vadd.f32 0.0, %v1287
        %v1289 = vpop.f32.mrb[0].mxu0
        %1290 = vmatprep.mubr.bf16.mxu0 %v1241
        %1291 = vmatmul.mubr.bf16.gmra.mrb[0].mxu0 %v1240
        %v1292 = vpop.f32.mrb[0].mxu0
        %v1293 = vadd.f32 0.0, %v1292
        %v1294 = vpop.f32.mrb[0].mxu0
        %v1295 = vpop.f32.mrb[0].mxu0
        %v1296 = vadd.f32 0.0, %v1295
        %v1297 = vpop.f32.mrb[0].mxu0
        %1298 = vdwg.mxu0
        %1299 = vmatprep.subr.bf16.mxu0 0
        %1300 = vmatpush1.bf16.msra.mxu0 %v639
        %1301 = vmatprep.subr.bf16.mxu0 0
        %1302 = vmatpush1.bf16.msra.mxu0 %v640
        %1303 = vmatprep.subr.bf16.mxu0 0
        %1304 = vmatpush1.bf16.msra.mxu0 %v641
        %1305 = vmatprep.subr.bf16.mxu0 0
        %1306 = vmatpush1.bf16.msra.mxu0 %v642
        %1307 = vmatprep.subr.bf16.mxu0 0
        %1308 = vmatpush1.bf16.msra.mxu0 %v643
        %1309 = vmatprep.subr.bf16.mxu0 0
        %1310 = vmatpush1.bf16.msra.mxu0 %v644
        %1311 = vmatprep.subr.bf16.mxu0 0
        %1312 = vmatpush1.bf16.msra.mxu0 %v645
        %1313 = vmatprep.subr.bf16.mxu0 0
        %1314 = vmatpush1.bf16.msra.mxu0 %v646
        %1315 = vmatprep.subr.bf16.mxu0 0
        %1316 = vmatpush1.bf16.msra.mxu0 %v647
        %1317 = vmatprep.subr.bf16.mxu0 0
        %1318 = vmatpush1.bf16.msra.mxu0 %v648
        %1319 = vmatprep.subr.bf16.mxu0 0
        %1320 = vmatpush1.bf16.msra.mxu0 %v649
        %1321 = vmatprep.subr.bf16.mxu0 0
        %1322 = vmatpush1.bf16.msra.mxu0 %v650
        %1323 = vmatprep.subr.bf16.mxu0 0
        %1324 = vmatpush1.bf16.msra.mxu0 %v651
        %1325 = vmatprep.subr.bf16.mxu0 0
        %1326 = vmatpush1.bf16.msra.mxu0 %v652
        %1327 = vmatprep.subr.bf16.mxu0 0
        %1328 = vmatpush1.bf16.msra.mxu0 %v653
        %1329 = vmatprep.subr.bf16.mxu0 0
        %1330 = vmatpush1.bf16.msra.mxu0 %v695
        %1331 = vmatprep.mubr.bf16.mxu0 %v1245
        %1332 = vmatmul.mubr.bf16.gmra.mrb[0].mxu0 %v1238
        %v1333 = vpop.f32.mrb[0].mxu0
        %v1334 = vadd.f32 %v1285, %v1333
        %v1335 = vpop.f32.mrb[0].mxu0
        %v1336 = vpop.f32.mrb[0].mxu0
        %v1337 = vadd.f32 %v1288, %v1336
        %v1338 = vpop.f32.mrb[0].mxu0
        %1339 = vmatprep.mubr.bf16.mxu0 %v1248
        %1340 = vmatmul.mubr.bf16.gmra.mrb[0].mxu0 %v1242
        %v1341 = vpop.f32.mrb[0].mxu0
        %v1342 = vadd.f32 %v1293, %v1341
        %v1343 = vpop.f32.mrb[0].mxu0
        %v1344 = vpop.f32.mrb[0].mxu0
        %v1345 = vadd.f32 %v1296, %v1344
        %v1346 = vpop.f32.mrb[0].mxu0
        %1347 = vdwg.mxu0
        %v1348 = vmax.f32 %v1222, %v1334
        %v1349 = vmax.f32 %v1225, %v1337
        %v1350 = vmax.f32 %v1230, %v1342
        %v1351 = vmax.f32 %v1233, %v1345
        %v1352 = vadd.f32 %v1348, %v915
        %v1353 = vadd.f32 %v1349, %v915
        %v1354 = vadd.f32 %v1350, %v915
        %v1355 = vadd.f32 %v1351, %v915
        %v1356 = vmax.f32 %v1352, 0.0
        %v1357 = vmax.f32 %v1353, 0.0
        %v1358 = vmax.f32 %v1354, 0.0
        %v1359 = vmax.f32 %v1355, 0.0
        %v1360 = vpack.c.bf16 %v1357, %v1356
        %v1361 = vpack.c.bf16 %v1359, %v1358
        %v1364 = vunpack.c.l.b16 %v1360
        %v1365 = vunpack.c.h.b16 %v1360
        %v1366 = vunpack.c.l.b16 %v1361
        %v1367 = vunpack.c.h.b16 %v1361
        %v1368 = vpack.c.b16 %v1364, %v1364
        %v1369 = vpack.c.b16 %v1365, %v1365
        %v1370 = vpack.c.b16 %v1366, %v1366
        %v1371 = vpack.c.b16 %v1367, %v1367
        %s1376 = scalar_lea.vmem %s227, 16 [#allocation2]
        %1377 = vst [vmem:[%s1376] sm:$0xf] %v1368
        %1378 = vst [vmem:[%s1376 + $0x4] sm:$0xf] %v1369
        %1379 = vst [vmem:[%s1376 + $0x8] sm:$0xf] %v1370
        %v1380 = vld [vmem:[%s1376 + $0xc] sm:$0x1]
        %v1381 = vsel %vm946, %v1371, %v1380
        %1382 = vst [vmem:[%s1376 + $0xc] sm:$0x1] %v1381
        %s1383 = sand.u32 %s127, 1
        %s1384 = sand.u32 %s127, 1
        %s1385 = smul.addr %s1384, 32
        %s1386 = scalar_lea.vmem [#allocation2], %s1385
        // Predicated region
        $region37: #{multi_cnn_forward.2} parent=35 // pred_check
          %p1387 = pneg %p137
        $region38: #{multi_cnn_forward.2} parent=35 // pred_check_branch
          %1389 = sbr.rel (%p1387) target = $region40
        $region39: #{multi_cnn_forward.2} parent=35 // pred_region
          %s1390 = smul.addr %s15, 4
          %s1391 = smul.addr %s1390, 4
          %s1392 = scalar_lea.vmem %s4, %s1391
          // Predicated region
          $region41: #{multi_cnn_forward.2} parent=39 // pred_check
            _
          $region42: #{multi_cnn_forward.2} parent=39 // pred_check_branch
            %1394 = sbr.rel (0) target = $region44
          $region43: #{multi_cnn_forward.2} parent=39 // pred_region
            // Predicated region
            $region45: #{multi_cnn_forward.2} parent=43 // pred_check
              _
            $region46: #{multi_cnn_forward.2} parent=43 // pred_check_branch
              %1396 = sbr.rel target = $region48
            $region47: #{multi_cnn_forward.2} parent=43 // pred_region
              // Predicated region
              $region60: #{multi_cnn_forward.2} parent=47 // pred_check
                _
              $region61: #{multi_cnn_forward.2} parent=47 // pred_check_branch
                %1425 = sbr.rel (0) target = $region63
              $region62: #{multi_cnn_forward.2} parent=47 // pred_region
                loop: start=0, step=1, limit=1
                $region64: #{multi_cnn_forward.2} parent=62 // loop_pre_header
                  _
                $region65: #{multi_cnn_forward.2} parent=62 // loop_header
                  %s1427 = sphi 0, %s1431
                  %p1428 = scmp.ge.s32.totalorder %s1427, 1
                  %s1432 = sphi %s1386, %s1386
                  %s1433 = sphi %s1392, %s1392
                $region66: #{multi_cnn_forward.2} parent=62 // loop_header_branch
                  %1430 = sbr.rel (%p1428) target = $region70
                $region67: #{multi_cnn_forward.2} parent=62 // loop_body
                  _
                $region68: #{multi_cnn_forward.2} parent=62 // loop_footer
                  %s1431 = sadd.s32 1, %s1427
                $region69: #{multi_cnn_forward.2} parent=62 // loop_footer_branch
                  %1426 = sbr.rel target = $region65
                $region70: #{multi_cnn_forward.2} parent=62 // loop_exit
                  _
                loop: start=0, step=1, limit=1
                $region71: #{multi_cnn_forward.2} parent=62 // loop_pre_header
                  _
                $region72: #{multi_cnn_forward.2} parent=62 // loop_header
                  %s1436 = sphi 0, %s1440
                  %p1437 = scmp.ge.s32.totalorder %s1436, 1
                  %s1441 = sphi %s1386, %s1386
                  %s1442 = sphi %s1392, %s1392
                $region73: #{multi_cnn_forward.2} parent=62 // loop_header_branch
                  %1439 = sbr.rel (%p1437) target = $region77
                $region74: #{multi_cnn_forward.2} parent=62 // loop_body
                  %v1443 = vld [vmem:[%s1441] sm:$0xf]
                  %1444 = vst [vmem:[%s1442] sm:$0xf] %v1443
                  %v1445 = vld [vmem:[%s1441 + $0x4] sm:$0xf]
                  %1446 = vst [vmem:[%s1442 + $0x4] sm:$0xf] %v1445
                  %v1447 = vld [vmem:[%s1441 + $0x8] sm:$0xf]
                  %1448 = vst [vmem:[%s1442 + $0x8] sm:$0xf] %v1447
                  %v1449 = vld [vmem:[%s1441 + $0xc] sm:$0xf]
                  %1450 = vst [vmem:[%s1442 + $0xc] sm:$0xf] %v1449
                  %v1451 = vld [vmem:[%s1441 + $0x10] sm:$0xf]
                  %1452 = vst [vmem:[%s1442 + $0x20] sm:$0xf] %v1451
                  %v1453 = vld [vmem:[%s1441 + $0x14] sm:$0xf]
                  %1454 = vst [vmem:[%s1442 + $0x24] sm:$0xf] %v1453
                  %v1455 = vld [vmem:[%s1441 + $0x18] sm:$0xf]
                  %1456 = vst [vmem:[%s1442 + $0x28] sm:$0xf] %v1455
                  %v1457 = vld [vmem:[%s1441 + $0x1c] sm:$0xf]
                  %1458 = vst [vmem:[%s1442 + $0x2c] sm:$0xf] %v1457
                $region75: #{multi_cnn_forward.2} parent=62 // loop_footer
                  %s1440 = sadd.s32 1, %s1436
                $region76: #{multi_cnn_forward.2} parent=62 // loop_footer_branch
                  %1435 = sbr.rel target = $region72
                $region77: #{multi_cnn_forward.2} parent=62 // loop_exit
                  _
              $region63: #{multi_cnn_forward.2} parent=47 // pred_fallthru
                _
            $region48: #{multi_cnn_forward.2} parent=43 // pred_fallthru
              _
            // Predicated region
            $region49: #{multi_cnn_forward.2} parent=43 // pred_check
              _
            $region50: #{multi_cnn_forward.2} parent=43 // pred_check_branch
              %1398 = sbr.rel (0) target = $region52
            $region51: #{multi_cnn_forward.2} parent=43 // pred_region
              loop: start=0, step=1, limit=1
              $region53: #{multi_cnn_forward.2} parent=51 // loop_pre_header
                _
              $region54: #{multi_cnn_forward.2} parent=51 // loop_header
                %s1401 = sphi 0, %s1405
                %p1402 = scmp.ge.s32.totalorder %s1401, 1
                %s1406 = sphi %s1386, %s1386
                %s1407 = sphi %s1392, %s1392
              $region55: #{multi_cnn_forward.2} parent=51 // loop_header_branch
                %1404 = sbr.rel (%p1402) target = $region59
              $region56: #{multi_cnn_forward.2} parent=51 // loop_body
                %v1408 = vld [vmem:[%s1406] sm:$0xf]
                %1409 = vst [vmem:[%s1407] sm:$0xf] %v1408
                %v1410 = vld [vmem:[%s1406 + $0x4] sm:$0xf]
                %1411 = vst [vmem:[%s1407 + $0x4] sm:$0xf] %v1410
                %v1412 = vld [vmem:[%s1406 + $0x8] sm:$0xf]
                %1413 = vst [vmem:[%s1407 + $0x8] sm:$0xf] %v1412
                %v1414 = vld [vmem:[%s1406 + $0xc] sm:$0xf]
                %1415 = vst [vmem:[%s1407 + $0xc] sm:$0xf] %v1414
                %v1416 = vld [vmem:[%s1406 + $0x10] sm:$0xf]
                %1417 = vst [vmem:[%s1407 + $0x20] sm:$0xf] %v1416
                %v1418 = vld [vmem:[%s1406 + $0x14] sm:$0xf]
                %1419 = vst [vmem:[%s1407 + $0x24] sm:$0xf] %v1418
                %v1420 = vld [vmem:[%s1406 + $0x18] sm:$0xf]
                %1421 = vst [vmem:[%s1407 + $0x28] sm:$0xf] %v1420
                %v1422 = vld [vmem:[%s1406 + $0x1c] sm:$0xf]
                %1423 = vst [vmem:[%s1407 + $0x2c] sm:$0xf] %v1422
              $region57: #{multi_cnn_forward.2} parent=51 // loop_footer
                %s1405 = sadd.s32 1, %s1401
              $region58: #{multi_cnn_forward.2} parent=51 // loop_footer_branch
                %1400 = sbr.rel target = $region54
              $region59: #{multi_cnn_forward.2} parent=51 // loop_exit
                _
            $region52: #{multi_cnn_forward.2} parent=43 // pred_fallthru
              _
          $region44: #{multi_cnn_forward.2} parent=39 // pred_fallthru
            _
          %1459 = vnop
        $region40: #{multi_cnn_forward.2} parent=35 // pred_fallthru
          _
      $region36: #{multi_cnn_forward.2} parent=5 // pred_fallthru
        _
      %p1460 = scmp.le.s32.totalorder 2, %s10
      // Predicated region
      $region78: #{multi_cnn_forward.2} parent=5 // pred_check
        %p1461 = pneg %p1460
      $region79: #{multi_cnn_forward.2} parent=5 // pred_check_branch
        %1463 = sbr.rel (%p1461) target = $region81
      $region80: #{multi_cnn_forward.2} parent=5 // pred_region
        %s1464 = ssub.s32 %s10, 2
        // Predicated region
        $region82: #{multi_cnn_forward.2} parent=80 // pred_check
          %p1465 = pneg %p143
        $region83: #{multi_cnn_forward.2} parent=80 // pred_check_branch
          %1467 = sbr.rel (%p1465) target = $region85
        $region84: #{multi_cnn_forward.2} parent=80 // pred_region
          %s1468 = sand.u32 %s128, 1
          %s1469 = sand.u32 %s128, 1
          %s1470 = smul.addr %s1469, 32
          %s1471 = scalar_lea.vmem [#allocation2], %s1470
        $region85: #{multi_cnn_forward.2} parent=80 // pred_fallthru
          _
      $region81: #{multi_cnn_forward.2} parent=5 // pred_fallthru
        _
    $region6: #{multi_cnn_forward.2} parent=1 // loop_footer
      %s14 = sadd.s32 1, %s10
    $region7: #{multi_cnn_forward.2} parent=1 // loop_footer_branch
      %9 = sbr.rel target = $region3
    $region8: #{multi_cnn_forward.2} parent=1 // loop_exit
      _

// kernel: multi_cnn_forward.3
$region0: #{multi_cnn_forward.3}
  #allocation0 [shape = 'u32[]', space=smem, size = 0x4, offset = 0x4, fixed_abs, tag = 'smem constant byte address 0x4 - core index']
  #allocation1 [shape = 'u32[144,128]{1,0:T(1,128)}', space=vmem, size = 0x12000, scoped, tag = 'internal scratch']
  #allocation2 [shape = 'f32[1,1]{1,0:T(1,128)S(1)}', space=vmem, size = 0x200, scoped, tag = 'scoped memory for multi_cnn_forward.3']
  %s0 = inlined_call_operand.vmem [shape: bf16[2,6400], index: 0, kind: input, shape index: {}]
  %s1 = inlined_call_operand.vmem [shape: bf16[6400,100], index: 1, kind: input, shape index: {}]
  %s2 = inlined_call_operand.vmem [shape: f32[1,100], index: 2, kind: input, shape index: {}]
  %s3 = inlined_call_operand.vmem [shape: bf16[100,64], index: 3, kind: input, shape index: {}]
  %s4 = inlined_call_operand.vmem [shape: f32[1,64], index: 4, kind: input, shape index: {}]
  %s5 = inlined_call_operand.vmem [shape: f32[1,64], index: 5, kind: input, shape index: {}]
  %s6 = inlined_call_operand.<no memory space> [shape: f32[1,1], index: 6, kind: input, shape index: {}]
  %s7 = inlined_call_operand.vmem [shape: f32[2,1], index: 7, kind: output, shape index: {}]
  %s8 = sld [smem:[#allocation0]]
  $region38: #{multi_cnn_forward.3} parent=0
    _
  %s10 = ssub.s32 1, %s8
  %s11 = scalar_select 0, %s10, %s8
  %v12 = vstv %s6
  %13 = vst [vmem:[#allocation2] sm:$0x1] %v12
  // Predicated region
  $region2: #{multi_cnn_forward.3} parent=0 // pred_check
    _
  $region3: #{multi_cnn_forward.3} parent=0 // pred_check_branch
    %15 = sbr.rel (0) target = $region5
  $region4: #{multi_cnn_forward.3} parent=0 // pred_region
    _
  $region5: #{multi_cnn_forward.3} parent=0 // pred_fallthru
    _
  // Predicated region
  $region6: #{multi_cnn_forward.3} parent=0 // pred_check
    _
  $region7: #{multi_cnn_forward.3} parent=0 // pred_check_branch
    %17 = sbr.rel (0) target = $region9
  $region8: #{multi_cnn_forward.3} parent=0 // pred_region
    _
  $region9: #{multi_cnn_forward.3} parent=0 // pred_fallthru
    _
  // Predicated region
  $region10: #{multi_cnn_forward.3} parent=0 // pred_check
    _
  $region11: #{multi_cnn_forward.3} parent=0 // pred_check_branch
    %19 = sbr.rel (0) target = $region13
  $region12: #{multi_cnn_forward.3} parent=0 // pred_region
    _
  $region13: #{multi_cnn_forward.3} parent=0 // pred_fallthru
    _
  // Predicated region
  $region14: #{multi_cnn_forward.3} parent=0 // pred_check
    _
  $region15: #{multi_cnn_forward.3} parent=0 // pred_check_branch
    %21 = sbr.rel (0) target = $region17
  $region16: #{multi_cnn_forward.3} parent=0 // pred_region
    _
  $region17: #{multi_cnn_forward.3} parent=0 // pred_fallthru
    _
  // Predicated region
  $region18: #{multi_cnn_forward.3} parent=0 // pred_check
    _
  $region19: #{multi_cnn_forward.3} parent=0 // pred_check_branch
    %23 = sbr.rel (0) target = $region21
  $region20: #{multi_cnn_forward.3} parent=0 // pred_region
    _
  $region21: #{multi_cnn_forward.3} parent=0 // pred_fallthru
    _
  // Predicated region
  $region22: #{multi_cnn_forward.3} parent=0 // pred_check
    _
  $region23: #{multi_cnn_forward.3} parent=0 // pred_check_branch
    %25 = sbr.rel (0) target = $region25
  $region24: #{multi_cnn_forward.3} parent=0 // pred_region
    _
  $region25: #{multi_cnn_forward.3} parent=0 // pred_fallthru
    _
  // Predicated region
  $region26: #{multi_cnn_forward.3} parent=0 // pred_check
    _
  $region27: #{multi_cnn_forward.3} parent=0 // pred_check_branch
    %27 = sbr.rel (0) target = $region29
  $region28: #{multi_cnn_forward.3} parent=0 // pred_region
    _
  $region29: #{multi_cnn_forward.3} parent=0 // pred_fallthru
    _
  %v29 = vld [vmem:[%s0] sm:$0xff]
  %v30 = vld [vmem:[%s0 + $0x8] sm:$0xff]
  %v31 = vld [vmem:[%s0 + $0x10] sm:$0xff]
  %v32 = vld [vmem:[%s0 + $0x18] sm:$0xff]
  %v33 = vld [vmem:[%s0 + $0x20] sm:$0xff]
  %v34 = vld [vmem:[%s0 + $0x28] sm:$0xff]
  %v35 = vld [vmem:[%s0 + $0x30] sm:$0x3]
  %v36 = vld [vmem:[%s1] sm:$0xf]
  %v37 = vld [vmem:[%s1 + $0x4] sm:$0xf]
  %v38 = vld [vmem:[%s1 + $0x8] sm:$0xf]
  %v39 = vld [vmem:[%s1 + $0xc] sm:$0xf]
  %v40 = vld [vmem:[%s1 + $0x10] sm:$0xf]
  %v41 = vld [vmem:[%s1 + $0x14] sm:$0xf]
  %v42 = vld [vmem:[%s1 + $0x18] sm:$0xf]
  %v43 = vld [vmem:[%s1 + $0x1c] sm:$0xf]
  %v44 = vld [vmem:[%s1 + $0x20] sm:$0xf]
  %v45 = vld [vmem:[%s1 + $0x24] sm:$0xf]
  %v46 = vld [vmem:[%s1 + $0x28] sm:$0xf]
  %v47 = vld [vmem:[%s1 + $0x2c] sm:$0xf]
  %v48 = vld [vmem:[%s1 + $0x30] sm:$0xf]
  %v49 = vld [vmem:[%s1 + $0x34] sm:$0xf]
  %v50 = vld [vmem:[%s1 + $0x38] sm:$0xf]
  %v51 = vld [vmem:[%s1 + $0x3c] sm:$0xf]
  %v52 = vld [vmem:[%s1 + $0x40] sm:$0xf]
  %v53 = vld [vmem:[%s1 + $0x44] sm:$0xf]
  %v54 = vld [vmem:[%s1 + $0x48] sm:$0xf]
  %v55 = vld [vmem:[%s1 + $0x4c] sm:$0xf]
  %v56 = vld [vmem:[%s1 + $0x50] sm:$0xf]
  %v57 = vld [vmem:[%s1 + $0x54] sm:$0xf]
  %v58 = vld [vmem:[%s1 + $0x58] sm:$0xf]
  %v59 = vld [vmem:[%s1 + $0x5c] sm:$0xf]
  %v60 = vld [vmem:[%s1 + $0x60] sm:$0xf]
  %v61 = vld [vmem:[%s1 + $0x64] sm:$0xf]
  %v62 = vld [vmem:[%s1 + $0x68] sm:$0xf]
  %v63 = vld [vmem:[%s1 + $0x6c] sm:$0xf]
  %v64 = vld [vmem:[%s1 + $0x70] sm:$0xf]
  %v65 = vld [vmem:[%s1 + $0x74] sm:$0xf]
  %v66 = vld [vmem:[%s1 + $0x78] sm:$0xf]
  %v67 = vld [vmem:[%s1 + $0x7c] sm:$0xf]
  %v68 = vld [vmem:[%s1 + $0x80] sm:$0xf]
  %v69 = vld [vmem:[%s1 + $0x84] sm:$0xf]
  %v70 = vld [vmem:[%s1 + $0x88] sm:$0xf]
  %v71 = vld [vmem:[%s1 + $0x8c] sm:$0xf]
  %v72 = vld [vmem:[%s1 + $0x90] sm:$0xf]
  %v73 = vld [vmem:[%s1 + $0x94] sm:$0xf]
  %v74 = vld [vmem:[%s1 + $0x98] sm:$0xf]
  %v75 = vld [vmem:[%s1 + $0x9c] sm:$0xf]
  %v76 = vld [vmem:[%s1 + $0xa0] sm:$0xf]
  %v77 = vld [vmem:[%s1 + $0xa4] sm:$0xf]
  %v78 = vld [vmem:[%s1 + $0xa8] sm:$0xf]
  %v79 = vld [vmem:[%s1 + $0xac] sm:$0xf]
  %v80 = vld [vmem:[%s1 + $0xb0] sm:$0xf]
  %v81 = vld [vmem:[%s1 + $0xb4] sm:$0xf]
  %v82 = vld [vmem:[%s1 + $0xb8] sm:$0xf]
  %v83 = vld [vmem:[%s1 + $0xbc] sm:$0xf]
  %v84 = vld [vmem:[%s1 + $0xc0] sm:$0xf]
  %v85 = vld [vmem:[%s1 + $0xc4] sm:$0xf]
  %v86 = vld [vmem:[%s1 + $0xc8] sm:$0xf]
  %v87 = vld [vmem:[%s1 + $0xcc] sm:$0xf]
  %v88 = vld [vmem:[%s1 + $0xd0] sm:$0xf]
  %v89 = vld [vmem:[%s1 + $0xd4] sm:$0xf]
  %v90 = vld [vmem:[%s1 + $0xd8] sm:$0xf]
  %v91 = vld [vmem:[%s1 + $0xdc] sm:$0xf]
  %v92 = vld [vmem:[%s1 + $0xe0] sm:$0xf]
  %v93 = vld [vmem:[%s1 + $0xe4] sm:$0xf]
  %v94 = vld [vmem:[%s1 + $0xe8] sm:$0xf]
  %v95 = vld [vmem:[%s1 + $0xec] sm:$0xf]
  %v96 = vld [vmem:[%s1 + $0xf0] sm:$0xf]
  %v97 = vld [vmem:[%s1 + $0xf4] sm:$0xf]
  %v98 = vld [vmem:[%s1 + $0xf8] sm:$0xf]
  %v99 = vld [vmem:[%s1 + $0xfc] sm:$0xf]
  %v100 = vld [vmem:[%s1 + $0x100] sm:$0xf]
  %v101 = vld [vmem:[%s1 + $0x104] sm:$0xf]
  %v102 = vld [vmem:[%s1 + $0x108] sm:$0xf]
  %v103 = vld [vmem:[%s1 + $0x10c] sm:$0xf]
  %v104 = vld [vmem:[%s1 + $0x110] sm:$0xf]
  %v105 = vld [vmem:[%s1 + $0x114] sm:$0xf]
  %v106 = vld [vmem:[%s1 + $0x118] sm:$0xf]
  %v107 = vld [vmem:[%s1 + $0x11c] sm:$0xf]
  %v108 = vld [vmem:[%s1 + $0x120] sm:$0xf]
  %v109 = vld [vmem:[%s1 + $0x124] sm:$0xf]
  %v110 = vld [vmem:[%s1 + $0x128] sm:$0xf]
  %v111 = vld [vmem:[%s1 + $0x12c] sm:$0xf]
  %v112 = vld [vmem:[%s1 + $0x130] sm:$0xf]
  %v113 = vld [vmem:[%s1 + $0x134] sm:$0xf]
  %v114 = vld [vmem:[%s1 + $0x138] sm:$0xf]
  %v115 = vld [vmem:[%s1 + $0x13c] sm:$0xf]
  %v116 = vld [vmem:[%s1 + $0x140] sm:$0xf]
  %v117 = vld [vmem:[%s1 + $0x144] sm:$0xf]
  %v118 = vld [vmem:[%s1 + $0x148] sm:$0xf]
  %v119 = vld [vmem:[%s1 + $0x14c] sm:$0xf]
  %v120 = vld [vmem:[%s1 + $0x150] sm:$0xf]
  %v121 = vld [vmem:[%s1 + $0x154] sm:$0xf]
  %v122 = vld [vmem:[%s1 + $0x158] sm:$0xf]
  %v123 = vld [vmem:[%s1 + $0x15c] sm:$0xf]
  %v124 = vld [vmem:[%s1 + $0x160] sm:$0xf]
  %v125 = vld [vmem:[%s1 + $0x164] sm:$0xf]
  %v126 = vld [vmem:[%s1 + $0x168] sm:$0xf]
  %v127 = vld [vmem:[%s1 + $0x16c] sm:$0xf]
  %v128 = vld [vmem:[%s1 + $0x170] sm:$0xf]
  %v129 = vld [vmem:[%s1 + $0x174] sm:$0xf]
  %v130 = vld [vmem:[%s1 + $0x178] sm:$0xf]
  %v131 = vld [vmem:[%s1 + $0x17c] sm:$0xf]
  %v132 = vld [vmem:[%s1 + $0x180] sm:$0xf]
  %v133 = vld [vmem:[%s1 + $0x184] sm:$0xf]
  %v134 = vld [vmem:[%s1 + $0x188] sm:$0xf]
  %v135 = vld [vmem:[%s1 + $0x18c] sm:$0xf]
  %v136 = vld [vmem:[%s1 + $0x190] sm:$0xf]
  %v137 = vld [vmem:[%s1 + $0x194] sm:$0xf]
  %v138 = vld [vmem:[%s1 + $0x198] sm:$0xf]
  %v139 = vld [vmem:[%s1 + $0x19c] sm:$0xf]
  %v140 = vld [vmem:[%s1 + $0x1a0] sm:$0xf]
  %v141 = vld [vmem:[%s1 + $0x1a4] sm:$0xf]
  %v142 = vld [vmem:[%s1 + $0x1a8] sm:$0xf]
  %v143 = vld [vmem:[%s1 + $0x1ac] sm:$0xf]
  %v144 = vld [vmem:[%s1 + $0x1b0] sm:$0xf]
  %v145 = vld [vmem:[%s1 + $0x1b4] sm:$0xf]
  %v146 = vld [vmem:[%s1 + $0x1b8] sm:$0xf]
  %v147 = vld [vmem:[%s1 + $0x1bc] sm:$0xf]
  %v148 = vld [vmem:[%s1 + $0x1c0] sm:$0xf]
  %v149 = vld [vmem:[%s1 + $0x1c4] sm:$0xf]
  %v150 = vld [vmem:[%s1 + $0x1c8] sm:$0xf]
  %v151 = vld [vmem:[%s1 + $0x1cc] sm:$0xf]
  %v152 = vld [vmem:[%s1 + $0x1d0] sm:$0xf]
  %v153 = vld [vmem:[%s1 + $0x1d4] sm:$0xf]
  %v154 = vld [vmem:[%s1 + $0x1d8] sm:$0xf]
  %v155 = vld [vmem:[%s1 + $0x1dc] sm:$0xf]
  %v156 = vld [vmem:[%s1 + $0x1e0] sm:$0xf]
  %v157 = vld [vmem:[%s1 + $0x1e4] sm:$0xf]
  %v158 = vld [vmem:[%s1 + $0x1e8] sm:$0xf]
  %v159 = vld [vmem:[%s1 + $0x1ec] sm:$0xf]
  %v160 = vld [vmem:[%s1 + $0x1f0] sm:$0xf]
  %v161 = vld [vmem:[%s1 + $0x1f4] sm:$0xf]
  %v162 = vld [vmem:[%s1 + $0x1f8] sm:$0xf]
  %v163 = vld [vmem:[%s1 + $0x1fc] sm:$0xf]
  %v164 = vld [vmem:[%s1 + $0x200] sm:$0xf]
  %v165 = vld [vmem:[%s1 + $0x204] sm:$0xf]
  %v166 = vld [vmem:[%s1 + $0x208] sm:$0xf]
  %v167 = vld [vmem:[%s1 + $0x20c] sm:$0xf]
  %v168 = vld [vmem:[%s1 + $0x210] sm:$0xf]
  %v169 = vld [vmem:[%s1 + $0x214] sm:$0xf]
  %v170 = vld [vmem:[%s1 + $0x218] sm:$0xf]
  %v171 = vld [vmem:[%s1 + $0x21c] sm:$0xf]
  %v172 = vld [vmem:[%s1 + $0x220] sm:$0xf]
  %v173 = vld [vmem:[%s1 + $0x224] sm:$0xf]
  %v174 = vld [vmem:[%s1 + $0x228] sm:$0xf]
  %v175 = vld [vmem:[%s1 + $0x22c] sm:$0xf]
  %v176 = vld [vmem:[%s1 + $0x230] sm:$0xf]
  %v177 = vld [vmem:[%s1 + $0x234] sm:$0xf]
  %v178 = vld [vmem:[%s1 + $0x238] sm:$0xf]
  %v179 = vld [vmem:[%s1 + $0x23c] sm:$0xf]
  %v180 = vld [vmem:[%s1 + $0x240] sm:$0xf]
  %v181 = vld [vmem:[%s1 + $0x244] sm:$0xf]
  %v182 = vld [vmem:[%s1 + $0x248] sm:$0xf]
  %v183 = vld [vmem:[%s1 + $0x24c] sm:$0xf]
  %v184 = vld [vmem:[%s1 + $0x250] sm:$0xf]
  %v185 = vld [vmem:[%s1 + $0x254] sm:$0xf]
  %v186 = vld [vmem:[%s1 + $0x258] sm:$0xf]
  %v187 = vld [vmem:[%s1 + $0x25c] sm:$0xf]
  %v188 = vld [vmem:[%s1 + $0x260] sm:$0xf]
  %v189 = vld [vmem:[%s1 + $0x264] sm:$0xf]
  %v190 = vld [vmem:[%s1 + $0x268] sm:$0xf]
  %v191 = vld [vmem:[%s1 + $0x26c] sm:$0xf]
  %v192 = vld [vmem:[%s1 + $0x270] sm:$0xf]
  %v193 = vld [vmem:[%s1 + $0x274] sm:$0xf]
  %v194 = vld [vmem:[%s1 + $0x278] sm:$0xf]
  %v195 = vld [vmem:[%s1 + $0x27c] sm:$0xf]
  %v196 = vld [vmem:[%s1 + $0x280] sm:$0xf]
  %v197 = vld [vmem:[%s1 + $0x284] sm:$0xf]
  %v198 = vld [vmem:[%s1 + $0x288] sm:$0xf]
  %v199 = vld [vmem:[%s1 + $0x28c] sm:$0xf]
  %v200 = vld [vmem:[%s1 + $0x290] sm:$0xf]
  %v201 = vld [vmem:[%s1 + $0x294] sm:$0xf]
  %v202 = vld [vmem:[%s1 + $0x298] sm:$0xf]
  %v203 = vld [vmem:[%s1 + $0x29c] sm:$0xf]
  %v204 = vld [vmem:[%s1 + $0x2a0] sm:$0xf]
  %v205 = vld [vmem:[%s1 + $0x2a4] sm:$0xf]
  %v206 = vld [vmem:[%s1 + $0x2a8] sm:$0xf]
  %v207 = vld [vmem:[%s1 + $0x2ac] sm:$0xf]
  %v208 = vld [vmem:[%s1 + $0x2b0] sm:$0xf]
  %v209 = vld [vmem:[%s1 + $0x2b4] sm:$0xf]
  %v210 = vld [vmem:[%s1 + $0x2b8] sm:$0xf]
  %v211 = vld [vmem:[%s1 + $0x2bc] sm:$0xf]
  %v212 = vld [vmem:[%s1 + $0x2c0] sm:$0xf]
  %v213 = vld [vmem:[%s1 + $0x2c4] sm:$0xf]
  %v214 = vld [vmem:[%s1 + $0x2c8] sm:$0xf]
  %v215 = vld [vmem:[%s1 + $0x2cc] sm:$0xf]
  %v216 = vld [vmem:[%s1 + $0x2d0] sm:$0xf]
  %v217 = vld [vmem:[%s1 + $0x2d4] sm:$0xf]
  %v218 = vld [vmem:[%s1 + $0x2d8] sm:$0xf]
  %v219 = vld [vmem:[%s1 + $0x2dc] sm:$0xf]
  %v220 = vld [vmem:[%s1 + $0x2e0] sm:$0xf]
  %v221 = vld [vmem:[%s1 + $0x2e4] sm:$0xf]
  %v222 = vld [vmem:[%s1 + $0x2e8] sm:$0xf]
  %v223 = vld [vmem:[%s1 + $0x2ec] sm:$0xf]
  %v224 = vld [vmem:[%s1 + $0x2f0] sm:$0xf]
  %v225 = vld [vmem:[%s1 + $0x2f4] sm:$0xf]
  %v226 = vld [vmem:[%s1 + $0x2f8] sm:$0xf]
  %v227 = vld [vmem:[%s1 + $0x2fc] sm:$0xf]
  %v228 = vld [vmem:[%s1 + $0x300] sm:$0xf]
  %v229 = vld [vmem:[%s1 + $0x304] sm:$0xf]
  %v230 = vld [vmem:[%s1 + $0x308] sm:$0xf]
  %v231 = vld [vmem:[%s1 + $0x30c] sm:$0xf]
  %v232 = vld [vmem:[%s1 + $0x310] sm:$0xf]
  %v233 = vld [vmem:[%s1 + $0x314] sm:$0xf]
  %v234 = vld [vmem:[%s1 + $0x318] sm:$0xf]
  %v235 = vld [vmem:[%s1 + $0x31c] sm:$0xf]
  %v236 = vld [vmem:[%s1 + $0x320] sm:$0xf]
  %v237 = vld [vmem:[%s1 + $0x324] sm:$0xf]
  %v238 = vld [vmem:[%s1 + $0x328] sm:$0xf]
  %v239 = vld [vmem:[%s1 + $0x32c] sm:$0xf]
  %v240 = vld [vmem:[%s1 + $0x330] sm:$0xf]
  %v241 = vld [vmem:[%s1 + $0x334] sm:$0xf]
  %v242 = vld [vmem:[%s1 + $0x338] sm:$0xf]
  %v243 = vld [vmem:[%s1 + $0x33c] sm:$0xf]
  %v244 = vld [vmem:[%s1 + $0x340] sm:$0xf]
  %v245 = vld [vmem:[%s1 + $0x344] sm:$0xf]
  %v246 = vld [vmem:[%s1 + $0x348] sm:$0xf]
  %v247 = vld [vmem:[%s1 + $0x34c] sm:$0xf]
  %v248 = vld [vmem:[%s1 + $0x350] sm:$0xf]
  %v249 = vld [vmem:[%s1 + $0x354] sm:$0xf]
  %v250 = vld [vmem:[%s1 + $0x358] sm:$0xf]
  %v251 = vld [vmem:[%s1 + $0x35c] sm:$0xf]
  %v252 = vld [vmem:[%s1 + $0x360] sm:$0xf]
  %v253 = vld [vmem:[%s1 + $0x364] sm:$0xf]
  %v254 = vld [vmem:[%s1 + $0x368] sm:$0xf]
  %v255 = vld [vmem:[%s1 + $0x36c] sm:$0xf]
  %v256 = vld [vmem:[%s1 + $0x370] sm:$0xf]
  %v257 = vld [vmem:[%s1 + $0x374] sm:$0xf]
  %v258 = vld [vmem:[%s1 + $0x378] sm:$0xf]
  %v259 = vld [vmem:[%s1 + $0x37c] sm:$0xf]
  %v260 = vld [vmem:[%s1 + $0x380] sm:$0xf]
  %v261 = vld [vmem:[%s1 + $0x384] sm:$0xf]
  %v262 = vld [vmem:[%s1 + $0x388] sm:$0xf]
  %v263 = vld [vmem:[%s1 + $0x38c] sm:$0xf]
  %v264 = vld [vmem:[%s1 + $0x390] sm:$0xf]
  %v265 = vld [vmem:[%s1 + $0x394] sm:$0xf]
  %v266 = vld [vmem:[%s1 + $0x398] sm:$0xf]
  %v267 = vld [vmem:[%s1 + $0x39c] sm:$0xf]
  %v268 = vld [vmem:[%s1 + $0x3a0] sm:$0xf]
  %v269 = vld [vmem:[%s1 + $0x3a4] sm:$0xf]
  %v270 = vld [vmem:[%s1 + $0x3a8] sm:$0xf]
  %v271 = vld [vmem:[%s1 + $0x3ac] sm:$0xf]
  %v272 = vld [vmem:[%s1 + $0x3b0] sm:$0xf]
  %v273 = vld [vmem:[%s1 + $0x3b4] sm:$0xf]
  %v274 = vld [vmem:[%s1 + $0x3b8] sm:$0xf]
  %v275 = vld [vmem:[%s1 + $0x3bc] sm:$0xf]
  %v276 = vld [vmem:[%s1 + $0x3c0] sm:$0xf]
  %v277 = vld [vmem:[%s1 + $0x3c4] sm:$0xf]
  %v278 = vld [vmem:[%s1 + $0x3c8] sm:$0xf]
  %v279 = vld [vmem:[%s1 + $0x3cc] sm:$0xf]
  %v280 = vld [vmem:[%s1 + $0x3d0] sm:$0xf]
  %v281 = vld [vmem:[%s1 + $0x3d4] sm:$0xf]
  %v282 = vld [vmem:[%s1 + $0x3d8] sm:$0xf]
  %v283 = vld [vmem:[%s1 + $0x3dc] sm:$0xf]
  %v284 = vld [vmem:[%s1 + $0x3e0] sm:$0xf]
  %v285 = vld [vmem:[%s1 + $0x3e4] sm:$0xf]
  %v286 = vld [vmem:[%s1 + $0x3e8] sm:$0xf]
  %v287 = vld [vmem:[%s1 + $0x3ec] sm:$0xf]
  %v288 = vld [vmem:[%s1 + $0x3f0] sm:$0xf]
  %v289 = vld [vmem:[%s1 + $0x3f4] sm:$0xf]
  %v290 = vld [vmem:[%s1 + $0x3f8] sm:$0xf]
  %v291 = vld [vmem:[%s1 + $0x3fc] sm:$0xf]
  %v292 = vld [vmem:[%s1 + $0x400] sm:$0xf]
  %v293 = vld [vmem:[%s1 + $0x404] sm:$0xf]
  %v294 = vld [vmem:[%s1 + $0x408] sm:$0xf]
  %v295 = vld [vmem:[%s1 + $0x40c] sm:$0xf]
  %v296 = vld [vmem:[%s1 + $0x410] sm:$0xf]
  %v297 = vld [vmem:[%s1 + $0x414] sm:$0xf]
  %v298 = vld [vmem:[%s1 + $0x418] sm:$0xf]
  %v299 = vld [vmem:[%s1 + $0x41c] sm:$0xf]
  %v300 = vld [vmem:[%s1 + $0x420] sm:$0xf]
  %v301 = vld [vmem:[%s1 + $0x424] sm:$0xf]
  %v302 = vld [vmem:[%s1 + $0x428] sm:$0xf]
  %v303 = vld [vmem:[%s1 + $0x42c] sm:$0xf]
  %v304 = vld [vmem:[%s1 + $0x430] sm:$0xf]
  %v305 = vld [vmem:[%s1 + $0x434] sm:$0xf]
  %v306 = vld [vmem:[%s1 + $0x438] sm:$0xf]
  %v307 = vld [vmem:[%s1 + $0x43c] sm:$0xf]
  %v308 = vld [vmem:[%s1 + $0x440] sm:$0xf]
  %v309 = vld [vmem:[%s1 + $0x444] sm:$0xf]
  %v310 = vld [vmem:[%s1 + $0x448] sm:$0xf]
  %v311 = vld [vmem:[%s1 + $0x44c] sm:$0xf]
  %v312 = vld [vmem:[%s1 + $0x450] sm:$0xf]
  %v313 = vld [vmem:[%s1 + $0x454] sm:$0xf]
  %v314 = vld [vmem:[%s1 + $0x458] sm:$0xf]
  %v315 = vld [vmem:[%s1 + $0x45c] sm:$0xf]
  %v316 = vld [vmem:[%s1 + $0x460] sm:$0xf]
  %v317 = vld [vmem:[%s1 + $0x464] sm:$0xf]
  %v318 = vld [vmem:[%s1 + $0x468] sm:$0xf]
  %v319 = vld [vmem:[%s1 + $0x46c] sm:$0xf]
  %v320 = vld [vmem:[%s1 + $0x470] sm:$0xf]
  %v321 = vld [vmem:[%s1 + $0x474] sm:$0xf]
  %v322 = vld [vmem:[%s1 + $0x478] sm:$0xf]
  %v323 = vld [vmem:[%s1 + $0x47c] sm:$0xf]
  %v324 = vld [vmem:[%s1 + $0x480] sm:$0xf]
  %v325 = vld [vmem:[%s1 + $0x484] sm:$0xf]
  %v326 = vld [vmem:[%s1 + $0x488] sm:$0xf]
  %v327 = vld [vmem:[%s1 + $0x48c] sm:$0xf]
  %v328 = vld [vmem:[%s1 + $0x490] sm:$0xf]
  %v329 = vld [vmem:[%s1 + $0x494] sm:$0xf]
  %v330 = vld [vmem:[%s1 + $0x498] sm:$0xf]
  %v331 = vld [vmem:[%s1 + $0x49c] sm:$0xf]
  %v332 = vld [vmem:[%s1 + $0x4a0] sm:$0xf]
  %v333 = vld [vmem:[%s1 + $0x4a4] sm:$0xf]
  %v334 = vld [vmem:[%s1 + $0x4a8] sm:$0xf]
  %v335 = vld [vmem:[%s1 + $0x4ac] sm:$0xf]
  %v336 = vld [vmem:[%s1 + $0x4b0] sm:$0xf]
  %v337 = vld [vmem:[%s1 + $0x4b4] sm:$0xf]
  %v338 = vld [vmem:[%s1 + $0x4b8] sm:$0xf]
  %v339 = vld [vmem:[%s1 + $0x4bc] sm:$0xf]
  %v340 = vld [vmem:[%s1 + $0x4c0] sm:$0xf]
  %v341 = vld [vmem:[%s1 + $0x4c4] sm:$0xf]
  %v342 = vld [vmem:[%s1 + $0x4c8] sm:$0xf]
  %v343 = vld [vmem:[%s1 + $0x4cc] sm:$0xf]
  %v344 = vld [vmem:[%s1 + $0x4d0] sm:$0xf]
  %v345 = vld [vmem:[%s1 + $0x4d4] sm:$0xf]
  %v346 = vld [vmem:[%s1 + $0x4d8] sm:$0xf]
  %v347 = vld [vmem:[%s1 + $0x4dc] sm:$0xf]
  %v348 = vld [vmem:[%s1 + $0x4e0] sm:$0xf]
  %v349 = vld [vmem:[%s1 + $0x4e4] sm:$0xf]
  %v350 = vld [vmem:[%s1 + $0x4e8] sm:$0xf]
  %v351 = vld [vmem:[%s1 + $0x4ec] sm:$0xf]
  %v352 = vld [vmem:[%s1 + $0x4f0] sm:$0xf]
  %v353 = vld [vmem:[%s1 + $0x4f4] sm:$0xf]
  %v354 = vld [vmem:[%s1 + $0x4f8] sm:$0xf]
  %v355 = vld [vmem:[%s1 + $0x4fc] sm:$0xf]
  %v356 = vld [vmem:[%s1 + $0x500] sm:$0xf]
  %v357 = vld [vmem:[%s1 + $0x504] sm:$0xf]
  %v358 = vld [vmem:[%s1 + $0x508] sm:$0xf]
  %v359 = vld [vmem:[%s1 + $0x50c] sm:$0xf]
  %v360 = vld [vmem:[%s1 + $0x510] sm:$0xf]
  %v361 = vld [vmem:[%s1 + $0x514] sm:$0xf]
  %v362 = vld [vmem:[%s1 + $0x518] sm:$0xf]
  %v363 = vld [vmem:[%s1 + $0x51c] sm:$0xf]
  %v364 = vld [vmem:[%s1 + $0x520] sm:$0xf]
  %v365 = vld [vmem:[%s1 + $0x524] sm:$0xf]
  %v366 = vld [vmem:[%s1 + $0x528] sm:$0xf]
  %v367 = vld [vmem:[%s1 + $0x52c] sm:$0xf]
  %v368 = vld [vmem:[%s1 + $0x530] sm:$0xf]
  %v369 = vld [vmem:[%s1 + $0x534] sm:$0xf]
  %v370 = vld [vmem:[%s1 + $0x538] sm:$0xf]
  %v371 = vld [vmem:[%s1 + $0x53c] sm:$0xf]
  %v372 = vld [vmem:[%s1 + $0x540] sm:$0xf]
  %v373 = vld [vmem:[%s1 + $0x544] sm:$0xf]
  %v374 = vld [vmem:[%s1 + $0x548] sm:$0xf]
  %v375 = vld [vmem:[%s1 + $0x54c] sm:$0xf]
  %v376 = vld [vmem:[%s1 + $0x550] sm:$0xf]
  %v377 = vld [vmem:[%s1 + $0x554] sm:$0xf]
  %v378 = vld [vmem:[%s1 + $0x558] sm:$0xf]
  %v379 = vld [vmem:[%s1 + $0x55c] sm:$0xf]
  %v380 = vld [vmem:[%s1 + $0x560] sm:$0xf]
  %v381 = vld [vmem:[%s1 + $0x564] sm:$0xf]
  %v382 = vld [vmem:[%s1 + $0x568] sm:$0xf]
  %v383 = vld [vmem:[%s1 + $0x56c] sm:$0xf]
  %v384 = vld [vmem:[%s1 + $0x570] sm:$0xf]
  %v385 = vld [vmem:[%s1 + $0x574] sm:$0xf]
  %v386 = vld [vmem:[%s1 + $0x578] sm:$0xf]
  %v387 = vld [vmem:[%s1 + $0x57c] sm:$0xf]
  %v388 = vld [vmem:[%s1 + $0x580] sm:$0xf]
  %v389 = vld [vmem:[%s1 + $0x584] sm:$0xf]
  %v390 = vld [vmem:[%s1 + $0x588] sm:$0xf]
  %v391 = vld [vmem:[%s1 + $0x58c] sm:$0xf]
  %v392 = vld [vmem:[%s1 + $0x590] sm:$0xf]
  %v393 = vld [vmem:[%s1 + $0x594] sm:$0xf]
  %v394 = vld [vmem:[%s1 + $0x598] sm:$0xf]
  %v395 = vld [vmem:[%s1 + $0x59c] sm:$0xf]
  %v396 = vld [vmem:[%s1 + $0x5a0] sm:$0xf]
  %v397 = vld [vmem:[%s1 + $0x5a4] sm:$0xf]
  %v398 = vld [vmem:[%s1 + $0x5a8] sm:$0xf]
  %v399 = vld [vmem:[%s1 + $0x5ac] sm:$0xf]
  %v400 = vld [vmem:[%s1 + $0x5b0] sm:$0xf]
  %v401 = vld [vmem:[%s1 + $0x5b4] sm:$0xf]
  %v402 = vld [vmem:[%s1 + $0x5b8] sm:$0xf]
  %v403 = vld [vmem:[%s1 + $0x5bc] sm:$0xf]
  %v404 = vld [vmem:[%s1 + $0x5c0] sm:$0xf]
  %v405 = vld [vmem:[%s1 + $0x5c4] sm:$0xf]
  %v406 = vld [vmem:[%s1 + $0x5c8] sm:$0xf]
  %v407 = vld [vmem:[%s1 + $0x5cc] sm:$0xf]
  %v408 = vld [vmem:[%s1 + $0x5d0] sm:$0xf]
  %v409 = vld [vmem:[%s1 + $0x5d4] sm:$0xf]
  %v410 = vld [vmem:[%s1 + $0x5d8] sm:$0xf]
  %v411 = vld [vmem:[%s1 + $0x5dc] sm:$0xf]
  %v412 = vld [vmem:[%s1 + $0x5e0] sm:$0xf]
  %v413 = vld [vmem:[%s1 + $0x5e4] sm:$0xf]
  %v414 = vld [vmem:[%s1 + $0x5e8] sm:$0xf]
  %v415 = vld [vmem:[%s1 + $0x5ec] sm:$0xf]
  %v416 = vld [vmem:[%s1 + $0x5f0] sm:$0xf]
  %v417 = vld [vmem:[%s1 + $0x5f4] sm:$0xf]
  %v418 = vld [vmem:[%s1 + $0x5f8] sm:$0xf]
  %v419 = vld [vmem:[%s1 + $0x5fc] sm:$0xf]
  %v420 = vld [vmem:[%s1 + $0x600] sm:$0xf]
  %v421 = vld [vmem:[%s1 + $0x604] sm:$0xf]
  %v422 = vld [vmem:[%s1 + $0x608] sm:$0xf]
  %v423 = vld [vmem:[%s1 + $0x60c] sm:$0xf]
  %v424 = vld [vmem:[%s1 + $0x610] sm:$0xf]
  %v425 = vld [vmem:[%s1 + $0x614] sm:$0xf]
  %v426 = vld [vmem:[%s1 + $0x618] sm:$0xf]
  %v427 = vld [vmem:[%s1 + $0x61c] sm:$0xf]
  %v428 = vld [vmem:[%s1 + $0x620] sm:$0xf]
  %v429 = vld [vmem:[%s1 + $0x624] sm:$0xf]
  %v430 = vld [vmem:[%s1 + $0x628] sm:$0xf]
  %v431 = vld [vmem:[%s1 + $0x62c] sm:$0xf]
  %v432 = vld [vmem:[%s1 + $0x630] sm:$0xf]
  %v433 = vld [vmem:[%s1 + $0x634] sm:$0xf]
  %v434 = vld [vmem:[%s1 + $0x638] sm:$0xf]
  %v435 = vld [vmem:[%s1 + $0x63c] sm:$0xf]
  %v436 = vld [vmem:[%s1 + $0x640] sm:$0xf]
  %v437 = vld [vmem:[%s1 + $0x644] sm:$0xf]
  %v438 = vld [vmem:[%s1 + $0x648] sm:$0xf]
  %v439 = vld [vmem:[%s1 + $0x64c] sm:$0xf]
  %v440 = vld [vmem:[%s1 + $0x650] sm:$0xf]
  %v441 = vld [vmem:[%s1 + $0x654] sm:$0xf]
  %v442 = vld [vmem:[%s1 + $0x658] sm:$0xf]
  %v443 = vld [vmem:[%s1 + $0x65c] sm:$0xf]
  %v444 = vld [vmem:[%s1 + $0x660] sm:$0xf]
  %v445 = vld [vmem:[%s1 + $0x664] sm:$0xf]
  %v446 = vld [vmem:[%s1 + $0x668] sm:$0xf]
  %v447 = vld [vmem:[%s1 + $0x66c] sm:$0xf]
  %v448 = vld [vmem:[%s1 + $0x670] sm:$0xf]
  %v449 = vld [vmem:[%s1 + $0x674] sm:$0xf]
  %v450 = vld [vmem:[%s1 + $0x678] sm:$0xf]
  %v451 = vld [vmem:[%s1 + $0x67c] sm:$0xf]
  %v452 = vld [vmem:[%s1 + $0x680] sm:$0xf]
  %v453 = vld [vmem:[%s1 + $0x684] sm:$0xf]
  %v454 = vld [vmem:[%s1 + $0x688] sm:$0xf]
  %v455 = vld [vmem:[%s1 + $0x68c] sm:$0xf]
  %v456 = vld [vmem:[%s1 + $0x690] sm:$0xf]
  %v457 = vld [vmem:[%s1 + $0x694] sm:$0xf]
  %v458 = vld [vmem:[%s1 + $0x698] sm:$0xf]
  %v459 = vld [vmem:[%s1 + $0x69c] sm:$0xf]
  %v460 = vld [vmem:[%s1 + $0x6a0] sm:$0xf]
  %v461 = vld [vmem:[%s1 + $0x6a4] sm:$0xf]
  %v462 = vld [vmem:[%s1 + $0x6a8] sm:$0xf]
  %v463 = vld [vmem:[%s1 + $0x6ac] sm:$0xf]
  %v464 = vld [vmem:[%s1 + $0x6b0] sm:$0xf]
  %v465 = vld [vmem:[%s1 + $0x6b4] sm:$0xf]
  %v466 = vld [vmem:[%s1 + $0x6b8] sm:$0xf]
  %v467 = vld [vmem:[%s1 + $0x6bc] sm:$0xf]
  %v468 = vld [vmem:[%s1 + $0x6c0] sm:$0xf]
  %v469 = vld [vmem:[%s1 + $0x6c4] sm:$0xf]
  %v470 = vld [vmem:[%s1 + $0x6c8] sm:$0xf]
  %v471 = vld [vmem:[%s1 + $0x6cc] sm:$0xf]
  %v472 = vld [vmem:[%s1 + $0x6d0] sm:$0xf]
  %v473 = vld [vmem:[%s1 + $0x6d4] sm:$0xf]
  %v474 = vld [vmem:[%s1 + $0x6d8] sm:$0xf]
  %v475 = vld [vmem:[%s1 + $0x6dc] sm:$0xf]
  %v476 = vld [vmem:[%s1 + $0x6e0] sm:$0xf]
  %v477 = vld [vmem:[%s1 + $0x6e4] sm:$0xf]
  %v478 = vld [vmem:[%s1 + $0x6e8] sm:$0xf]
  %v479 = vld [vmem:[%s1 + $0x6ec] sm:$0xf]
  %v480 = vld [vmem:[%s1 + $0x6f0] sm:$0xf]
  %v481 = vld [vmem:[%s1 + $0x6f4] sm:$0xf]
  %v482 = vld [vmem:[%s1 + $0x6f8] sm:$0xf]
  %v483 = vld [vmem:[%s1 + $0x6fc] sm:$0xf]
  %v484 = vld [vmem:[%s1 + $0x700] sm:$0xf]
  %v485 = vld [vmem:[%s1 + $0x704] sm:$0xf]
  %v486 = vld [vmem:[%s1 + $0x708] sm:$0xf]
  %v487 = vld [vmem:[%s1 + $0x70c] sm:$0xf]
  %v488 = vld [vmem:[%s1 + $0x710] sm:$0xf]
  %v489 = vld [vmem:[%s1 + $0x714] sm:$0xf]
  %v490 = vld [vmem:[%s1 + $0x718] sm:$0xf]
  %v491 = vld [vmem:[%s1 + $0x71c] sm:$0xf]
  %v492 = vld [vmem:[%s1 + $0x720] sm:$0xf]
  %v493 = vld [vmem:[%s1 + $0x724] sm:$0xf]
  %v494 = vld [vmem:[%s1 + $0x728] sm:$0xf]
  %v495 = vld [vmem:[%s1 + $0x72c] sm:$0xf]
  %v496 = vld [vmem:[%s1 + $0x730] sm:$0xf]
  %v497 = vld [vmem:[%s1 + $0x734] sm:$0xf]
  %v498 = vld [vmem:[%s1 + $0x738] sm:$0xf]
  %v499 = vld [vmem:[%s1 + $0x73c] sm:$0xf]
  %v500 = vld [vmem:[%s1 + $0x740] sm:$0xf]
  %v501 = vld [vmem:[%s1 + $0x744] sm:$0xf]
  %v502 = vld [vmem:[%s1 + $0x748] sm:$0xf]
  %v503 = vld [vmem:[%s1 + $0x74c] sm:$0xf]
  %v504 = vld [vmem:[%s1 + $0x750] sm:$0xf]
  %v505 = vld [vmem:[%s1 + $0x754] sm:$0xf]
  %v506 = vld [vmem:[%s1 + $0x758] sm:$0xf]
  %v507 = vld [vmem:[%s1 + $0x75c] sm:$0xf]
  %v508 = vld [vmem:[%s1 + $0x760] sm:$0xf]
  %v509 = vld [vmem:[%s1 + $0x764] sm:$0xf]
  %v510 = vld [vmem:[%s1 + $0x768] sm:$0xf]
  %v511 = vld [vmem:[%s1 + $0x76c] sm:$0xf]
  %v512 = vld [vmem:[%s1 + $0x770] sm:$0xf]
  %v513 = vld [vmem:[%s1 + $0x774] sm:$0xf]
  %v514 = vld [vmem:[%s1 + $0x778] sm:$0xf]
  %v515 = vld [vmem:[%s1 + $0x77c] sm:$0xf]
  %v516 = vld [vmem:[%s1 + $0x780] sm:$0xf]
  %v517 = vld [vmem:[%s1 + $0x784] sm:$0xf]
  %v518 = vld [vmem:[%s1 + $0x788] sm:$0xf]
  %v519 = vld [vmem:[%s1 + $0x78c] sm:$0xf]
  %v520 = vld [vmem:[%s1 + $0x790] sm:$0xf]
  %v521 = vld [vmem:[%s1 + $0x794] sm:$0xf]
  %v522 = vld [vmem:[%s1 + $0x798] sm:$0xf]
  %v523 = vld [vmem:[%s1 + $0x79c] sm:$0xf]
  %v524 = vld [vmem:[%s1 + $0x7a0] sm:$0xf]
  %v525 = vld [vmem:[%s1 + $0x7a4] sm:$0xf]
  %v526 = vld [vmem:[%s1 + $0x7a8] sm:$0xf]
  %v527 = vld [vmem:[%s1 + $0x7ac] sm:$0xf]
  %v528 = vld [vmem:[%s1 + $0x7b0] sm:$0xf]
  %v529 = vld [vmem:[%s1 + $0x7b4] sm:$0xf]
  %v530 = vld [vmem:[%s1 + $0x7b8] sm:$0xf]
  %v531 = vld [vmem:[%s1 + $0x7bc] sm:$0xf]
  %v532 = vld [vmem:[%s1 + $0x7c0] sm:$0xf]
  %v533 = vld [vmem:[%s1 + $0x7c4] sm:$0xf]
  %v534 = vld [vmem:[%s1 + $0x7c8] sm:$0xf]
  %v535 = vld [vmem:[%s1 + $0x7cc] sm:$0xf]
  %v536 = vld [vmem:[%s1 + $0x7d0] sm:$0xf]
  %v537 = vld [vmem:[%s1 + $0x7d4] sm:$0xf]
  %v538 = vld [vmem:[%s1 + $0x7d8] sm:$0xf]
  %v539 = vld [vmem:[%s1 + $0x7dc] sm:$0xf]
  %v540 = vld [vmem:[%s1 + $0x7e0] sm:$0xf]
  %v541 = vld [vmem:[%s1 + $0x7e4] sm:$0xf]
  %v542 = vld [vmem:[%s1 + $0x7e8] sm:$0xf]
  %v543 = vld [vmem:[%s1 + $0x7ec] sm:$0xf]
  %v544 = vld [vmem:[%s1 + $0x7f0] sm:$0xf]
  %v545 = vld [vmem:[%s1 + $0x7f4] sm:$0xf]
  %v546 = vld [vmem:[%s1 + $0x7f8] sm:$0xf]
  %v547 = vld [vmem:[%s1 + $0x7fc] sm:$0xf]
  %v548 = vld [vmem:[%s1 + $0x800] sm:$0xf]
  %v549 = vld [vmem:[%s1 + $0x804] sm:$0xf]
  %v550 = vld [vmem:[%s1 + $0x808] sm:$0xf]
  %v551 = vld [vmem:[%s1 + $0x80c] sm:$0xf]
  %v552 = vld [vmem:[%s1 + $0x810] sm:$0xf]
  %v553 = vld [vmem:[%s1 + $0x814] sm:$0xf]
  %v554 = vld [vmem:[%s1 + $0x818] sm:$0xf]
  %v555 = vld [vmem:[%s1 + $0x81c] sm:$0xf]
  %v556 = vld [vmem:[%s1 + $0x820] sm:$0xf]
  %v557 = vld [vmem:[%s1 + $0x824] sm:$0xf]
  %v558 = vld [vmem:[%s1 + $0x828] sm:$0xf]
  %v559 = vld [vmem:[%s1 + $0x82c] sm:$0xf]
  %v560 = vld [vmem:[%s1 + $0x830] sm:$0xf]
  %v561 = vld [vmem:[%s1 + $0x834] sm:$0xf]
  %v562 = vld [vmem:[%s1 + $0x838] sm:$0xf]
  %v563 = vld [vmem:[%s1 + $0x83c] sm:$0xf]
  %v564 = vld [vmem:[%s1 + $0x840] sm:$0xf]
  %v565 = vld [vmem:[%s1 + $0x844] sm:$0xf]
  %v566 = vld [vmem:[%s1 + $0x848] sm:$0xf]
  %v567 = vld [vmem:[%s1 + $0x84c] sm:$0xf]
  %v568 = vld [vmem:[%s1 + $0x850] sm:$0xf]
  %v569 = vld [vmem:[%s1 + $0x854] sm:$0xf]
  %v570 = vld [vmem:[%s1 + $0x858] sm:$0xf]
  %v571 = vld [vmem:[%s1 + $0x85c] sm:$0xf]
  %v572 = vld [vmem:[%s1 + $0x860] sm:$0xf]
  %v573 = vld [vmem:[%s1 + $0x864] sm:$0xf]
  %v574 = vld [vmem:[%s1 + $0x868] sm:$0xf]
  %v575 = vld [vmem:[%s1 + $0x86c] sm:$0xf]
  %v576 = vld [vmem:[%s1 + $0x870] sm:$0xf]
  %v577 = vld [vmem:[%s1 + $0x874] sm:$0xf]
  %v578 = vld [vmem:[%s1 + $0x878] sm:$0xf]
  %v579 = vld [vmem:[%s1 + $0x87c] sm:$0xf]
  %v580 = vld [vmem:[%s1 + $0x880] sm:$0xf]
  %v581 = vld [vmem:[%s1 + $0x884] sm:$0xf]
  %v582 = vld [vmem:[%s1 + $0x888] sm:$0xf]
  %v583 = vld [vmem:[%s1 + $0x88c] sm:$0xf]
  %v584 = vld [vmem:[%s1 + $0x890] sm:$0xf]
  %v585 = vld [vmem:[%s1 + $0x894] sm:$0xf]
  %v586 = vld [vmem:[%s1 + $0x898] sm:$0xf]
  %v587 = vld [vmem:[%s1 + $0x89c] sm:$0xf]
  %v588 = vld [vmem:[%s1 + $0x8a0] sm:$0xf]
  %v589 = vld [vmem:[%s1 + $0x8a4] sm:$0xf]
  %v590 = vld [vmem:[%s1 + $0x8a8] sm:$0xf]
  %v591 = vld [vmem:[%s1 + $0x8ac] sm:$0xf]
  %v592 = vld [vmem:[%s1 + $0x8b0] sm:$0xf]
  %v593 = vld [vmem:[%s1 + $0x8b4] sm:$0xf]
  %v594 = vld [vmem:[%s1 + $0x8b8] sm:$0xf]
  %v595 = vld [vmem:[%s1 + $0x8bc] sm:$0xf]
  %v596 = vld [vmem:[%s1 + $0x8c0] sm:$0xf]
  %v597 = vld [vmem:[%s1 + $0x8c4] sm:$0xf]
  %v598 = vld [vmem:[%s1 + $0x8c8] sm:$0xf]
  %v599 = vld [vmem:[%s1 + $0x8cc] sm:$0xf]
  %v600 = vld [vmem:[%s1 + $0x8d0] sm:$0xf]
  %v601 = vld [vmem:[%s1 + $0x8d4] sm:$0xf]
  %v602 = vld [vmem:[%s1 + $0x8d8] sm:$0xf]
  %v603 = vld [vmem:[%s1 + $0x8dc] sm:$0xf]
  %v604 = vld [vmem:[%s1 + $0x8e0] sm:$0xf]
  %v605 = vld [vmem:[%s1 + $0x8e4] sm:$0xf]
  %v606 = vld [vmem:[%s1 + $0x8e8] sm:$0xf]
  %v607 = vld [vmem:[%s1 + $0x8ec] sm:$0xf]
  %v608 = vld [vmem:[%s1 + $0x8f0] sm:$0xf]
  %v609 = vld [vmem:[%s1 + $0x8f4] sm:$0xf]
  %v610 = vld [vmem:[%s1 + $0x8f8] sm:$0xf]
  %v611 = vld [vmem:[%s1 + $0x8fc] sm:$0xf]
  %v612 = vld [vmem:[%s1 + $0x900] sm:$0xf]
  %v613 = vld [vmem:[%s1 + $0x904] sm:$0xf]
  %v614 = vld [vmem:[%s1 + $0x908] sm:$0xf]
  %v615 = vld [vmem:[%s1 + $0x90c] sm:$0xf]
  %v616 = vld [vmem:[%s1 + $0x910] sm:$0xf]
  %v617 = vld [vmem:[%s1 + $0x914] sm:$0xf]
  %v618 = vld [vmem:[%s1 + $0x918] sm:$0xf]
  %v619 = vld [vmem:[%s1 + $0x91c] sm:$0xf]
  %v620 = vld [vmem:[%s1 + $0x920] sm:$0xf]
  %v621 = vld [vmem:[%s1 + $0x924] sm:$0xf]
  %v622 = vld [vmem:[%s1 + $0x928] sm:$0xf]
  %v623 = vld [vmem:[%s1 + $0x92c] sm:$0xf]
  %v624 = vld [vmem:[%s1 + $0x930] sm:$0xf]
  %v625 = vld [vmem:[%s1 + $0x934] sm:$0xf]
  %v626 = vld [vmem:[%s1 + $0x938] sm:$0xf]
  %v627 = vld [vmem:[%s1 + $0x93c] sm:$0xf]
  %v628 = vld [vmem:[%s1 + $0x940] sm:$0xf]
  %v629 = vld [vmem:[%s1 + $0x944] sm:$0xf]
  %v630 = vld [vmem:[%s1 + $0x948] sm:$0xf]
  %v631 = vld [vmem:[%s1 + $0x94c] sm:$0xf]
  %v632 = vld [vmem:[%s1 + $0x950] sm:$0xf]
  %v633 = vld [vmem:[%s1 + $0x954] sm:$0xf]
  %v634 = vld [vmem:[%s1 + $0x958] sm:$0xf]
  %v635 = vld [vmem:[%s1 + $0x95c] sm:$0xf]
  %v636 = vld [vmem:[%s1 + $0x960] sm:$0xf]
  %v637 = vld [vmem:[%s1 + $0x964] sm:$0xf]
  %v638 = vld [vmem:[%s1 + $0x968] sm:$0xf]
  %v639 = vld [vmem:[%s1 + $0x96c] sm:$0xf]
  %v640 = vld [vmem:[%s1 + $0x970] sm:$0xf]
  %v641 = vld [vmem:[%s1 + $0x974] sm:$0xf]
  %v642 = vld [vmem:[%s1 + $0x978] sm:$0xf]
  %v643 = vld [vmem:[%s1 + $0x97c] sm:$0xf]
  %v644 = vld [vmem:[%s1 + $0x980] sm:$0xf]
  %v645 = vld [vmem:[%s1 + $0x984] sm:$0xf]
  %v646 = vld [vmem:[%s1 + $0x988] sm:$0xf]
  %v647 = vld [vmem:[%s1 + $0x98c] sm:$0xf]
  %v648 = vld [vmem:[%s1 + $0x990] sm:$0xf]
  %v649 = vld [vmem:[%s1 + $0x994] sm:$0xf]
  %v650 = vld [vmem:[%s1 + $0x998] sm:$0xf]
  %v651 = vld [vmem:[%s1 + $0x99c] sm:$0xf]
  %v652 = vld [vmem:[%s1 + $0x9a0] sm:$0xf]
  %v653 = vld [vmem:[%s1 + $0x9a4] sm:$0xf]
  %v654 = vld [vmem:[%s1 + $0x9a8] sm:$0xf]
  %v655 = vld [vmem:[%s1 + $0x9ac] sm:$0xf]
  %v656 = vld [vmem:[%s1 + $0x9b0] sm:$0xf]
  %v657 = vld [vmem:[%s1 + $0x9b4] sm:$0xf]
  %v658 = vld [vmem:[%s1 + $0x9b8] sm:$0xf]
  %v659 = vld [vmem:[%s1 + $0x9bc] sm:$0xf]
  %v660 = vld [vmem:[%s1 + $0x9c0] sm:$0xf]
  %v661 = vld [vmem:[%s1 + $0x9c4] sm:$0xf]
  %v662 = vld [vmem:[%s1 + $0x9c8] sm:$0xf]
  %v663 = vld [vmem:[%s1 + $0x9cc] sm:$0xf]
  %v664 = vld [vmem:[%s1 + $0x9d0] sm:$0xf]
  %v665 = vld [vmem:[%s1 + $0x9d4] sm:$0xf]
  %v666 = vld [vmem:[%s1 + $0x9d8] sm:$0xf]
  %v667 = vld [vmem:[%s1 + $0x9dc] sm:$0xf]
  %v668 = vld [vmem:[%s1 + $0x9e0] sm:$0xf]
  %v669 = vld [vmem:[%s1 + $0x9e4] sm:$0xf]
  %v670 = vld [vmem:[%s1 + $0x9e8] sm:$0xf]
  %v671 = vld [vmem:[%s1 + $0x9ec] sm:$0xf]
  %v672 = vld [vmem:[%s1 + $0x9f0] sm:$0xf]
  %v673 = vld [vmem:[%s1 + $0x9f4] sm:$0xf]
  %v674 = vld [vmem:[%s1 + $0x9f8] sm:$0xf]
  %v675 = vld [vmem:[%s1 + $0x9fc] sm:$0xf]
  %v676 = vld [vmem:[%s1 + $0xa00] sm:$0xf]
  %v677 = vld [vmem:[%s1 + $0xa04] sm:$0xf]
  %v678 = vld [vmem:[%s1 + $0xa08] sm:$0xf]
  %v679 = vld [vmem:[%s1 + $0xa0c] sm:$0xf]
  %v680 = vld [vmem:[%s1 + $0xa10] sm:$0xf]
  %v681 = vld [vmem:[%s1 + $0xa14] sm:$0xf]
  %v682 = vld [vmem:[%s1 + $0xa18] sm:$0xf]
  %v683 = vld [vmem:[%s1 + $0xa1c] sm:$0xf]
  %v684 = vld [vmem:[%s1 + $0xa20] sm:$0xf]
  %v685 = vld [vmem:[%s1 + $0xa24] sm:$0xf]
  %v686 = vld [vmem:[%s1 + $0xa28] sm:$0xf]
  %v687 = vld [vmem:[%s1 + $0xa2c] sm:$0xf]
  %v688 = vld [vmem:[%s1 + $0xa30] sm:$0xf]
  %v689 = vld [vmem:[%s1 + $0xa34] sm:$0xf]
  %v690 = vld [vmem:[%s1 + $0xa38] sm:$0xf]
  %v691 = vld [vmem:[%s1 + $0xa3c] sm:$0xf]
  %v692 = vld [vmem:[%s1 + $0xa40] sm:$0xf]
  %v693 = vld [vmem:[%s1 + $0xa44] sm:$0xf]
  %v694 = vld [vmem:[%s1 + $0xa48] sm:$0xf]
  %v695 = vld [vmem:[%s1 + $0xa4c] sm:$0xf]
  %v696 = vld [vmem:[%s1 + $0xa50] sm:$0xf]
  %v697 = vld [vmem:[%s1 + $0xa54] sm:$0xf]
  %v698 = vld [vmem:[%s1 + $0xa58] sm:$0xf]
  %v699 = vld [vmem:[%s1 + $0xa5c] sm:$0xf]
  %v700 = vld [vmem:[%s1 + $0xa60] sm:$0xf]
  %v701 = vld [vmem:[%s1 + $0xa64] sm:$0xf]
  %v702 = vld [vmem:[%s1 + $0xa68] sm:$0xf]
  %v703 = vld [vmem:[%s1 + $0xa6c] sm:$0xf]
  %v704 = vld [vmem:[%s1 + $0xa70] sm:$0xf]
  %v705 = vld [vmem:[%s1 + $0xa74] sm:$0xf]
  %v706 = vld [vmem:[%s1 + $0xa78] sm:$0xf]
  %v707 = vld [vmem:[%s1 + $0xa7c] sm:$0xf]
  %v708 = vld [vmem:[%s1 + $0xa80] sm:$0xf]
  %v709 = vld [vmem:[%s1 + $0xa84] sm:$0xf]
  %v710 = vld [vmem:[%s1 + $0xa88] sm:$0xf]
  %v711 = vld [vmem:[%s1 + $0xa8c] sm:$0xf]
  %v712 = vld [vmem:[%s1 + $0xa90] sm:$0xf]
  %v713 = vld [vmem:[%s1 + $0xa94] sm:$0xf]
  %v714 = vld [vmem:[%s1 + $0xa98] sm:$0xf]
  %v715 = vld [vmem:[%s1 + $0xa9c] sm:$0xf]
  %v716 = vld [vmem:[%s1 + $0xaa0] sm:$0xf]
  %v717 = vld [vmem:[%s1 + $0xaa4] sm:$0xf]
  %v718 = vld [vmem:[%s1 + $0xaa8] sm:$0xf]
  %v719 = vld [vmem:[%s1 + $0xaac] sm:$0xf]
  %v720 = vld [vmem:[%s1 + $0xab0] sm:$0xf]
  %v721 = vld [vmem:[%s1 + $0xab4] sm:$0xf]
  %v722 = vld [vmem:[%s1 + $0xab8] sm:$0xf]
  %v723 = vld [vmem:[%s1 + $0xabc] sm:$0xf]
  %v724 = vld [vmem:[%s1 + $0xac0] sm:$0xf]
  %v725 = vld [vmem:[%s1 + $0xac4] sm:$0xf]
  %v726 = vld [vmem:[%s1 + $0xac8] sm:$0xf]
  %v727 = vld [vmem:[%s1 + $0xacc] sm:$0xf]
  %v728 = vld [vmem:[%s1 + $0xad0] sm:$0xf]
  %v729 = vld [vmem:[%s1 + $0xad4] sm:$0xf]
  %v730 = vld [vmem:[%s1 + $0xad8] sm:$0xf]
  %v731 = vld [vmem:[%s1 + $0xadc] sm:$0xf]
  %v732 = vld [vmem:[%s1 + $0xae0] sm:$0xf]
  %v733 = vld [vmem:[%s1 + $0xae4] sm:$0xf]
  %v734 = vld [vmem:[%s1 + $0xae8] sm:$0xf]
  %v735 = vld [vmem:[%s1 + $0xaec] sm:$0xf]
  %v736 = vld [vmem:[%s1 + $0xaf0] sm:$0xf]
  %v737 = vld [vmem:[%s1 + $0xaf4] sm:$0xf]
  %v738 = vld [vmem:[%s1 + $0xaf8] sm:$0xf]
  %v739 = vld [vmem:[%s1 + $0xafc] sm:$0xf]
  %v740 = vld [vmem:[%s1 + $0xb00] sm:$0xf]
  %v741 = vld [vmem:[%s1 + $0xb04] sm:$0xf]
  %v742 = vld [vmem:[%s1 + $0xb08] sm:$0xf]
  %v743 = vld [vmem:[%s1 + $0xb0c] sm:$0xf]
  %v744 = vld [vmem:[%s1 + $0xb10] sm:$0xf]
  %v745 = vld [vmem:[%s1 + $0xb14] sm:$0xf]
  %v746 = vld [vmem:[%s1 + $0xb18] sm:$0xf]
  %v747 = vld [vmem:[%s1 + $0xb1c] sm:$0xf]
  %v748 = vld [vmem:[%s1 + $0xb20] sm:$0xf]
  %v749 = vld [vmem:[%s1 + $0xb24] sm:$0xf]
  %v750 = vld [vmem:[%s1 + $0xb28] sm:$0xf]
  %v751 = vld [vmem:[%s1 + $0xb2c] sm:$0xf]
  %v752 = vld [vmem:[%s1 + $0xb30] sm:$0xf]
  %v753 = vld [vmem:[%s1 + $0xb34] sm:$0xf]
  %v754 = vld [vmem:[%s1 + $0xb38] sm:$0xf]
  %v755 = vld [vmem:[%s1 + $0xb3c] sm:$0xf]
  %v756 = vld [vmem:[%s1 + $0xb40] sm:$0xf]
  %v757 = vld [vmem:[%s1 + $0xb44] sm:$0xf]
  %v758 = vld [vmem:[%s1 + $0xb48] sm:$0xf]
  %v759 = vld [vmem:[%s1 + $0xb4c] sm:$0xf]
  %v760 = vld [vmem:[%s1 + $0xb50] sm:$0xf]
  %v761 = vld [vmem:[%s1 + $0xb54] sm:$0xf]
  %v762 = vld [vmem:[%s1 + $0xb58] sm:$0xf]
  %v763 = vld [vmem:[%s1 + $0xb5c] sm:$0xf]
  %v764 = vld [vmem:[%s1 + $0xb60] sm:$0xf]
  %v765 = vld [vmem:[%s1 + $0xb64] sm:$0xf]
  %v766 = vld [vmem:[%s1 + $0xb68] sm:$0xf]
  %v767 = vld [vmem:[%s1 + $0xb6c] sm:$0xf]
  %v768 = vld [vmem:[%s1 + $0xb70] sm:$0xf]
  %v769 = vld [vmem:[%s1 + $0xb74] sm:$0xf]
  %v770 = vld [vmem:[%s1 + $0xb78] sm:$0xf]
  %v771 = vld [vmem:[%s1 + $0xb7c] sm:$0xf]
  %v772 = vld [vmem:[%s1 + $0xb80] sm:$0xf]
  %v773 = vld [vmem:[%s1 + $0xb84] sm:$0xf]
  %v774 = vld [vmem:[%s1 + $0xb88] sm:$0xf]
  %v775 = vld [vmem:[%s1 + $0xb8c] sm:$0xf]
  %v776 = vld [vmem:[%s1 + $0xb90] sm:$0xf]
  %v777 = vld [vmem:[%s1 + $0xb94] sm:$0xf]
  %v778 = vld [vmem:[%s1 + $0xb98] sm:$0xf]
  %v779 = vld [vmem:[%s1 + $0xb9c] sm:$0xf]
  %v780 = vld [vmem:[%s1 + $0xba0] sm:$0xf]
  %v781 = vld [vmem:[%s1 + $0xba4] sm:$0xf]
  %v782 = vld [vmem:[%s1 + $0xba8] sm:$0xf]
  %v783 = vld [vmem:[%s1 + $0xbac] sm:$0xf]
  %v784 = vld [vmem:[%s1 + $0xbb0] sm:$0xf]
  %v785 = vld [vmem:[%s1 + $0xbb4] sm:$0xf]
  %v786 = vld [vmem:[%s1 + $0xbb8] sm:$0xf]
  %v787 = vld [vmem:[%s1 + $0xbbc] sm:$0xf]
  %v788 = vld [vmem:[%s1 + $0xbc0] sm:$0xf]
  %v789 = vld [vmem:[%s1 + $0xbc4] sm:$0xf]
  %v790 = vld [vmem:[%s1 + $0xbc8] sm:$0xf]
  %v791 = vld [vmem:[%s1 + $0xbcc] sm:$0xf]
  %v792 = vld [vmem:[%s1 + $0xbd0] sm:$0xf]
  %v793 = vld [vmem:[%s1 + $0xbd4] sm:$0xf]
  %v794 = vld [vmem:[%s1 + $0xbd8] sm:$0xf]
  %v795 = vld [vmem:[%s1 + $0xbdc] sm:$0xf]
  %v796 = vld [vmem:[%s1 + $0xbe0] sm:$0xf]
  %v797 = vld [vmem:[%s1 + $0xbe4] sm:$0xf]
  %v798 = vld [vmem:[%s1 + $0xbe8] sm:$0xf]
  %v799 = vld [vmem:[%s1 + $0xbec] sm:$0xf]
  %v800 = vld [vmem:[%s1 + $0xbf0] sm:$0xf]
  %v801 = vld [vmem:[%s1 + $0xbf4] sm:$0xf]
  %v802 = vld [vmem:[%s1 + $0xbf8] sm:$0xf]
  %v803 = vld [vmem:[%s1 + $0xbfc] sm:$0xf]
  %v804 = vld [vmem:[%s1 + $0xc00] sm:$0xf]
  %v805 = vld [vmem:[%s1 + $0xc04] sm:$0xf]
  %v806 = vld [vmem:[%s1 + $0xc08] sm:$0xf]
  %v807 = vld [vmem:[%s1 + $0xc0c] sm:$0xf]
  %v808 = vld [vmem:[%s1 + $0xc10] sm:$0xf]
  %v809 = vld [vmem:[%s1 + $0xc14] sm:$0xf]
  %v810 = vld [vmem:[%s1 + $0xc18] sm:$0xf]
  %v811 = vld [vmem:[%s1 + $0xc1c] sm:$0xf]
  %v812 = vld [vmem:[%s1 + $0xc20] sm:$0xf]
  %v813 = vld [vmem:[%s1 + $0xc24] sm:$0xf]
  %v814 = vld [vmem:[%s1 + $0xc28] sm:$0xf]
  %v815 = vld [vmem:[%s1 + $0xc2c] sm:$0xf]
  %v816 = vld [vmem:[%s1 + $0xc30] sm:$0xf]
  %v817 = vld [vmem:[%s1 + $0xc34] sm:$0xf]
  %v818 = vld [vmem:[%s1 + $0xc38] sm:$0xf]
  %v819 = vld [vmem:[%s1 + $0xc3c] sm:$0xf]
  %v820 = vld [vmem:[%s1 + $0xc40] sm:$0xf]
  %v821 = vld [vmem:[%s1 + $0xc44] sm:$0xf]
  %v822 = vld [vmem:[%s1 + $0xc48] sm:$0xf]
  %v823 = vld [vmem:[%s1 + $0xc4c] sm:$0xf]
  %v824 = vld [vmem:[%s1 + $0xc50] sm:$0xf]
  %v825 = vld [vmem:[%s1 + $0xc54] sm:$0xf]
  %v826 = vld [vmem:[%s1 + $0xc58] sm:$0xf]
  %v827 = vld [vmem:[%s1 + $0xc5c] sm:$0xf]
  %v828 = vld [vmem:[%s1 + $0xc60] sm:$0xf]
  %v829 = vld [vmem:[%s1 + $0xc64] sm:$0xf]
  %v830 = vld [vmem:[%s1 + $0xc68] sm:$0xf]
  %v831 = vld [vmem:[%s1 + $0xc6c] sm:$0xf]
  %v832 = vld [vmem:[%s1 + $0xc70] sm:$0xf]
  %v833 = vld [vmem:[%s1 + $0xc74] sm:$0xf]
  %v834 = vld [vmem:[%s1 + $0xc78] sm:$0xf]
  %v835 = vld [vmem:[%s1 + $0xc7c] sm:$0xf]
  %v836 = vld [vmem:[%s2] sm:$0x1]
  %v838 = vlaneseq
  %v839 = vshrl.u32 %v838, 7
  %v840 = vsub.s32 0, %v839
  %v841 = vrot.slane %v836, %v840
  %v850 = vcombine.high %v29, %v29
  %v852 = vunpack.c.l.s4 1966171168
  %v853 = vunpack.c.0.s8 %v852
  %v854 = vlaneseq
  %v855 = vshrl.u32 %v854, 7
  %v856 = vsub.s32 %v853, %v855
  %v857 = vrot.slane %v29, %v856
  %v859 = vunpack.c.l.s4 1966171168
  %v860 = vunpack.c.0.s8 %v859
  %v861 = vlaneseq
  %v862 = vshrl.u32 %v861, 7
  %v863 = vsub.s32 %v860, %v862
  %v864 = vrot.slane %v850, %v863
  %v865 = vcombine.high %v857, %v857
  %v866 = vcombine.high %v864, %v864
  %v868 = vunpack.c.l.s4 1966171168
  %v869 = vunpack.c.0.s8 %v868
  %v870 = vlaneseq
  %v871 = vshrl.u32 %v870, 7
  %v872 = vsub.s32 %v869, %v871
  %v873 = vrot.slane %v857, %v872
  %v875 = vunpack.c.l.s4 1966171168
  %v876 = vunpack.c.0.s8 %v875
  %v877 = vlaneseq
  %v878 = vshrl.u32 %v877, 7
  %v879 = vsub.s32 %v876, %v878
  %v880 = vrot.slane %v864, %v879
  %v882 = vunpack.c.l.s4 1966171168
  %v883 = vunpack.c.0.s8 %v882
  %v884 = vlaneseq
  %v885 = vshrl.u32 %v884, 7
  %v886 = vsub.s32 %v883, %v885
  %v887 = vrot.slane %v865, %v886
  %v889 = vunpack.c.l.s4 1966171168
  %v890 = vunpack.c.0.s8 %v889
  %v891 = vlaneseq
  %v892 = vshrl.u32 %v891, 7
  %v893 = vsub.s32 %v890, %v892
  %v894 = vrot.slane %v866, %v893
  %v895 = vcombine.high %v873, %v873
  %v896 = vcombine.high %v880, %v880
  %v897 = vcombine.high %v887, %v887
  %v898 = vcombine.high %v894, %v894
  %v899 = vcombine.high %v30, %v30
  %v901 = vunpack.c.l.s4 1966171168
  %v902 = vunpack.c.0.s8 %v901
  %v903 = vlaneseq
  %v904 = vshrl.u32 %v903, 7
  %v905 = vsub.s32 %v902, %v904
  %v906 = vrot.slane %v30, %v905
  %v908 = vunpack.c.l.s4 1966171168
  %v909 = vunpack.c.0.s8 %v908
  %v910 = vlaneseq
  %v911 = vshrl.u32 %v910, 7
  %v912 = vsub.s32 %v909, %v911
  %v913 = vrot.slane %v899, %v912
  %v914 = vcombine.high %v906, %v906
  %v915 = vcombine.high %v913, %v913
  %v917 = vunpack.c.l.s4 1966171168
  %v918 = vunpack.c.0.s8 %v917
  %v919 = vlaneseq
  %v920 = vshrl.u32 %v919, 7
  %v921 = vsub.s32 %v918, %v920
  %v922 = vrot.slane %v906, %v921
  %v924 = vunpack.c.l.s4 1966171168
  %v925 = vunpack.c.0.s8 %v924
  %v926 = vlaneseq
  %v927 = vshrl.u32 %v926, 7
  %v928 = vsub.s32 %v925, %v927
  %v929 = vrot.slane %v913, %v928
  %v931 = vunpack.c.l.s4 1966171168
  %v932 = vunpack.c.0.s8 %v931
  %v933 = vlaneseq
  %v934 = vshrl.u32 %v933, 7
  %v935 = vsub.s32 %v932, %v934
  %v936 = vrot.slane %v914, %v935
  %v938 = vunpack.c.l.s4 1966171168
  %v939 = vunpack.c.0.s8 %v938
  %v940 = vlaneseq
  %v941 = vshrl.u32 %v940, 7
  %v942 = vsub.s32 %v939, %v941
  %v943 = vrot.slane %v915, %v942
  %v944 = vcombine.high %v922, %v922
  %v945 = vcombine.high %v929, %v929
  %v946 = vcombine.high %v936, %v936
  %v947 = vcombine.high %v943, %v943
  %v948 = vcombine.high %v31, %v31
  %v950 = vunpack.c.l.s4 1966171168
  %v951 = vunpack.c.0.s8 %v950
  %v952 = vlaneseq
  %v953 = vshrl.u32 %v952, 7
  %v954 = vsub.s32 %v951, %v953
  %v955 = vrot.slane %v31, %v954
  %v957 = vunpack.c.l.s4 1966171168
  %v958 = vunpack.c.0.s8 %v957
  %v959 = vlaneseq
  %v960 = vshrl.u32 %v959, 7
  %v961 = vsub.s32 %v958, %v960
  %v962 = vrot.slane %v948, %v961
  %v963 = vcombine.high %v955, %v955
  %v964 = vcombine.high %v962, %v962
  %v966 = vunpack.c.l.s4 1966171168
  %v967 = vunpack.c.0.s8 %v966
  %v968 = vlaneseq
  %v969 = vshrl.u32 %v968, 7
  %v970 = vsub.s32 %v967, %v969
  %v971 = vrot.slane %v955, %v970
  %v973 = vunpack.c.l.s4 1966171168
  %v974 = vunpack.c.0.s8 %v973
  %v975 = vlaneseq
  %v976 = vshrl.u32 %v975, 7
  %v977 = vsub.s32 %v974, %v976
  %v978 = vrot.slane %v962, %v977
  %v980 = vunpack.c.l.s4 1966171168
  %v981 = vunpack.c.0.s8 %v980
  %v982 = vlaneseq
  %v983 = vshrl.u32 %v982, 7
  %v984 = vsub.s32 %v981, %v983
  %v985 = vrot.slane %v963, %v984
  %v987 = vunpack.c.l.s4 1966171168
  %v988 = vunpack.c.0.s8 %v987
  %v989 = vlaneseq
  %v990 = vshrl.u32 %v989, 7
  %v991 = vsub.s32 %v988, %v990
  %v992 = vrot.slane %v964, %v991
  %v993 = vcombine.high %v971, %v971
  %v994 = vcombine.high %v978, %v978
  %v995 = vcombine.high %v985, %v985
  %v996 = vcombine.high %v992, %v992
  %v997 = vcombine.high %v32, %v32
  %v999 = vunpack.c.l.s4 1966171168
  %v1000 = vunpack.c.0.s8 %v999
  %v1001 = vlaneseq
  %v1002 = vshrl.u32 %v1001, 7
  %v1003 = vsub.s32 %v1000, %v1002
  %v1004 = vrot.slane %v32, %v1003
  %v1006 = vunpack.c.l.s4 1966171168
  %v1007 = vunpack.c.0.s8 %v1006
  %v1008 = vlaneseq
  %v1009 = vshrl.u32 %v1008, 7
  %v1010 = vsub.s32 %v1007, %v1009
  %v1011 = vrot.slane %v997, %v1010
  %v1012 = vcombine.high %v1004, %v1004
  %v1013 = vcombine.high %v1011, %v1011
  %v1015 = vunpack.c.l.s4 1966171168
  %v1016 = vunpack.c.0.s8 %v1015
  %v1017 = vlaneseq
  %v1018 = vshrl.u32 %v1017, 7
  %v1019 = vsub.s32 %v1016, %v1018
  %v1020 = vrot.slane %v1004, %v1019
  %v1022 = vunpack.c.l.s4 1966171168
  %v1023 = vunpack.c.0.s8 %v1022
  %v1024 = vlaneseq
  %v1025 = vshrl.u32 %v1024, 7
  %v1026 = vsub.s32 %v1023, %v1025
  %v1027 = vrot.slane %v1011, %v1026
  %v1029 = vunpack.c.l.s4 1966171168
  %v1030 = vunpack.c.0.s8 %v1029
  %v1031 = vlaneseq
  %v1032 = vshrl.u32 %v1031, 7
  %v1033 = vsub.s32 %v1030, %v1032
  %v1034 = vrot.slane %v1012, %v1033
  %v1036 = vunpack.c.l.s4 1966171168
  %v1037 = vunpack.c.0.s8 %v1036
  %v1038 = vlaneseq
  %v1039 = vshrl.u32 %v1038, 7
  %v1040 = vsub.s32 %v1037, %v1039
  %v1041 = vrot.slane %v1013, %v1040
  %v1042 = vcombine.high %v1020, %v1020
  %v1043 = vcombine.high %v1027, %v1027
  %v1044 = vcombine.high %v1034, %v1034
  %v1045 = vcombine.high %v1041, %v1041
  %v1046 = vcombine.high %v33, %v33
  %v1048 = vunpack.c.l.s4 1966171168
  %v1049 = vunpack.c.0.s8 %v1048
  %v1050 = vlaneseq
  %v1051 = vshrl.u32 %v1050, 7
  %v1052 = vsub.s32 %v1049, %v1051
  %v1053 = vrot.slane %v33, %v1052
  %v1055 = vunpack.c.l.s4 1966171168
  %v1056 = vunpack.c.0.s8 %v1055
  %v1057 = vlaneseq
  %v1058 = vshrl.u32 %v1057, 7
  %v1059 = vsub.s32 %v1056, %v1058
  %v1060 = vrot.slane %v1046, %v1059
  %v1061 = vcombine.high %v1053, %v1053
  %v1062 = vcombine.high %v1060, %v1060
  %v1064 = vunpack.c.l.s4 1966171168
  %v1065 = vunpack.c.0.s8 %v1064
  %v1066 = vlaneseq
  %v1067 = vshrl.u32 %v1066, 7
  %v1068 = vsub.s32 %v1065, %v1067
  %v1069 = vrot.slane %v1053, %v1068
  %v1071 = vunpack.c.l.s4 1966171168
  %v1072 = vunpack.c.0.s8 %v1071
  %v1073 = vlaneseq
  %v1074 = vshrl.u32 %v1073, 7
  %v1075 = vsub.s32 %v1072, %v1074
  %v1076 = vrot.slane %v1060, %v1075
  %v1078 = vunpack.c.l.s4 1966171168
  %v1079 = vunpack.c.0.s8 %v1078
  %v1080 = vlaneseq
  %v1081 = vshrl.u32 %v1080, 7
  %v1082 = vsub.s32 %v1079, %v1081
  %v1083 = vrot.slane %v1061, %v1082
  %v1085 = vunpack.c.l.s4 1966171168
  %v1086 = vunpack.c.0.s8 %v1085
  %v1087 = vlaneseq
  %v1088 = vshrl.u32 %v1087, 7
  %v1089 = vsub.s32 %v1086, %v1088
  %v1090 = vrot.slane %v1062, %v1089
  %v1091 = vcombine.high %v1069, %v1069
  %v1092 = vcombine.high %v1076, %v1076
  %v1093 = vcombine.high %v1083, %v1083
  %v1094 = vcombine.high %v1090, %v1090
  %v1095 = vcombine.high %v34, %v34
  %v1097 = vunpack.c.l.s4 1966171168
  %v1098 = vunpack.c.0.s8 %v1097
  %v1099 = vlaneseq
  %v1100 = vshrl.u32 %v1099, 7
  %v1101 = vsub.s32 %v1098, %v1100
  %v1102 = vrot.slane %v34, %v1101
  %v1104 = vunpack.c.l.s4 1966171168
  %v1105 = vunpack.c.0.s8 %v1104
  %v1106 = vlaneseq
  %v1107 = vshrl.u32 %v1106, 7
  %v1108 = vsub.s32 %v1105, %v1107
  %v1109 = vrot.slane %v1095, %v1108
  %v1110 = vcombine.high %v1102, %v1102
  %v1111 = vcombine.high %v1109, %v1109
  %v1113 = vunpack.c.l.s4 1966171168
  %v1114 = vunpack.c.0.s8 %v1113
  %v1115 = vlaneseq
  %v1116 = vshrl.u32 %v1115, 7
  %v1117 = vsub.s32 %v1114, %v1116
  %v1118 = vrot.slane %v1102, %v1117
  %v1120 = vunpack.c.l.s4 1966171168
  %v1121 = vunpack.c.0.s8 %v1120
  %v1122 = vlaneseq
  %v1123 = vshrl.u32 %v1122, 7
  %v1124 = vsub.s32 %v1121, %v1123
  %v1125 = vrot.slane %v1109, %v1124
  %v1127 = vunpack.c.l.s4 1966171168
  %v1128 = vunpack.c.0.s8 %v1127
  %v1129 = vlaneseq
  %v1130 = vshrl.u32 %v1129, 7
  %v1131 = vsub.s32 %v1128, %v1130
  %v1132 = vrot.slane %v1110, %v1131
  %v1134 = vunpack.c.l.s4 1966171168
  %v1135 = vunpack.c.0.s8 %v1134
  %v1136 = vlaneseq
  %v1137 = vshrl.u32 %v1136, 7
  %v1138 = vsub.s32 %v1135, %v1137
  %v1139 = vrot.slane %v1111, %v1138
  %v1140 = vcombine.high %v1118, %v1118
  %v1141 = vcombine.high %v1125, %v1125
  %v1142 = vcombine.high %v1132, %v1132
  %v1143 = vcombine.high %v1139, %v1139
  %v1145 = vunpack.c.l.s4 1966171168
  %v1146 = vunpack.c.0.s8 %v1145
  %v1147 = vlaneseq
  %v1148 = vshrl.u32 %v1147, 7
  %v1149 = vsub.s32 %v1146, %v1148
  %v1150 = vrot.slane %v35, %v1149
  %v1151 = vcombine.high %v1150, %v1150
  %v1153 = vunpack.c.l.s4 1966171168
  %v1154 = vunpack.c.0.s8 %v1153
  %v1155 = vlaneseq
  %v1156 = vshrl.u32 %v1155, 7
  %v1157 = vsub.s32 %v1154, %v1156
  %v1158 = vrot.slane %v1150, %v1157
  %v1160 = vunpack.c.l.s4 1966171168
  %v1161 = vunpack.c.0.s8 %v1160
  %v1162 = vlaneseq
  %v1163 = vshrl.u32 %v1162, 7
  %v1164 = vsub.s32 %v1161, %v1163
  %v1165 = vrot.slane %v1151, %v1164
  %v2016 = vunpack.c.l.b16 %v36
  %v2017 = vunpack.c.l.b16 %v37
  %v2018 = vunpack.c.l.b16 %v38
  %v2019 = vunpack.c.l.b16 %v39
  %v2020 = vunpack.c.l.b16 %v40
  %v2021 = vunpack.c.l.b16 %v41
  %v2022 = vunpack.c.l.b16 %v42
  %v2023 = vunpack.c.l.b16 %v43
  %v2024 = vunpack.c.l.b16 %v44
  %v2025 = vunpack.c.l.b16 %v45
  %v2026 = vunpack.c.l.b16 %v46
  %v2027 = vunpack.c.l.b16 %v47
  %v2028 = vunpack.c.l.b16 %v48
  %v2029 = vunpack.c.l.b16 %v49
  %v2030 = vunpack.c.l.b16 %v50
  %v2031 = vunpack.c.l.b16 %v51
  %v2032 = vunpack.c.l.b16 %v52
  %v2033 = vunpack.c.l.b16 %v53
  %v2034 = vunpack.c.l.b16 %v54
  %v2035 = vunpack.c.l.b16 %v55
  %v2036 = vunpack.c.l.b16 %v56
  %v2037 = vunpack.c.l.b16 %v57
  %v2038 = vunpack.c.l.b16 %v58
  %v2039 = vunpack.c.l.b16 %v59
  %v2040 = vunpack.c.l.b16 %v60
  %v2041 = vunpack.c.l.b16 %v61
  %v2042 = vunpack.c.l.b16 %v62
  %v2043 = vunpack.c.l.b16 %v63
  %v2044 = vunpack.c.l.b16 %v64
  %v2045 = vunpack.c.l.b16 %v65
  %v2046 = vunpack.c.l.b16 %v66
  %v2047 = vunpack.c.l.b16 %v67
  %v2048 = vunpack.c.l.b16 %v68
  %v2049 = vunpack.c.l.b16 %v69
  %v2050 = vunpack.c.l.b16 %v70
  %v2051 = vunpack.c.l.b16 %v71
  %v2052 = vunpack.c.l.b16 %v72
  %v2053 = vunpack.c.l.b16 %v73
  %v2054 = vunpack.c.l.b16 %v74
  %v2055 = vunpack.c.l.b16 %v75
  %v2056 = vunpack.c.l.b16 %v76
  %v2057 = vunpack.c.l.b16 %v77
  %v2058 = vunpack.c.l.b16 %v78
  %v2059 = vunpack.c.l.b16 %v79
  %v2060 = vunpack.c.l.b16 %v80
  %v2061 = vunpack.c.l.b16 %v81
  %v2062 = vunpack.c.l.b16 %v82
  %v2063 = vunpack.c.l.b16 %v83
  %v2064 = vunpack.c.l.b16 %v84
  %v2065 = vunpack.c.l.b16 %v85
  %v2066 = vunpack.c.l.b16 %v86
  %v2067 = vunpack.c.l.b16 %v87
  %v2068 = vunpack.c.l.b16 %v88
  %v2069 = vunpack.c.l.b16 %v89
  %v2070 = vunpack.c.l.b16 %v90
  %v2071 = vunpack.c.l.b16 %v91
  %v2072 = vunpack.c.l.b16 %v92
  %v2073 = vunpack.c.l.b16 %v93
  %v2074 = vunpack.c.l.b16 %v94
  %v2075 = vunpack.c.l.b16 %v95
  %v2076 = vunpack.c.l.b16 %v96
  %v2077 = vunpack.c.l.b16 %v97
  %v2078 = vunpack.c.l.b16 %v98
  %v2079 = vunpack.c.l.b16 %v99
  %v2080 = vunpack.c.l.b16 %v100
  %v2081 = vunpack.c.l.b16 %v101
  %v2082 = vunpack.c.l.b16 %v102
  %v2083 = vunpack.c.l.b16 %v103
  %v2084 = vunpack.c.l.b16 %v104
  %v2085 = vunpack.c.l.b16 %v105
  %v2086 = vunpack.c.l.b16 %v106
  %v2087 = vunpack.c.l.b16 %v107
  %v2088 = vunpack.c.l.b16 %v108
  %v2089 = vunpack.c.l.b16 %v109
  %v2090 = vunpack.c.l.b16 %v110
  %v2091 = vunpack.c.l.b16 %v111
  %v2092 = vunpack.c.l.b16 %v112
  %v2093 = vunpack.c.l.b16 %v113
  %v2094 = vunpack.c.l.b16 %v114
  %v2095 = vunpack.c.l.b16 %v115
  %v2096 = vunpack.c.l.b16 %v116
  %v2097 = vunpack.c.l.b16 %v117
  %v2098 = vunpack.c.l.b16 %v118
  %v2099 = vunpack.c.l.b16 %v119
  %v2100 = vunpack.c.l.b16 %v120
  %v2101 = vunpack.c.l.b16 %v121
  %v2102 = vunpack.c.l.b16 %v122
  %v2103 = vunpack.c.l.b16 %v123
  %v2104 = vunpack.c.l.b16 %v124
  %v2105 = vunpack.c.l.b16 %v125
  %v2106 = vunpack.c.l.b16 %v126
  %v2107 = vunpack.c.l.b16 %v127
  %v2108 = vunpack.c.l.b16 %v128
  %v2109 = vunpack.c.l.b16 %v129
  %v2110 = vunpack.c.l.b16 %v130
  %v2111 = vunpack.c.l.b16 %v131
  %v2112 = vunpack.c.l.b16 %v132
  %v2113 = vunpack.c.l.b16 %v133
  %v2114 = vunpack.c.l.b16 %v134
  %v2115 = vunpack.c.l.b16 %v135
  %v2116 = vunpack.c.l.b16 %v136
  %v2117 = vunpack.c.l.b16 %v137
  %v2118 = vunpack.c.l.b16 %v138
  %v2119 = vunpack.c.l.b16 %v139
  %v2120 = vunpack.c.l.b16 %v140
  %v2121 = vunpack.c.l.b16 %v141
  %v2122 = vunpack.c.l.b16 %v142
  %v2123 = vunpack.c.l.b16 %v143
  %v2124 = vunpack.c.l.b16 %v144
  %v2125 = vunpack.c.l.b16 %v145
  %v2126 = vunpack.c.l.b16 %v146
  %v2127 = vunpack.c.l.b16 %v147
  %v2128 = vunpack.c.l.b16 %v148
  %v2129 = vunpack.c.l.b16 %v149
  %v2130 = vunpack.c.l.b16 %v150
  %v2131 = vunpack.c.l.b16 %v151
  %v2132 = vunpack.c.l.b16 %v152
  %v2133 = vunpack.c.l.b16 %v153
  %v2134 = vunpack.c.l.b16 %v154
  %v2135 = vunpack.c.l.b16 %v155
  %v2136 = vunpack.c.l.b16 %v156
  %v2137 = vunpack.c.l.b16 %v157
  %v2138 = vunpack.c.l.b16 %v158
  %v2139 = vunpack.c.l.b16 %v159
  %v2140 = vunpack.c.l.b16 %v160
  %v2141 = vunpack.c.l.b16 %v161
  %v2142 = vunpack.c.l.b16 %v162
  %v2143 = vunpack.c.l.b16 %v163
  %v2144 = vunpack.c.l.b16 %v164
  %v2145 = vunpack.c.l.b16 %v165
  %v2146 = vunpack.c.l.b16 %v166
  %v2147 = vunpack.c.l.b16 %v167
  %v2148 = vunpack.c.l.b16 %v168
  %v2149 = vunpack.c.l.b16 %v169
  %v2150 = vunpack.c.l.b16 %v170
  %v2151 = vunpack.c.l.b16 %v171
  %v2152 = vunpack.c.l.b16 %v172
  %v2153 = vunpack.c.l.b16 %v173
  %v2154 = vunpack.c.l.b16 %v174
  %v2155 = vunpack.c.l.b16 %v175
  %v2156 = vunpack.c.l.b16 %v176
  %v2157 = vunpack.c.l.b16 %v177
  %v2158 = vunpack.c.l.b16 %v178
  %v2159 = vunpack.c.l.b16 %v179
  %v2160 = vunpack.c.l.b16 %v180
  %v2161 = vunpack.c.l.b16 %v181
  %v2162 = vunpack.c.l.b16 %v182
  %v2163 = vunpack.c.l.b16 %v183
  %v2164 = vunpack.c.l.b16 %v184
  %v2165 = vunpack.c.l.b16 %v185
  %v2166 = vunpack.c.l.b16 %v186
  %v2167 = vunpack.c.l.b16 %v187
  %v2168 = vunpack.c.l.b16 %v188
  %v2169 = vunpack.c.l.b16 %v189
  %v2170 = vunpack.c.l.b16 %v190
  %v2171 = vunpack.c.l.b16 %v191
  %v2172 = vunpack.c.l.b16 %v192
  %v2173 = vunpack.c.l.b16 %v193
  %v2174 = vunpack.c.l.b16 %v194
  %v2175 = vunpack.c.l.b16 %v195
  %v2176 = vunpack.c.l.b16 %v196
  %v2177 = vunpack.c.l.b16 %v197
  %v2178 = vunpack.c.l.b16 %v198
  %v2179 = vunpack.c.l.b16 %v199
  %v2180 = vunpack.c.l.b16 %v200
  %v2181 = vunpack.c.l.b16 %v201
  %v2182 = vunpack.c.l.b16 %v202
  %v2183 = vunpack.c.l.b16 %v203
  %v2184 = vunpack.c.l.b16 %v204
  %v2185 = vunpack.c.l.b16 %v205
  %v2186 = vunpack.c.l.b16 %v206
  %v2187 = vunpack.c.l.b16 %v207
  %v2188 = vunpack.c.l.b16 %v208
  %v2189 = vunpack.c.l.b16 %v209
  %v2190 = vunpack.c.l.b16 %v210
  %v2191 = vunpack.c.l.b16 %v211
  %v2192 = vunpack.c.l.b16 %v212
  %v2193 = vunpack.c.l.b16 %v213
  %v2194 = vunpack.c.l.b16 %v214
  %v2195 = vunpack.c.l.b16 %v215
  %v2196 = vunpack.c.l.b16 %v216
  %v2197 = vunpack.c.l.b16 %v217
  %v2198 = vunpack.c.l.b16 %v218
  %v2199 = vunpack.c.l.b16 %v219
  %v2200 = vunpack.c.l.b16 %v220
  %v2201 = vunpack.c.l.b16 %v221
  %v2202 = vunpack.c.l.b16 %v222
  %v2203 = vunpack.c.l.b16 %v223
  %v2204 = vunpack.c.l.b16 %v224
  %v2205 = vunpack.c.l.b16 %v225
  %v2206 = vunpack.c.l.b16 %v226
  %v2207 = vunpack.c.l.b16 %v227
  %v2208 = vunpack.c.l.b16 %v228
  %v2209 = vunpack.c.l.b16 %v229
  %v2210 = vunpack.c.l.b16 %v230
  %v2211 = vunpack.c.l.b16 %v231
  %v2212 = vunpack.c.l.b16 %v232
  %v2213 = vunpack.c.l.b16 %v233
  %v2214 = vunpack.c.l.b16 %v234
  %v2215 = vunpack.c.l.b16 %v235
  %v2216 = vunpack.c.l.b16 %v236
  %v2217 = vunpack.c.l.b16 %v237
  %v2218 = vunpack.c.l.b16 %v238
  %v2219 = vunpack.c.l.b16 %v239
  %v2220 = vunpack.c.l.b16 %v240
  %v2221 = vunpack.c.l.b16 %v241
  %v2222 = vunpack.c.l.b16 %v242
  %v2223 = vunpack.c.l.b16 %v243
  %v2224 = vunpack.c.l.b16 %v244
  %v2225 = vunpack.c.l.b16 %v245
  %v2226 = vunpack.c.l.b16 %v246
  %v2227 = vunpack.c.l.b16 %v247
  %v2228 = vunpack.c.l.b16 %v248
  %v2229 = vunpack.c.l.b16 %v249
  %v2230 = vunpack.c.l.b16 %v250
  %v2231 = vunpack.c.l.b16 %v251
  %v2232 = vunpack.c.l.b16 %v252
  %v2233 = vunpack.c.l.b16 %v253
  %v2234 = vunpack.c.l.b16 %v254
  %v2235 = vunpack.c.l.b16 %v255
  %v2236 = vunpack.c.l.b16 %v256
  %v2237 = vunpack.c.l.b16 %v257
  %v2238 = vunpack.c.l.b16 %v258
  %v2239 = vunpack.c.l.b16 %v259
  %v2240 = vunpack.c.l.b16 %v260
  %v2241 = vunpack.c.l.b16 %v261
  %v2242 = vunpack.c.l.b16 %v262
  %v2243 = vunpack.c.l.b16 %v263
  %v2244 = vunpack.c.l.b16 %v264
  %v2245 = vunpack.c.l.b16 %v265
  %v2246 = vunpack.c.l.b16 %v266
  %v2247 = vunpack.c.l.b16 %v267
  %v2248 = vunpack.c.l.b16 %v268
  %v2249 = vunpack.c.l.b16 %v269
  %v2250 = vunpack.c.l.b16 %v270
  %v2251 = vunpack.c.l.b16 %v271
  %v2252 = vunpack.c.l.b16 %v272
  %v2253 = vunpack.c.l.b16 %v273
  %v2254 = vunpack.c.l.b16 %v274
  %v2255 = vunpack.c.l.b16 %v275
  %v2256 = vunpack.c.l.b16 %v276
  %v2257 = vunpack.c.l.b16 %v277
  %v2258 = vunpack.c.l.b16 %v278
  %v2259 = vunpack.c.l.b16 %v279
  %v2260 = vunpack.c.l.b16 %v280
  %v2261 = vunpack.c.l.b16 %v281
  %v2262 = vunpack.c.l.b16 %v282
  %v2263 = vunpack.c.l.b16 %v283
  %v2264 = vunpack.c.l.b16 %v284
  %v2265 = vunpack.c.l.b16 %v285
  %v2266 = vunpack.c.l.b16 %v286
  %v2267 = vunpack.c.l.b16 %v287
  %v2268 = vunpack.c.l.b16 %v288
  %v2269 = vunpack.c.l.b16 %v289
  %v2270 = vunpack.c.l.b16 %v290
  %v2271 = vunpack.c.l.b16 %v291
  %v2272 = vunpack.c.l.b16 %v292
  %v2273 = vunpack.c.l.b16 %v293
  %v2274 = vunpack.c.l.b16 %v294
  %v2275 = vunpack.c.l.b16 %v295
  %v2276 = vunpack.c.l.b16 %v296
  %v2277 = vunpack.c.l.b16 %v297
  %v2278 = vunpack.c.l.b16 %v298
  %v2279 = vunpack.c.l.b16 %v299
  %v2280 = vunpack.c.l.b16 %v300
  %v2281 = vunpack.c.l.b16 %v301
  %v2282 = vunpack.c.l.b16 %v302
  %v2283 = vunpack.c.l.b16 %v303
  %v2284 = vunpack.c.l.b16 %v304
  %v2285 = vunpack.c.l.b16 %v305
  %v2286 = vunpack.c.l.b16 %v306
  %v2287 = vunpack.c.l.b16 %v307
  %v2288 = vunpack.c.l.b16 %v308
  %v2289 = vunpack.c.l.b16 %v309
  %v2290 = vunpack.c.l.b16 %v310
  %v2291 = vunpack.c.l.b16 %v311
  %v2292 = vunpack.c.l.b16 %v312
  %v2293 = vunpack.c.l.b16 %v313
  %v2294 = vunpack.c.l.b16 %v314
  %v2295 = vunpack.c.l.b16 %v315
  %v2296 = vunpack.c.l.b16 %v316
  %v2297 = vunpack.c.l.b16 %v317
  %v2298 = vunpack.c.l.b16 %v318
  %v2299 = vunpack.c.l.b16 %v319
  %v2300 = vunpack.c.l.b16 %v320
  %v2301 = vunpack.c.l.b16 %v321
  %v2302 = vunpack.c.l.b16 %v322
  %v2303 = vunpack.c.l.b16 %v323
  %v2304 = vunpack.c.l.b16 %v324
  %v2305 = vunpack.c.l.b16 %v325
  %v2306 = vunpack.c.l.b16 %v326
  %v2307 = vunpack.c.l.b16 %v327
  %v2308 = vunpack.c.l.b16 %v328
  %v2309 = vunpack.c.l.b16 %v329
  %v2310 = vunpack.c.l.b16 %v330
  %v2311 = vunpack.c.l.b16 %v331
  %v2312 = vunpack.c.l.b16 %v332
  %v2313 = vunpack.c.l.b16 %v333
  %v2314 = vunpack.c.l.b16 %v334
  %v2315 = vunpack.c.l.b16 %v335
  %v2316 = vunpack.c.l.b16 %v336
  %v2317 = vunpack.c.l.b16 %v337
  %v2318 = vunpack.c.l.b16 %v338
  %v2319 = vunpack.c.l.b16 %v339
  %v2320 = vunpack.c.l.b16 %v340
  %v2321 = vunpack.c.l.b16 %v341
  %v2322 = vunpack.c.l.b16 %v342
  %v2323 = vunpack.c.l.b16 %v343
  %v2324 = vunpack.c.l.b16 %v344
  %v2325 = vunpack.c.l.b16 %v345
  %v2326 = vunpack.c.l.b16 %v346
  %v2327 = vunpack.c.l.b16 %v347
  %v2328 = vunpack.c.l.b16 %v348
  %v2329 = vunpack.c.l.b16 %v349
  %v2330 = vunpack.c.l.b16 %v350
  %v2331 = vunpack.c.l.b16 %v351
  %v2332 = vunpack.c.l.b16 %v352
  %v2333 = vunpack.c.l.b16 %v353
  %v2334 = vunpack.c.l.b16 %v354
  %v2335 = vunpack.c.l.b16 %v355
  %v2336 = vunpack.c.l.b16 %v356
  %v2337 = vunpack.c.l.b16 %v357
  %v2338 = vunpack.c.l.b16 %v358
  %v2339 = vunpack.c.l.b16 %v359
  %v2340 = vunpack.c.l.b16 %v360
  %v2341 = vunpack.c.l.b16 %v361
  %v2342 = vunpack.c.l.b16 %v362
  %v2343 = vunpack.c.l.b16 %v363
  %v2344 = vunpack.c.l.b16 %v364
  %v2345 = vunpack.c.l.b16 %v365
  %v2346 = vunpack.c.l.b16 %v366
  %v2347 = vunpack.c.l.b16 %v367
  %v2348 = vunpack.c.l.b16 %v368
  %v2349 = vunpack.c.l.b16 %v369
  %v2350 = vunpack.c.l.b16 %v370
  %v2351 = vunpack.c.l.b16 %v371
  %v2352 = vunpack.c.l.b16 %v372
  %v2353 = vunpack.c.l.b16 %v373
  %v2354 = vunpack.c.l.b16 %v374
  %v2355 = vunpack.c.l.b16 %v375
  %v2356 = vunpack.c.l.b16 %v376
  %v2357 = vunpack.c.l.b16 %v377
  %v2358 = vunpack.c.l.b16 %v378
  %v2359 = vunpack.c.l.b16 %v379
  %v2360 = vunpack.c.l.b16 %v380
  %v2361 = vunpack.c.l.b16 %v381
  %v2362 = vunpack.c.l.b16 %v382
  %v2363 = vunpack.c.l.b16 %v383
  %v2364 = vunpack.c.l.b16 %v384
  %v2365 = vunpack.c.l.b16 %v385
  %v2366 = vunpack.c.l.b16 %v386
  %v2367 = vunpack.c.l.b16 %v387
  %v2368 = vunpack.c.l.b16 %v388
  %v2369 = vunpack.c.l.b16 %v389
  %v2370 = vunpack.c.l.b16 %v390
  %v2371 = vunpack.c.l.b16 %v391
  %v2372 = vunpack.c.l.b16 %v392
  %v2373 = vunpack.c.l.b16 %v393
  %v2374 = vunpack.c.l.b16 %v394
  %v2375 = vunpack.c.l.b16 %v395
  %v2376 = vunpack.c.l.b16 %v396
  %v2377 = vunpack.c.l.b16 %v397
  %v2378 = vunpack.c.l.b16 %v398
  %v2379 = vunpack.c.l.b16 %v399
  %v2380 = vunpack.c.l.b16 %v400
  %v2381 = vunpack.c.l.b16 %v401
  %v2382 = vunpack.c.l.b16 %v402
  %v2383 = vunpack.c.l.b16 %v403
  %v2384 = vunpack.c.l.b16 %v404
  %v2385 = vunpack.c.l.b16 %v405
  %v2386 = vunpack.c.l.b16 %v406
  %v2387 = vunpack.c.l.b16 %v407
  %v2388 = vunpack.c.l.b16 %v408
  %v2389 = vunpack.c.l.b16 %v409
  %v2390 = vunpack.c.l.b16 %v410
  %v2391 = vunpack.c.l.b16 %v411
  %v2392 = vunpack.c.l.b16 %v412
  %v2393 = vunpack.c.l.b16 %v413
  %v2394 = vunpack.c.l.b16 %v414
  %v2395 = vunpack.c.l.b16 %v415
  %v2396 = vunpack.c.l.b16 %v416
  %v2397 = vunpack.c.l.b16 %v417
  %v2398 = vunpack.c.l.b16 %v418
  %v2399 = vunpack.c.l.b16 %v419
  %v2400 = vunpack.c.l.b16 %v420
  %v2401 = vunpack.c.l.b16 %v421
  %v2402 = vunpack.c.l.b16 %v422
  %v2403 = vunpack.c.l.b16 %v423
  %v2404 = vunpack.c.l.b16 %v424
  %v2405 = vunpack.c.l.b16 %v425
  %v2406 = vunpack.c.l.b16 %v426
  %v2407 = vunpack.c.l.b16 %v427
  %v2408 = vunpack.c.l.b16 %v428
  %v2409 = vunpack.c.l.b16 %v429
  %v2410 = vunpack.c.l.b16 %v430
  %v2411 = vunpack.c.l.b16 %v431
  %v2412 = vunpack.c.l.b16 %v432
  %v2413 = vunpack.c.l.b16 %v433
  %v2414 = vunpack.c.l.b16 %v434
  %v2415 = vunpack.c.l.b16 %v435
  %v2416 = vunpack.c.l.b16 %v436
  %v2417 = vunpack.c.l.b16 %v437
  %v2418 = vunpack.c.l.b16 %v438
  %v2419 = vunpack.c.l.b16 %v439
  %v2420 = vunpack.c.l.b16 %v440
  %v2421 = vunpack.c.l.b16 %v441
  %v2422 = vunpack.c.l.b16 %v442
  %v2423 = vunpack.c.l.b16 %v443
  %v2424 = vunpack.c.l.b16 %v444
  %v2425 = vunpack.c.l.b16 %v445
  %v2426 = vunpack.c.l.b16 %v446
  %v2427 = vunpack.c.l.b16 %v447
  %v2428 = vunpack.c.l.b16 %v448
  %v2429 = vunpack.c.l.b16 %v449
  %v2430 = vunpack.c.l.b16 %v450
  %v2431 = vunpack.c.l.b16 %v451
  %v2432 = vunpack.c.l.b16 %v452
  %v2433 = vunpack.c.l.b16 %v453
  %v2434 = vunpack.c.l.b16 %v454
  %v2435 = vunpack.c.l.b16 %v455
  %v2436 = vunpack.c.l.b16 %v456
  %v2437 = vunpack.c.l.b16 %v457
  %v2438 = vunpack.c.l.b16 %v458
  %v2439 = vunpack.c.l.b16 %v459
  %v2440 = vunpack.c.l.b16 %v460
  %v2441 = vunpack.c.l.b16 %v461
  %v2442 = vunpack.c.l.b16 %v462
  %v2443 = vunpack.c.l.b16 %v463
  %v2444 = vunpack.c.l.b16 %v464
  %v2445 = vunpack.c.l.b16 %v465
  %v2446 = vunpack.c.l.b16 %v466
  %v2447 = vunpack.c.l.b16 %v467
  %v2448 = vunpack.c.l.b16 %v468
  %v2449 = vunpack.c.l.b16 %v469
  %v2450 = vunpack.c.l.b16 %v470
  %v2451 = vunpack.c.l.b16 %v471
  %v2452 = vunpack.c.l.b16 %v472
  %v2453 = vunpack.c.l.b16 %v473
  %v2454 = vunpack.c.l.b16 %v474
  %v2455 = vunpack.c.l.b16 %v475
  %v2456 = vunpack.c.l.b16 %v476
  %v2457 = vunpack.c.l.b16 %v477
  %v2458 = vunpack.c.l.b16 %v478
  %v2459 = vunpack.c.l.b16 %v479
  %v2460 = vunpack.c.l.b16 %v480
  %v2461 = vunpack.c.l.b16 %v481
  %v2462 = vunpack.c.l.b16 %v482
  %v2463 = vunpack.c.l.b16 %v483
  %v2464 = vunpack.c.l.b16 %v484
  %v2465 = vunpack.c.l.b16 %v485
  %v2466 = vunpack.c.l.b16 %v486
  %v2467 = vunpack.c.l.b16 %v487
  %v2468 = vunpack.c.l.b16 %v488
  %v2469 = vunpack.c.l.b16 %v489
  %v2470 = vunpack.c.l.b16 %v490
  %v2471 = vunpack.c.l.b16 %v491
  %v2472 = vunpack.c.l.b16 %v492
  %v2473 = vunpack.c.l.b16 %v493
  %v2474 = vunpack.c.l.b16 %v494
  %v2475 = vunpack.c.l.b16 %v495
  %v2476 = vunpack.c.l.b16 %v496
  %v2477 = vunpack.c.l.b16 %v497
  %v2478 = vunpack.c.l.b16 %v498
  %v2479 = vunpack.c.l.b16 %v499
  %v2480 = vunpack.c.l.b16 %v500
  %v2481 = vunpack.c.l.b16 %v501
  %v2482 = vunpack.c.l.b16 %v502
  %v2483 = vunpack.c.l.b16 %v503
  %v2484 = vunpack.c.l.b16 %v504
  %v2485 = vunpack.c.l.b16 %v505
  %v2486 = vunpack.c.l.b16 %v506
  %v2487 = vunpack.c.l.b16 %v507
  %v2488 = vunpack.c.l.b16 %v508
  %v2489 = vunpack.c.l.b16 %v509
  %v2490 = vunpack.c.l.b16 %v510
  %v2491 = vunpack.c.l.b16 %v511
  %v2492 = vunpack.c.l.b16 %v512
  %v2493 = vunpack.c.l.b16 %v513
  %v2494 = vunpack.c.l.b16 %v514
  %v2495 = vunpack.c.l.b16 %v515
  %v2496 = vunpack.c.l.b16 %v516
  %v2497 = vunpack.c.l.b16 %v517
  %v2498 = vunpack.c.l.b16 %v518
  %v2499 = vunpack.c.l.b16 %v519
  %v2500 = vunpack.c.l.b16 %v520
  %v2501 = vunpack.c.l.b16 %v521
  %v2502 = vunpack.c.l.b16 %v522
  %v2503 = vunpack.c.l.b16 %v523
  %v2504 = vunpack.c.l.b16 %v524
  %v2505 = vunpack.c.l.b16 %v525
  %v2506 = vunpack.c.l.b16 %v526
  %v2507 = vunpack.c.l.b16 %v527
  %v2508 = vunpack.c.l.b16 %v528
  %v2509 = vunpack.c.l.b16 %v529
  %v2510 = vunpack.c.l.b16 %v530
  %v2511 = vunpack.c.l.b16 %v531
  %v2512 = vunpack.c.l.b16 %v532
  %v2513 = vunpack.c.l.b16 %v533
  %v2514 = vunpack.c.l.b16 %v534
  %v2515 = vunpack.c.l.b16 %v535
  %v2516 = vunpack.c.l.b16 %v536
  %v2517 = vunpack.c.l.b16 %v537
  %v2518 = vunpack.c.l.b16 %v538
  %v2519 = vunpack.c.l.b16 %v539
  %v2520 = vunpack.c.l.b16 %v540
  %v2521 = vunpack.c.l.b16 %v541
  %v2522 = vunpack.c.l.b16 %v542
  %v2523 = vunpack.c.l.b16 %v543
  %v2524 = vunpack.c.l.b16 %v544
  %v2525 = vunpack.c.l.b16 %v545
  %v2526 = vunpack.c.l.b16 %v546
  %v2527 = vunpack.c.l.b16 %v547
  %v2528 = vunpack.c.l.b16 %v548
  %v2529 = vunpack.c.l.b16 %v549
  %v2530 = vunpack.c.l.b16 %v550
  %v2531 = vunpack.c.l.b16 %v551
  %v2532 = vunpack.c.l.b16 %v552
  %v2533 = vunpack.c.l.b16 %v553
  %v2534 = vunpack.c.l.b16 %v554
  %v2535 = vunpack.c.l.b16 %v555
  %v2536 = vunpack.c.l.b16 %v556
  %v2537 = vunpack.c.l.b16 %v557
  %v2538 = vunpack.c.l.b16 %v558
  %v2539 = vunpack.c.l.b16 %v559
  %v2540 = vunpack.c.l.b16 %v560
  %v2541 = vunpack.c.l.b16 %v561
  %v2542 = vunpack.c.l.b16 %v562
  %v2543 = vunpack.c.l.b16 %v563
  %v2544 = vunpack.c.l.b16 %v564
  %v2545 = vunpack.c.l.b16 %v565
  %v2546 = vunpack.c.l.b16 %v566
  %v2547 = vunpack.c.l.b16 %v567
  %v2548 = vunpack.c.l.b16 %v568
  %v2549 = vunpack.c.l.b16 %v569
  %v2550 = vunpack.c.l.b16 %v570
  %v2551 = vunpack.c.l.b16 %v571
  %v2552 = vunpack.c.l.b16 %v572
  %v2553 = vunpack.c.l.b16 %v573
  %v2554 = vunpack.c.l.b16 %v574
  %v2555 = vunpack.c.l.b16 %v575
  %v2556 = vunpack.c.l.b16 %v576
  %v2557 = vunpack.c.l.b16 %v577
  %v2558 = vunpack.c.l.b16 %v578
  %v2559 = vunpack.c.l.b16 %v579
  %v2560 = vunpack.c.l.b16 %v580
  %v2561 = vunpack.c.l.b16 %v581
  %v2562 = vunpack.c.l.b16 %v582
  %v2563 = vunpack.c.l.b16 %v583
  %v2564 = vunpack.c.l.b16 %v584
  %v2565 = vunpack.c.l.b16 %v585
  %v2566 = vunpack.c.l.b16 %v586
  %v2567 = vunpack.c.l.b16 %v587
  %v2568 = vunpack.c.l.b16 %v588
  %v2569 = vunpack.c.l.b16 %v589
  %v2570 = vunpack.c.l.b16 %v590
  %v2571 = vunpack.c.l.b16 %v591
  %v2572 = vunpack.c.l.b16 %v592
  %v2573 = vunpack.c.l.b16 %v593
  %v2574 = vunpack.c.l.b16 %v594
  %v2575 = vunpack.c.l.b16 %v595
  %v2576 = vunpack.c.l.b16 %v596
  %v2577 = vunpack.c.l.b16 %v597
  %v2578 = vunpack.c.l.b16 %v598
  %v2579 = vunpack.c.l.b16 %v599
  %v2580 = vunpack.c.l.b16 %v600
  %v2581 = vunpack.c.l.b16 %v601
  %v2582 = vunpack.c.l.b16 %v602
  %v2583 = vunpack.c.l.b16 %v603
  %v2584 = vunpack.c.l.b16 %v604
  %v2585 = vunpack.c.l.b16 %v605
  %v2586 = vunpack.c.l.b16 %v606
  %v2587 = vunpack.c.l.b16 %v607
  %v2588 = vunpack.c.l.b16 %v608
  %v2589 = vunpack.c.l.b16 %v609
  %v2590 = vunpack.c.l.b16 %v610
  %v2591 = vunpack.c.l.b16 %v611
  %v2592 = vunpack.c.l.b16 %v612
  %v2593 = vunpack.c.l.b16 %v613
  %v2594 = vunpack.c.l.b16 %v614
  %v2595 = vunpack.c.l.b16 %v615
  %v2596 = vunpack.c.l.b16 %v616
  %v2597 = vunpack.c.l.b16 %v617
  %v2598 = vunpack.c.l.b16 %v618
  %v2599 = vunpack.c.l.b16 %v619
  %v2600 = vunpack.c.l.b16 %v620
  %v2601 = vunpack.c.l.b16 %v621
  %v2602 = vunpack.c.l.b16 %v622
  %v2603 = vunpack.c.l.b16 %v623
  %v2604 = vunpack.c.l.b16 %v624
  %v2605 = vunpack.c.l.b16 %v625
  %v2606 = vunpack.c.l.b16 %v626
  %v2607 = vunpack.c.l.b16 %v627
  %v2608 = vunpack.c.l.b16 %v628
  %v2609 = vunpack.c.l.b16 %v629
  %v2610 = vunpack.c.l.b16 %v630
  %v2611 = vunpack.c.l.b16 %v631
  %v2612 = vunpack.c.l.b16 %v632
  %v2613 = vunpack.c.l.b16 %v633
  %v2614 = vunpack.c.l.b16 %v634
  %v2615 = vunpack.c.l.b16 %v635
  %v2616 = vunpack.c.l.b16 %v636
  %v2617 = vunpack.c.l.b16 %v637
  %v2618 = vunpack.c.l.b16 %v638
  %v2619 = vunpack.c.l.b16 %v639
  %v2620 = vunpack.c.l.b16 %v640
  %v2621 = vunpack.c.l.b16 %v641
  %v2622 = vunpack.c.l.b16 %v642
  %v2623 = vunpack.c.l.b16 %v643
  %v2624 = vunpack.c.l.b16 %v644
  %v2625 = vunpack.c.l.b16 %v645
  %v2626 = vunpack.c.l.b16 %v646
  %v2627 = vunpack.c.l.b16 %v647
  %v2628 = vunpack.c.l.b16 %v648
  %v2629 = vunpack.c.l.b16 %v649
  %v2630 = vunpack.c.l.b16 %v650
  %v2631 = vunpack.c.l.b16 %v651
  %v2632 = vunpack.c.l.b16 %v652
  %v2633 = vunpack.c.l.b16 %v653
  %v2634 = vunpack.c.l.b16 %v654
  %v2635 = vunpack.c.l.b16 %v655
  %v2636 = vunpack.c.l.b16 %v656
  %v2637 = vunpack.c.l.b16 %v657
  %v2638 = vunpack.c.l.b16 %v658
  %v2639 = vunpack.c.l.b16 %v659
  %v2640 = vunpack.c.l.b16 %v660
  %v2641 = vunpack.c.l.b16 %v661
  %v2642 = vunpack.c.l.b16 %v662
  %v2643 = vunpack.c.l.b16 %v663
  %v2644 = vunpack.c.l.b16 %v664
  %v2645 = vunpack.c.l.b16 %v665
  %v2646 = vunpack.c.l.b16 %v666
  %v2647 = vunpack.c.l.b16 %v667
  %v2648 = vunpack.c.l.b16 %v668
  %v2649 = vunpack.c.l.b16 %v669
  %v2650 = vunpack.c.l.b16 %v670
  %v2651 = vunpack.c.l.b16 %v671
  %v2652 = vunpack.c.l.b16 %v672
  %v2653 = vunpack.c.l.b16 %v673
  %v2654 = vunpack.c.l.b16 %v674
  %v2655 = vunpack.c.l.b16 %v675
  %v2656 = vunpack.c.l.b16 %v676
  %v2657 = vunpack.c.l.b16 %v677
  %v2658 = vunpack.c.l.b16 %v678
  %v2659 = vunpack.c.l.b16 %v679
  %v2660 = vunpack.c.l.b16 %v680
  %v2661 = vunpack.c.l.b16 %v681
  %v2662 = vunpack.c.l.b16 %v682
  %v2663 = vunpack.c.l.b16 %v683
  %v2664 = vunpack.c.l.b16 %v684
  %v2665 = vunpack.c.l.b16 %v685
  %v2666 = vunpack.c.l.b16 %v686
  %v2667 = vunpack.c.l.b16 %v687
  %v2668 = vunpack.c.l.b16 %v688
  %v2669 = vunpack.c.l.b16 %v689
  %v2670 = vunpack.c.l.b16 %v690
  %v2671 = vunpack.c.l.b16 %v691
  %v2672 = vunpack.c.l.b16 %v692
  %v2673 = vunpack.c.l.b16 %v693
  %v2674 = vunpack.c.l.b16 %v694
  %v2675 = vunpack.c.l.b16 %v695
  %v2676 = vunpack.c.l.b16 %v696
  %v2677 = vunpack.c.l.b16 %v697
  %v2678 = vunpack.c.l.b16 %v698
  %v2679 = vunpack.c.l.b16 %v699
  %v2680 = vunpack.c.l.b16 %v700
  %v2681 = vunpack.c.l.b16 %v701
  %v2682 = vunpack.c.l.b16 %v702
  %v2683 = vunpack.c.l.b16 %v703
  %v2684 = vunpack.c.l.b16 %v704
  %v2685 = vunpack.c.l.b16 %v705
  %v2686 = vunpack.c.l.b16 %v706
  %v2687 = vunpack.c.l.b16 %v707
  %v2688 = vunpack.c.l.b16 %v708
  %v2689 = vunpack.c.l.b16 %v709
  %v2690 = vunpack.c.l.b16 %v710
  %v2691 = vunpack.c.l.b16 %v711
  %v2692 = vunpack.c.l.b16 %v712
  %v2693 = vunpack.c.l.b16 %v713
  %v2694 = vunpack.c.l.b16 %v714
  %v2695 = vunpack.c.l.b16 %v715
  %v2696 = vunpack.c.l.b16 %v716
  %v2697 = vunpack.c.l.b16 %v717
  %v2698 = vunpack.c.l.b16 %v718
  %v2699 = vunpack.c.l.b16 %v719
  %v2700 = vunpack.c.l.b16 %v720
  %v2701 = vunpack.c.l.b16 %v721
  %v2702 = vunpack.c.l.b16 %v722
  %v2703 = vunpack.c.l.b16 %v723
  %v2704 = vunpack.c.l.b16 %v724
  %v2705 = vunpack.c.l.b16 %v725
  %v2706 = vunpack.c.l.b16 %v726
  %v2707 = vunpack.c.l.b16 %v727
  %v2708 = vunpack.c.l.b16 %v728
  %v2709 = vunpack.c.l.b16 %v729
  %v2710 = vunpack.c.l.b16 %v730
  %v2711 = vunpack.c.l.b16 %v731
  %v2712 = vunpack.c.l.b16 %v732
  %v2713 = vunpack.c.l.b16 %v733
  %v2714 = vunpack.c.l.b16 %v734
  %v2715 = vunpack.c.l.b16 %v735
  %v2716 = vunpack.c.l.b16 %v736
  %v2717 = vunpack.c.l.b16 %v737
  %v2718 = vunpack.c.l.b16 %v738
  %v2719 = vunpack.c.l.b16 %v739
  %v2720 = vunpack.c.l.b16 %v740
  %v2721 = vunpack.c.l.b16 %v741
  %v2722 = vunpack.c.l.b16 %v742
  %v2723 = vunpack.c.l.b16 %v743
  %v2724 = vunpack.c.l.b16 %v744
  %v2725 = vunpack.c.l.b16 %v745
  %v2726 = vunpack.c.l.b16 %v746
  %v2727 = vunpack.c.l.b16 %v747
  %v2728 = vunpack.c.l.b16 %v748
  %v2729 = vunpack.c.l.b16 %v749
  %v2730 = vunpack.c.l.b16 %v750
  %v2731 = vunpack.c.l.b16 %v751
  %v2732 = vunpack.c.l.b16 %v752
  %v2733 = vunpack.c.l.b16 %v753
  %v2734 = vunpack.c.l.b16 %v754
  %v2735 = vunpack.c.l.b16 %v755
  %v2736 = vunpack.c.l.b16 %v756
  %v2737 = vunpack.c.l.b16 %v757
  %v2738 = vunpack.c.l.b16 %v758
  %v2739 = vunpack.c.l.b16 %v759
  %v2740 = vunpack.c.l.b16 %v760
  %v2741 = vunpack.c.l.b16 %v761
  %v2742 = vunpack.c.l.b16 %v762
  %v2743 = vunpack.c.l.b16 %v763
  %v2744 = vunpack.c.l.b16 %v764
  %v2745 = vunpack.c.l.b16 %v765
  %v2746 = vunpack.c.l.b16 %v766
  %v2747 = vunpack.c.l.b16 %v767
  %v2748 = vunpack.c.l.b16 %v768
  %v2749 = vunpack.c.l.b16 %v769
  %v2750 = vunpack.c.l.b16 %v770
  %v2751 = vunpack.c.l.b16 %v771
  %v2752 = vunpack.c.l.b16 %v772
  %v2753 = vunpack.c.l.b16 %v773
  %v2754 = vunpack.c.l.b16 %v774
  %v2755 = vunpack.c.l.b16 %v775
  %v2756 = vunpack.c.l.b16 %v776
  %v2757 = vunpack.c.l.b16 %v777
  %v2758 = vunpack.c.l.b16 %v778
  %v2759 = vunpack.c.l.b16 %v779
  %v2760 = vunpack.c.l.b16 %v780
  %v2761 = vunpack.c.l.b16 %v781
  %v2762 = vunpack.c.l.b16 %v782
  %v2763 = vunpack.c.l.b16 %v783
  %v2764 = vunpack.c.l.b16 %v784
  %v2765 = vunpack.c.l.b16 %v785
  %v2766 = vunpack.c.l.b16 %v786
  %v2767 = vunpack.c.l.b16 %v787
  %v2768 = vunpack.c.l.b16 %v788
  %v2769 = vunpack.c.l.b16 %v789
  %v2770 = vunpack.c.l.b16 %v790
  %v2771 = vunpack.c.l.b16 %v791
  %v2772 = vunpack.c.l.b16 %v792
  %v2773 = vunpack.c.l.b16 %v793
  %v2774 = vunpack.c.l.b16 %v794
  %v2775 = vunpack.c.l.b16 %v795
  %v2776 = vunpack.c.l.b16 %v796
  %v2777 = vunpack.c.l.b16 %v797
  %v2778 = vunpack.c.l.b16 %v798
  %v2779 = vunpack.c.l.b16 %v799
  %v2780 = vunpack.c.l.b16 %v800
  %v2781 = vunpack.c.l.b16 %v801
  %v2782 = vunpack.c.l.b16 %v802
  %v2783 = vunpack.c.l.b16 %v803
  %v2784 = vunpack.c.l.b16 %v804
  %v2785 = vunpack.c.l.b16 %v805
  %v2786 = vunpack.c.l.b16 %v806
  %v2787 = vunpack.c.l.b16 %v807
  %v2788 = vunpack.c.l.b16 %v808
  %v2789 = vunpack.c.l.b16 %v809
  %v2790 = vunpack.c.l.b16 %v810
  %v2791 = vunpack.c.l.b16 %v811
  %v2792 = vunpack.c.l.b16 %v812
  %v2793 = vunpack.c.l.b16 %v813
  %v2794 = vunpack.c.l.b16 %v814
  %v2795 = vunpack.c.l.b16 %v815
  %v2796 = vunpack.c.l.b16 %v816
  %v2797 = vunpack.c.l.b16 %v817
  %v2798 = vunpack.c.l.b16 %v818
  %v2799 = vunpack.c.l.b16 %v819
  %v2800 = vunpack.c.l.b16 %v820
  %v2801 = vunpack.c.l.b16 %v821
  %v2802 = vunpack.c.l.b16 %v822
  %v2803 = vunpack.c.l.b16 %v823
  %v2804 = vunpack.c.l.b16 %v824
  %v2805 = vunpack.c.l.b16 %v825
  %v2806 = vunpack.c.l.b16 %v826
  %v2807 = vunpack.c.l.b16 %v827
  %v2808 = vunpack.c.l.b16 %v828
  %v2809 = vunpack.c.l.b16 %v829
  %v2810 = vunpack.c.l.b16 %v830
  %v2811 = vunpack.c.l.b16 %v831
  %v2812 = vunpack.c.l.b16 %v832
  %v2813 = vunpack.c.l.b16 %v833
  %v2814 = vunpack.c.l.b16 %v834
  %v2815 = vunpack.c.l.b16 %v835
  %v2816 = vpack.c.b16 %v2017, %v2016
  %v2817 = vpack.c.b16 %v2019, %v2018
  %v2818 = vpack.c.b16 %v2021, %v2020
  %v2819 = vpack.c.b16 %v2023, %v2022
  %v2820 = vpack.c.b16 %v2025, %v2024
  %v2821 = vpack.c.b16 %v2027, %v2026
  %v2822 = vpack.c.b16 %v2029, %v2028
  %v2823 = vpack.c.b16 %v2031, %v2030
  %v2824 = vpack.c.b16 %v2033, %v2032
  %v2825 = vpack.c.b16 %v2035, %v2034
  %v2826 = vpack.c.b16 %v2037, %v2036
  %v2827 = vpack.c.b16 %v2039, %v2038
  %v2828 = vpack.c.b16 %v2041, %v2040
  %v2829 = vpack.c.b16 %v2043, %v2042
  %v2830 = vpack.c.b16 %v2045, %v2044
  %v2831 = vpack.c.b16 %v2047, %v2046
  %v2832 = vpack.c.b16 %v2049, %v2048
  %v2833 = vpack.c.b16 %v2051, %v2050
  %v2834 = vpack.c.b16 %v2053, %v2052
  %v2835 = vpack.c.b16 %v2055, %v2054
  %v2836 = vpack.c.b16 %v2057, %v2056
  %v2837 = vpack.c.b16 %v2059, %v2058
  %v2838 = vpack.c.b16 %v2061, %v2060
  %v2839 = vpack.c.b16 %v2063, %v2062
  %v2840 = vpack.c.b16 %v2065, %v2064
  %v2841 = vpack.c.b16 %v2067, %v2066
  %v2842 = vpack.c.b16 %v2069, %v2068
  %v2843 = vpack.c.b16 %v2071, %v2070
  %v2844 = vpack.c.b16 %v2073, %v2072
  %v2845 = vpack.c.b16 %v2075, %v2074
  %v2846 = vpack.c.b16 %v2077, %v2076
  %v2847 = vpack.c.b16 %v2079, %v2078
  %v2848 = vpack.c.b16 %v2081, %v2080
  %v2849 = vpack.c.b16 %v2083, %v2082
  %v2850 = vpack.c.b16 %v2085, %v2084
  %v2851 = vpack.c.b16 %v2087, %v2086
  %v2852 = vpack.c.b16 %v2089, %v2088
  %v2853 = vpack.c.b16 %v2091, %v2090
  %v2854 = vpack.c.b16 %v2093, %v2092
  %v2855 = vpack.c.b16 %v2095, %v2094
  %v2856 = vpack.c.b16 %v2097, %v2096
  %v2857 = vpack.c.b16 %v2099, %v2098
  %v2858 = vpack.c.b16 %v2101, %v2100
  %v2859 = vpack.c.b16 %v2103, %v2102
  %v2860 = vpack.c.b16 %v2105, %v2104
  %v2861 = vpack.c.b16 %v2107, %v2106
  %v2862 = vpack.c.b16 %v2109, %v2108
  %v2863 = vpack.c.b16 %v2111, %v2110
  %v2864 = vpack.c.b16 %v2113, %v2112
  %v2865 = vpack.c.b16 %v2115, %v2114
  %v2866 = vpack.c.b16 %v2117, %v2116
  %v2867 = vpack.c.b16 %v2119, %v2118
  %v2868 = vpack.c.b16 %v2121, %v2120
  %v2869 = vpack.c.b16 %v2123, %v2122
  %v2870 = vpack.c.b16 %v2125, %v2124
  %v2871 = vpack.c.b16 %v2127, %v2126
  %v2872 = vpack.c.b16 %v2129, %v2128
  %v2873 = vpack.c.b16 %v2131, %v2130
  %v2874 = vpack.c.b16 %v2133, %v2132
  %v2875 = vpack.c.b16 %v2135, %v2134
  %v2876 = vpack.c.b16 %v2137, %v2136
  %v2877 = vpack.c.b16 %v2139, %v2138
  %v2878 = vpack.c.b16 %v2141, %v2140
  %v2879 = vpack.c.b16 %v2143, %v2142
  %v2880 = vpack.c.b16 %v2145, %v2144
  %v2881 = vpack.c.b16 %v2147, %v2146
  %v2882 = vpack.c.b16 %v2149, %v2148
  %v2883 = vpack.c.b16 %v2151, %v2150
  %v2884 = vpack.c.b16 %v2153, %v2152
  %v2885 = vpack.c.b16 %v2155, %v2154
  %v2886 = vpack.c.b16 %v2157, %v2156
  %v2887 = vpack.c.b16 %v2159, %v2158
  %v2888 = vpack.c.b16 %v2161, %v2160
  %v2889 = vpack.c.b16 %v2163, %v2162
  %v2890 = vpack.c.b16 %v2165, %v2164
  %v2891 = vpack.c.b16 %v2167, %v2166
  %v2892 = vpack.c.b16 %v2169, %v2168
  %v2893 = vpack.c.b16 %v2171, %v2170
  %v2894 = vpack.c.b16 %v2173, %v2172
  %v2895 = vpack.c.b16 %v2175, %v2174
  %v2896 = vpack.c.b16 %v2177, %v2176
  %v2897 = vpack.c.b16 %v2179, %v2178
  %v2898 = vpack.c.b16 %v2181, %v2180
  %v2899 = vpack.c.b16 %v2183, %v2182
  %v2900 = vpack.c.b16 %v2185, %v2184
  %v2901 = vpack.c.b16 %v2187, %v2186
  %v2902 = vpack.c.b16 %v2189, %v2188
  %v2903 = vpack.c.b16 %v2191, %v2190
  %v2904 = vpack.c.b16 %v2193, %v2192
  %v2905 = vpack.c.b16 %v2195, %v2194
  %v2906 = vpack.c.b16 %v2197, %v2196
  %v2907 = vpack.c.b16 %v2199, %v2198
  %v2908 = vpack.c.b16 %v2201, %v2200
  %v2909 = vpack.c.b16 %v2203, %v2202
  %v2910 = vpack.c.b16 %v2205, %v2204
  %v2911 = vpack.c.b16 %v2207, %v2206
  %v2912 = vpack.c.b16 %v2209, %v2208
  %v2913 = vpack.c.b16 %v2211, %v2210
  %v2914 = vpack.c.b16 %v2213, %v2212
  %v2915 = vpack.c.b16 %v2215, %v2214
  %v2916 = vpack.c.b16 %v2217, %v2216
  %v2917 = vpack.c.b16 %v2219, %v2218
  %v2918 = vpack.c.b16 %v2221, %v2220
  %v2919 = vpack.c.b16 %v2223, %v2222
  %v2920 = vpack.c.b16 %v2225, %v2224
  %v2921 = vpack.c.b16 %v2227, %v2226
  %v2922 = vpack.c.b16 %v2229, %v2228
  %v2923 = vpack.c.b16 %v2231, %v2230
  %v2924 = vpack.c.b16 %v2233, %v2232
  %v2925 = vpack.c.b16 %v2235, %v2234
  %v2926 = vpack.c.b16 %v2237, %v2236
  %v2927 = vpack.c.b16 %v2239, %v2238
  %v2928 = vpack.c.b16 %v2241, %v2240
  %v2929 = vpack.c.b16 %v2243, %v2242
  %v2930 = vpack.c.b16 %v2245, %v2244
  %v2931 = vpack.c.b16 %v2247, %v2246
  %v2932 = vpack.c.b16 %v2249, %v2248
  %v2933 = vpack.c.b16 %v2251, %v2250
  %v2934 = vpack.c.b16 %v2253, %v2252
  %v2935 = vpack.c.b16 %v2255, %v2254
  %v2936 = vpack.c.b16 %v2257, %v2256
  %v2937 = vpack.c.b16 %v2259, %v2258
  %v2938 = vpack.c.b16 %v2261, %v2260
  %v2939 = vpack.c.b16 %v2263, %v2262
  %v2940 = vpack.c.b16 %v2265, %v2264
  %v2941 = vpack.c.b16 %v2267, %v2266
  %v2942 = vpack.c.b16 %v2269, %v2268
  %v2943 = vpack.c.b16 %v2271, %v2270
  %v2944 = vpack.c.b16 %v2273, %v2272
  %v2945 = vpack.c.b16 %v2275, %v2274
  %v2946 = vpack.c.b16 %v2277, %v2276
  %v2947 = vpack.c.b16 %v2279, %v2278
  %v2948 = vpack.c.b16 %v2281, %v2280
  %v2949 = vpack.c.b16 %v2283, %v2282
  %v2950 = vpack.c.b16 %v2285, %v2284
  %v2951 = vpack.c.b16 %v2287, %v2286
  %v2952 = vpack.c.b16 %v2289, %v2288
  %v2953 = vpack.c.b16 %v2291, %v2290
  %v2954 = vpack.c.b16 %v2293, %v2292
  %v2955 = vpack.c.b16 %v2295, %v2294
  %v2956 = vpack.c.b16 %v2297, %v2296
  %v2957 = vpack.c.b16 %v2299, %v2298
  %v2958 = vpack.c.b16 %v2301, %v2300
  %v2959 = vpack.c.b16 %v2303, %v2302
  %v2960 = vpack.c.b16 %v2305, %v2304
  %v2961 = vpack.c.b16 %v2307, %v2306
  %v2962 = vpack.c.b16 %v2309, %v2308
  %v2963 = vpack.c.b16 %v2311, %v2310
  %v2964 = vpack.c.b16 %v2313, %v2312
  %v2965 = vpack.c.b16 %v2315, %v2314
  %v2966 = vpack.c.b16 %v2317, %v2316
  %v2967 = vpack.c.b16 %v2319, %v2318
  %v2968 = vpack.c.b16 %v2321, %v2320
  %v2969 = vpack.c.b16 %v2323, %v2322
  %v2970 = vpack.c.b16 %v2325, %v2324
  %v2971 = vpack.c.b16 %v2327, %v2326
  %v2972 = vpack.c.b16 %v2329, %v2328
  %v2973 = vpack.c.b16 %v2331, %v2330
  %v2974 = vpack.c.b16 %v2333, %v2332
  %v2975 = vpack.c.b16 %v2335, %v2334
  %v2976 = vpack.c.b16 %v2337, %v2336
  %v2977 = vpack.c.b16 %v2339, %v2338
  %v2978 = vpack.c.b16 %v2341, %v2340
  %v2979 = vpack.c.b16 %v2343, %v2342
  %v2980 = vpack.c.b16 %v2345, %v2344
  %v2981 = vpack.c.b16 %v2347, %v2346
  %v2982 = vpack.c.b16 %v2349, %v2348
  %v2983 = vpack.c.b16 %v2351, %v2350
  %v2984 = vpack.c.b16 %v2353, %v2352
  %v2985 = vpack.c.b16 %v2355, %v2354
  %v2986 = vpack.c.b16 %v2357, %v2356
  %v2987 = vpack.c.b16 %v2359, %v2358
  %v2988 = vpack.c.b16 %v2361, %v2360
  %v2989 = vpack.c.b16 %v2363, %v2362
  %v2990 = vpack.c.b16 %v2365, %v2364
  %v2991 = vpack.c.b16 %v2367, %v2366
  %v2992 = vpack.c.b16 %v2369, %v2368
  %v2993 = vpack.c.b16 %v2371, %v2370
  %v2994 = vpack.c.b16 %v2373, %v2372
  %v2995 = vpack.c.b16 %v2375, %v2374
  %v2996 = vpack.c.b16 %v2377, %v2376
  %v2997 = vpack.c.b16 %v2379, %v2378
  %v2998 = vpack.c.b16 %v2381, %v2380
  %v2999 = vpack.c.b16 %v2383, %v2382
  %v3000 = vpack.c.b16 %v2385, %v2384
  %v3001 = vpack.c.b16 %v2387, %v2386
  %v3002 = vpack.c.b16 %v2389, %v2388
  %v3003 = vpack.c.b16 %v2391, %v2390
  %v3004 = vpack.c.b16 %v2393, %v2392
  %v3005 = vpack.c.b16 %v2395, %v2394
  %v3006 = vpack.c.b16 %v2397, %v2396
  %v3007 = vpack.c.b16 %v2399, %v2398
  %v3008 = vpack.c.b16 %v2401, %v2400
  %v3009 = vpack.c.b16 %v2403, %v2402
  %v3010 = vpack.c.b16 %v2405, %v2404
  %v3011 = vpack.c.b16 %v2407, %v2406
  %v3012 = vpack.c.b16 %v2409, %v2408
  %v3013 = vpack.c.b16 %v2411, %v2410
  %v3014 = vpack.c.b16 %v2413, %v2412
  %v3015 = vpack.c.b16 %v2415, %v2414
  %v3016 = vpack.c.b16 %v2417, %v2416
  %v3017 = vpack.c.b16 %v2419, %v2418
  %v3018 = vpack.c.b16 %v2421, %v2420
  %v3019 = vpack.c.b16 %v2423, %v2422
  %v3020 = vpack.c.b16 %v2425, %v2424
  %v3021 = vpack.c.b16 %v2427, %v2426
  %v3022 = vpack.c.b16 %v2429, %v2428
  %v3023 = vpack.c.b16 %v2431, %v2430
  %v3024 = vpack.c.b16 %v2433, %v2432
  %v3025 = vpack.c.b16 %v2435, %v2434
  %v3026 = vpack.c.b16 %v2437, %v2436
  %v3027 = vpack.c.b16 %v2439, %v2438
  %v3028 = vpack.c.b16 %v2441, %v2440
  %v3029 = vpack.c.b16 %v2443, %v2442
  %v3030 = vpack.c.b16 %v2445, %v2444
  %v3031 = vpack.c.b16 %v2447, %v2446
  %v3032 = vpack.c.b16 %v2449, %v2448
  %v3033 = vpack.c.b16 %v2451, %v2450
  %v3034 = vpack.c.b16 %v2453, %v2452
  %v3035 = vpack.c.b16 %v2455, %v2454
  %v3036 = vpack.c.b16 %v2457, %v2456
  %v3037 = vpack.c.b16 %v2459, %v2458
  %v3038 = vpack.c.b16 %v2461, %v2460
  %v3039 = vpack.c.b16 %v2463, %v2462
  %v3040 = vpack.c.b16 %v2465, %v2464
  %v3041 = vpack.c.b16 %v2467, %v2466
  %v3042 = vpack.c.b16 %v2469, %v2468
  %v3043 = vpack.c.b16 %v2471, %v2470
  %v3044 = vpack.c.b16 %v2473, %v2472
  %v3045 = vpack.c.b16 %v2475, %v2474
  %v3046 = vpack.c.b16 %v2477, %v2476
  %v3047 = vpack.c.b16 %v2479, %v2478
  %v3048 = vpack.c.b16 %v2481, %v2480
  %v3049 = vpack.c.b16 %v2483, %v2482
  %v3050 = vpack.c.b16 %v2485, %v2484
  %v3051 = vpack.c.b16 %v2487, %v2486
  %v3052 = vpack.c.b16 %v2489, %v2488
  %v3053 = vpack.c.b16 %v2491, %v2490
  %v3054 = vpack.c.b16 %v2493, %v2492
  %v3055 = vpack.c.b16 %v2495, %v2494
  %v3056 = vpack.c.b16 %v2497, %v2496
  %v3057 = vpack.c.b16 %v2499, %v2498
  %v3058 = vpack.c.b16 %v2501, %v2500
  %v3059 = vpack.c.b16 %v2503, %v2502
  %v3060 = vpack.c.b16 %v2505, %v2504
  %v3061 = vpack.c.b16 %v2507, %v2506
  %v3062 = vpack.c.b16 %v2509, %v2508
  %v3063 = vpack.c.b16 %v2511, %v2510
  %v3064 = vpack.c.b16 %v2513, %v2512
  %v3065 = vpack.c.b16 %v2515, %v2514
  %v3066 = vpack.c.b16 %v2517, %v2516
  %v3067 = vpack.c.b16 %v2519, %v2518
  %v3068 = vpack.c.b16 %v2521, %v2520
  %v3069 = vpack.c.b16 %v2523, %v2522
  %v3070 = vpack.c.b16 %v2525, %v2524
  %v3071 = vpack.c.b16 %v2527, %v2526
  %v3072 = vpack.c.b16 %v2529, %v2528
  %v3073 = vpack.c.b16 %v2531, %v2530
  %v3074 = vpack.c.b16 %v2533, %v2532
  %v3075 = vpack.c.b16 %v2535, %v2534
  %v3076 = vpack.c.b16 %v2537, %v2536
  %v3077 = vpack.c.b16 %v2539, %v2538
  %v3078 = vpack.c.b16 %v2541, %v2540
  %v3079 = vpack.c.b16 %v2543, %v2542
  %v3080 = vpack.c.b16 %v2545, %v2544
  %v3081 = vpack.c.b16 %v2547, %v2546
  %v3082 = vpack.c.b16 %v2549, %v2548
  %v3083 = vpack.c.b16 %v2551, %v2550
  %v3084 = vpack.c.b16 %v2553, %v2552
  %v3085 = vpack.c.b16 %v2555, %v2554
  %v3086 = vpack.c.b16 %v2557, %v2556
  %v3087 = vpack.c.b16 %v2559, %v2558
  %v3088 = vpack.c.b16 %v2561, %v2560
  %v3089 = vpack.c.b16 %v2563, %v2562
  %v3090 = vpack.c.b16 %v2565, %v2564
  %v3091 = vpack.c.b16 %v2567, %v2566
  %v3092 = vpack.c.b16 %v2569, %v2568
  %v3093 = vpack.c.b16 %v2571, %v2570
  %v3094 = vpack.c.b16 %v2573, %v2572
  %v3095 = vpack.c.b16 %v2575, %v2574
  %v3096 = vpack.c.b16 %v2577, %v2576
  %v3097 = vpack.c.b16 %v2579, %v2578
  %v3098 = vpack.c.b16 %v2581, %v2580
  %v3099 = vpack.c.b16 %v2583, %v2582
  %v3100 = vpack.c.b16 %v2585, %v2584
  %v3101 = vpack.c.b16 %v2587, %v2586
  %v3102 = vpack.c.b16 %v2589, %v2588
  %v3103 = vpack.c.b16 %v2591, %v2590
  %v3104 = vpack.c.b16 %v2593, %v2592
  %v3105 = vpack.c.b16 %v2595, %v2594
  %v3106 = vpack.c.b16 %v2597, %v2596
  %v3107 = vpack.c.b16 %v2599, %v2598
  %v3108 = vpack.c.b16 %v2601, %v2600
  %v3109 = vpack.c.b16 %v2603, %v2602
  %v3110 = vpack.c.b16 %v2605, %v2604
  %v3111 = vpack.c.b16 %v2607, %v2606
  %v3112 = vpack.c.b16 %v2609, %v2608
  %v3113 = vpack.c.b16 %v2611, %v2610
  %v3114 = vpack.c.b16 %v2613, %v2612
  %v3115 = vpack.c.b16 %v2615, %v2614
  %v3116 = vpack.c.b16 %v2617, %v2616
  %v3117 = vpack.c.b16 %v2619, %v2618
  %v3118 = vpack.c.b16 %v2621, %v2620
  %v3119 = vpack.c.b16 %v2623, %v2622
  %v3120 = vpack.c.b16 %v2625, %v2624
  %v3121 = vpack.c.b16 %v2627, %v2626
  %v3122 = vpack.c.b16 %v2629, %v2628
  %v3123 = vpack.c.b16 %v2631, %v2630
  %v3124 = vpack.c.b16 %v2633, %v2632
  %v3125 = vpack.c.b16 %v2635, %v2634
  %v3126 = vpack.c.b16 %v2637, %v2636
  %v3127 = vpack.c.b16 %v2639, %v2638
  %v3128 = vpack.c.b16 %v2641, %v2640
  %v3129 = vpack.c.b16 %v2643, %v2642
  %v3130 = vpack.c.b16 %v2645, %v2644
  %v3131 = vpack.c.b16 %v2647, %v2646
  %v3132 = vpack.c.b16 %v2649, %v2648
  %v3133 = vpack.c.b16 %v2651, %v2650
  %v3134 = vpack.c.b16 %v2653, %v2652
  %v3135 = vpack.c.b16 %v2655, %v2654
  %v3136 = vpack.c.b16 %v2657, %v2656
  %v3137 = vpack.c.b16 %v2659, %v2658
  %v3138 = vpack.c.b16 %v2661, %v2660
  %v3139 = vpack.c.b16 %v2663, %v2662
  %v3140 = vpack.c.b16 %v2665, %v2664
  %v3141 = vpack.c.b16 %v2667, %v2666
  %v3142 = vpack.c.b16 %v2669, %v2668
  %v3143 = vpack.c.b16 %v2671, %v2670
  %v3144 = vpack.c.b16 %v2673, %v2672
  %v3145 = vpack.c.b16 %v2675, %v2674
  %v3146 = vpack.c.b16 %v2677, %v2676
  %v3147 = vpack.c.b16 %v2679, %v2678
  %v3148 = vpack.c.b16 %v2681, %v2680
  %v3149 = vpack.c.b16 %v2683, %v2682
  %v3150 = vpack.c.b16 %v2685, %v2684
  %v3151 = vpack.c.b16 %v2687, %v2686
  %v3152 = vpack.c.b16 %v2689, %v2688
  %v3153 = vpack.c.b16 %v2691, %v2690
  %v3154 = vpack.c.b16 %v2693, %v2692
  %v3155 = vpack.c.b16 %v2695, %v2694
  %v3156 = vpack.c.b16 %v2697, %v2696
  %v3157 = vpack.c.b16 %v2699, %v2698
  %v3158 = vpack.c.b16 %v2701, %v2700
  %v3159 = vpack.c.b16 %v2703, %v2702
  %v3160 = vpack.c.b16 %v2705, %v2704
  %v3161 = vpack.c.b16 %v2707, %v2706
  %v3162 = vpack.c.b16 %v2709, %v2708
  %v3163 = vpack.c.b16 %v2711, %v2710
  %v3164 = vpack.c.b16 %v2713, %v2712
  %v3165 = vpack.c.b16 %v2715, %v2714
  %v3166 = vpack.c.b16 %v2717, %v2716
  %v3167 = vpack.c.b16 %v2719, %v2718
  %v3168 = vpack.c.b16 %v2721, %v2720
  %v3169 = vpack.c.b16 %v2723, %v2722
  %v3170 = vpack.c.b16 %v2725, %v2724
  %v3171 = vpack.c.b16 %v2727, %v2726
  %v3172 = vpack.c.b16 %v2729, %v2728
  %v3173 = vpack.c.b16 %v2731, %v2730
  %v3174 = vpack.c.b16 %v2733, %v2732
  %v3175 = vpack.c.b16 %v2735, %v2734
  %v3176 = vpack.c.b16 %v2737, %v2736
  %v3177 = vpack.c.b16 %v2739, %v2738
  %v3178 = vpack.c.b16 %v2741, %v2740
  %v3179 = vpack.c.b16 %v2743, %v2742
  %v3180 = vpack.c.b16 %v2745, %v2744
  %v3181 = vpack.c.b16 %v2747, %v2746
  %v3182 = vpack.c.b16 %v2749, %v2748
  %v3183 = vpack.c.b16 %v2751, %v2750
  %v3184 = vpack.c.b16 %v2753, %v2752
  %v3185 = vpack.c.b16 %v2755, %v2754
  %v3186 = vpack.c.b16 %v2757, %v2756
  %v3187 = vpack.c.b16 %v2759, %v2758
  %v3188 = vpack.c.b16 %v2761, %v2760
  %v3189 = vpack.c.b16 %v2763, %v2762
  %v3190 = vpack.c.b16 %v2765, %v2764
  %v3191 = vpack.c.b16 %v2767, %v2766
  %v3192 = vpack.c.b16 %v2769, %v2768
  %v3193 = vpack.c.b16 %v2771, %v2770
  %v3194 = vpack.c.b16 %v2773, %v2772
  %v3195 = vpack.c.b16 %v2775, %v2774
  %v3196 = vpack.c.b16 %v2777, %v2776
  %v3197 = vpack.c.b16 %v2779, %v2778
  %v3198 = vpack.c.b16 %v2781, %v2780
  %v3199 = vpack.c.b16 %v2783, %v2782
  %v3200 = vpack.c.b16 %v2785, %v2784
  %v3201 = vpack.c.b16 %v2787, %v2786
  %v3202 = vpack.c.b16 %v2789, %v2788
  %v3203 = vpack.c.b16 %v2791, %v2790
  %v3204 = vpack.c.b16 %v2793, %v2792
  %v3205 = vpack.c.b16 %v2795, %v2794
  %v3206 = vpack.c.b16 %v2797, %v2796
  %v3207 = vpack.c.b16 %v2799, %v2798
  %v3208 = vpack.c.b16 %v2801, %v2800
  %v3209 = vpack.c.b16 %v2803, %v2802
  %v3210 = vpack.c.b16 %v2805, %v2804
  %v3211 = vpack.c.b16 %v2807, %v2806
  %v3212 = vpack.c.b16 %v2809, %v2808
  %v3213 = vpack.c.b16 %v2811, %v2810
  %v3214 = vpack.c.b16 %v2813, %v2812
  %v3215 = vpack.c.b16 %v2815, %v2814
  %3616 = vmatprep.subr.bf16.mxu0 0
  %3617 = vmatpush1.bf16.msra.mxu0 %v2816
  %3618 = vmatprep.subr.bf16.mxu0 0
  %3619 = vmatpush1.bf16.msra.mxu0 %v2817
  %3620 = vmatprep.subr.bf16.mxu0 0
  %3621 = vmatpush1.bf16.msra.mxu0 %v2818
  %3622 = vmatprep.subr.bf16.mxu0 0
  %3623 = vmatpush1.bf16.msra.mxu0 %v2819
  %3624 = vmatprep.subr.bf16.mxu0 0
  %3625 = vmatpush1.bf16.msra.mxu0 %v2820
  %3626 = vmatprep.subr.bf16.mxu0 0
  %3627 = vmatpush1.bf16.msra.mxu0 %v2821
  %3628 = vmatprep.subr.bf16.mxu0 0
  %3629 = vmatpush1.bf16.msra.mxu0 %v2822
  %3630 = vmatprep.subr.bf16.mxu0 0
  %3631 = vmatpush1.bf16.msra.mxu0 %v2823
  %3632 = vmatprep.subr.bf16.mxu0 0
  %3633 = vmatpush1.bf16.msra.mxu0 %v2824
  %3634 = vmatprep.subr.bf16.mxu0 0
  %3635 = vmatpush1.bf16.msra.mxu0 %v2825
  %3636 = vmatprep.subr.bf16.mxu0 0
  %3637 = vmatpush1.bf16.msra.mxu0 %v2826
  %3638 = vmatprep.subr.bf16.mxu0 0
  %3639 = vmatpush1.bf16.msra.mxu0 %v2827
  %3640 = vmatprep.subr.bf16.mxu0 0
  %3641 = vmatpush1.bf16.msra.mxu0 %v2828
  %3642 = vmatprep.subr.bf16.mxu0 0
  %3643 = vmatpush1.bf16.msra.mxu0 %v2829
  %3644 = vmatprep.subr.bf16.mxu0 0
  %3645 = vmatpush1.bf16.msra.mxu0 %v2830
  %3646 = vmatprep.subr.bf16.mxu0 0
  %3647 = vmatpush1.bf16.msra.mxu0 %v2831
  %3648 = vmatprep.mubr.bf16.mxu0 %v887
  %3649 = vmatmul.mubr.bf16.gmra.mrb[0].mxu0 %v873
  %v3650 = vpop.f32.mrb[0].mxu0
  %v3651 = vadd.f32 %v841, %v3650
  %v3652 = vpop.f32.mrb[0].mxu0
  %v3653 = vpop.f32.mrb[0].mxu0
  %v3654 = vpop.f32.mrb[0].mxu0
  %3655 = vdwg.mxu0
  %3656 = vmatprep.subr.bf16.mxu0 0
  %3657 = vmatpush1.bf16.msra.mxu0 %v2832
  %3658 = vmatprep.subr.bf16.mxu0 0
  %3659 = vmatpush1.bf16.msra.mxu0 %v2833
  %3660 = vmatprep.subr.bf16.mxu0 0
  %3661 = vmatpush1.bf16.msra.mxu0 %v2834
  %3662 = vmatprep.subr.bf16.mxu0 0
  %3663 = vmatpush1.bf16.msra.mxu0 %v2835
  %3664 = vmatprep.subr.bf16.mxu0 0
  %3665 = vmatpush1.bf16.msra.mxu0 %v2836
  %3666 = vmatprep.subr.bf16.mxu0 0
  %3667 = vmatpush1.bf16.msra.mxu0 %v2837
  %3668 = vmatprep.subr.bf16.mxu0 0
  %3669 = vmatpush1.bf16.msra.mxu0 %v2838
  %3670 = vmatprep.subr.bf16.mxu0 0
  %3671 = vmatpush1.bf16.msra.mxu0 %v2839
  %3672 = vmatprep.subr.bf16.mxu0 0
  %3673 = vmatpush1.bf16.msra.mxu0 %v2840
  %3674 = vmatprep.subr.bf16.mxu0 0
  %3675 = vmatpush1.bf16.msra.mxu0 %v2841
  %3676 = vmatprep.subr.bf16.mxu0 0
  %3677 = vmatpush1.bf16.msra.mxu0 %v2842
  %3678 = vmatprep.subr.bf16.mxu0 0
  %3679 = vmatpush1.bf16.msra.mxu0 %v2843
  %3680 = vmatprep.subr.bf16.mxu0 0
  %3681 = vmatpush1.bf16.msra.mxu0 %v2844
  %3682 = vmatprep.subr.bf16.mxu0 0
  %3683 = vmatpush1.bf16.msra.mxu0 %v2845
  %3684 = vmatprep.subr.bf16.mxu0 0
  %3685 = vmatpush1.bf16.msra.mxu0 %v2846
  %3686 = vmatprep.subr.bf16.mxu0 0
  %3687 = vmatpush1.bf16.msra.mxu0 %v2847
  %3688 = vmatprep.mubr.bf16.mxu0 %v897
  %3689 = vmatmul.mubr.bf16.gmra.mrb[0].mxu0 %v895
  %v3690 = vpop.f32.mrb[0].mxu0
  %v3691 = vadd.f32 %v3651, %v3690
  %v3692 = vpop.f32.mrb[0].mxu0
  %v3693 = vpop.f32.mrb[0].mxu0
  %v3694 = vpop.f32.mrb[0].mxu0
  %3695 = vdwg.mxu0
  %3696 = vmatprep.subr.bf16.mxu0 0
  %3697 = vmatpush1.bf16.msra.mxu0 %v2848
  %3698 = vmatprep.subr.bf16.mxu0 0
  %3699 = vmatpush1.bf16.msra.mxu0 %v2849
  %3700 = vmatprep.subr.bf16.mxu0 0
  %3701 = vmatpush1.bf16.msra.mxu0 %v2850
  %3702 = vmatprep.subr.bf16.mxu0 0
  %3703 = vmatpush1.bf16.msra.mxu0 %v2851
  %3704 = vmatprep.subr.bf16.mxu0 0
  %3705 = vmatpush1.bf16.msra.mxu0 %v2852
  %3706 = vmatprep.subr.bf16.mxu0 0
  %3707 = vmatpush1.bf16.msra.mxu0 %v2853
  %3708 = vmatprep.subr.bf16.mxu0 0
  %3709 = vmatpush1.bf16.msra.mxu0 %v2854
  %3710 = vmatprep.subr.bf16.mxu0 0
  %3711 = vmatpush1.bf16.msra.mxu0 %v2855
  %3712 = vmatprep.subr.bf16.mxu0 0
  %3713 = vmatpush1.bf16.msra.mxu0 %v2856
  %3714 = vmatprep.subr.bf16.mxu0 0
  %3715 = vmatpush1.bf16.msra.mxu0 %v2857
  %3716 = vmatprep.subr.bf16.mxu0 0
  %3717 = vmatpush1.bf16.msra.mxu0 %v2858
  %3718 = vmatprep.subr.bf16.mxu0 0
  %3719 = vmatpush1.bf16.msra.mxu0 %v2859
  %3720 = vmatprep.subr.bf16.mxu0 0
  %3721 = vmatpush1.bf16.msra.mxu0 %v2860
  %3722 = vmatprep.subr.bf16.mxu0 0
  %3723 = vmatpush1.bf16.msra.mxu0 %v2861
  %3724 = vmatprep.subr.bf16.mxu0 0
  %3725 = vmatpush1.bf16.msra.mxu0 %v2862
  %3726 = vmatprep.subr.bf16.mxu0 0
  %3727 = vmatpush1.bf16.msra.mxu0 %v2863
  %3728 = vmatprep.mubr.bf16.mxu0 %v894
  %3729 = vmatmul.mubr.bf16.gmra.mrb[0].mxu0 %v880
  %v3730 = vpop.f32.mrb[0].mxu0
  %v3731 = vadd.f32 %v3691, %v3730
  %v3732 = vpop.f32.mrb[0].mxu0
  %v3733 = vpop.f32.mrb[0].mxu0
  %v3734 = vpop.f32.mrb[0].mxu0
  %3735 = vdwg.mxu0
  %3736 = vmatprep.subr.bf16.mxu0 0
  %3737 = vmatpush1.bf16.msra.mxu0 %v2864
  %3738 = vmatprep.subr.bf16.mxu0 0
  %3739 = vmatpush1.bf16.msra.mxu0 %v2865
  %3740 = vmatprep.subr.bf16.mxu0 0
  %3741 = vmatpush1.bf16.msra.mxu0 %v2866
  %3742 = vmatprep.subr.bf16.mxu0 0
  %3743 = vmatpush1.bf16.msra.mxu0 %v2867
  %3744 = vmatprep.subr.bf16.mxu0 0
  %3745 = vmatpush1.bf16.msra.mxu0 %v2868
  %3746 = vmatprep.subr.bf16.mxu0 0
  %3747 = vmatpush1.bf16.msra.mxu0 %v2869
  %3748 = vmatprep.subr.bf16.mxu0 0
  %3749 = vmatpush1.bf16.msra.mxu0 %v2870
  %3750 = vmatprep.subr.bf16.mxu0 0
  %3751 = vmatpush1.bf16.msra.mxu0 %v2871
  %3752 = vmatprep.subr.bf16.mxu0 0
  %3753 = vmatpush1.bf16.msra.mxu0 %v2872
  %3754 = vmatprep.subr.bf16.mxu0 0
  %3755 = vmatpush1.bf16.msra.mxu0 %v2873
  %3756 = vmatprep.subr.bf16.mxu0 0
  %3757 = vmatpush1.bf16.msra.mxu0 %v2874
  %3758 = vmatprep.subr.bf16.mxu0 0
  %3759 = vmatpush1.bf16.msra.mxu0 %v2875
  %3760 = vmatprep.subr.bf16.mxu0 0
  %3761 = vmatpush1.bf16.msra.mxu0 %v2876
  %3762 = vmatprep.subr.bf16.mxu0 0
  %3763 = vmatpush1.bf16.msra.mxu0 %v2877
  %3764 = vmatprep.subr.bf16.mxu0 0
  %3765 = vmatpush1.bf16.msra.mxu0 %v2878
  %3766 = vmatprep.subr.bf16.mxu0 0
  %3767 = vmatpush1.bf16.msra.mxu0 %v2879
  %3768 = vmatprep.mubr.bf16.mxu0 %v898
  %3769 = vmatmul.mubr.bf16.gmra.mrb[0].mxu0 %v896
  %v3770 = vpop.f32.mrb[0].mxu0
  %v3771 = vadd.f32 %v3731, %v3770
  %v3772 = vpop.f32.mrb[0].mxu0
  %v3773 = vpop.f32.mrb[0].mxu0
  %v3774 = vpop.f32.mrb[0].mxu0
  %3775 = vdwg.mxu0
  %3776 = vmatprep.subr.bf16.mxu0 0
  %3777 = vmatpush1.bf16.msra.mxu0 %v2880
  %3778 = vmatprep.subr.bf16.mxu0 0
  %3779 = vmatpush1.bf16.msra.mxu0 %v2881
  %3780 = vmatprep.subr.bf16.mxu0 0
  %3781 = vmatpush1.bf16.msra.mxu0 %v2882
  %3782 = vmatprep.subr.bf16.mxu0 0
  %3783 = vmatpush1.bf16.msra.mxu0 %v2883
  %3784 = vmatprep.subr.bf16.mxu0 0
  %3785 = vmatpush1.bf16.msra.mxu0 %v2884
  %3786 = vmatprep.subr.bf16.mxu0 0
  %3787 = vmatpush1.bf16.msra.mxu0 %v2885
  %3788 = vmatprep.subr.bf16.mxu0 0
  %3789 = vmatpush1.bf16.msra.mxu0 %v2886
  %3790 = vmatprep.subr.bf16.mxu0 0
  %3791 = vmatpush1.bf16.msra.mxu0 %v2887
  %3792 = vmatprep.subr.bf16.mxu0 0
  %3793 = vmatpush1.bf16.msra.mxu0 %v2888
  %3794 = vmatprep.subr.bf16.mxu0 0
  %3795 = vmatpush1.bf16.msra.mxu0 %v2889
  %3796 = vmatprep.subr.bf16.mxu0 0
  %3797 = vmatpush1.bf16.msra.mxu0 %v2890
  %3798 = vmatprep.subr.bf16.mxu0 0
  %3799 = vmatpush1.bf16.msra.mxu0 %v2891
  %3800 = vmatprep.subr.bf16.mxu0 0
  %3801 = vmatpush1.bf16.msra.mxu0 %v2892
  %3802 = vmatprep.subr.bf16.mxu0 0
  %3803 = vmatpush1.bf16.msra.mxu0 %v2893
  %3804 = vmatprep.subr.bf16.mxu0 0
  %3805 = vmatpush1.bf16.msra.mxu0 %v2894
  %3806 = vmatprep.subr.bf16.mxu0 0
  %3807 = vmatpush1.bf16.msra.mxu0 %v2895
  %3808 = vmatprep.mubr.bf16.mxu0 %v936
  %3809 = vmatmul.mubr.bf16.gmra.mrb[0].mxu0 %v922
  %v3810 = vpop.f32.mrb[0].mxu0
  %v3811 = vadd.f32 %v3771, %v3810
  %v3812 = vpop.f32.mrb[0].mxu0
  %v3813 = vpop.f32.mrb[0].mxu0
  %v3814 = vpop.f32.mrb[0].mxu0
  %3815 = vdwg.mxu0
  %3816 = vmatprep.subr.bf16.mxu0 0
  %3817 = vmatpush1.bf16.msra.mxu0 %v2896
  %3818 = vmatprep.subr.bf16.mxu0 0
  %3819 = vmatpush1.bf16.msra.mxu0 %v2897
  %3820 = vmatprep.subr.bf16.mxu0 0
  %3821 = vmatpush1.bf16.msra.mxu0 %v2898
  %3822 = vmatprep.subr.bf16.mxu0 0
  %3823 = vmatpush1.bf16.msra.mxu0 %v2899
  %3824 = vmatprep.subr.bf16.mxu0 0
  %3825 = vmatpush1.bf16.msra.mxu0 %v2900
  %3826 = vmatprep.subr.bf16.mxu0 0
  %3827 = vmatpush1.bf16.msra.mxu0 %v2901
  %3828 = vmatprep.subr.bf16.mxu0 0
  %3829 = vmatpush1.bf16.msra.mxu0 %v2902
  %3830 = vmatprep.subr.bf16.mxu0 0
  %3831 = vmatpush1.bf16.msra.mxu0 %v2903
  %3832 = vmatprep.subr.bf16.mxu0 0
  %3833 = vmatpush1.bf16.msra.mxu0 %v2904
  %3834 = vmatprep.subr.bf16.mxu0 0
  %3835 = vmatpush1.bf16.msra.mxu0 %v2905
  %3836 = vmatprep.subr.bf16.mxu0 0
  %3837 = vmatpush1.bf16.msra.mxu0 %v2906
  %3838 = vmatprep.subr.bf16.mxu0 0
  %3839 = vmatpush1.bf16.msra.mxu0 %v2907
  %3840 = vmatprep.subr.bf16.mxu0 0
  %3841 = vmatpush1.bf16.msra.mxu0 %v2908
  %3842 = vmatprep.subr.bf16.mxu0 0
  %3843 = vmatpush1.bf16.msra.mxu0 %v2909
  %3844 = vmatprep.subr.bf16.mxu0 0
  %3845 = vmatpush1.bf16.msra.mxu0 %v2910
  %3846 = vmatprep.subr.bf16.mxu0 0
  %3847 = vmatpush1.bf16.msra.mxu0 %v2911
  %3848 = vmatprep.mubr.bf16.mxu0 %v946
  %3849 = vmatmul.mubr.bf16.gmra.mrb[0].mxu0 %v944
  %v3850 = vpop.f32.mrb[0].mxu0
  %v3851 = vadd.f32 %v3811, %v3850
  %v3852 = vpop.f32.mrb[0].mxu0
  %v3853 = vpop.f32.mrb[0].mxu0
  %v3854 = vpop.f32.mrb[0].mxu0
  %3855 = vdwg.mxu0
  %3856 = vmatprep.subr.bf16.mxu0 0
  %3857 = vmatpush1.bf16.msra.mxu0 %v2912
  %3858 = vmatprep.subr.bf16.mxu0 0
  %3859 = vmatpush1.bf16.msra.mxu0 %v2913
  %3860 = vmatprep.subr.bf16.mxu0 0
  %3861 = vmatpush1.bf16.msra.mxu0 %v2914
  %3862 = vmatprep.subr.bf16.mxu0 0
  %3863 = vmatpush1.bf16.msra.mxu0 %v2915
  %3864 = vmatprep.subr.bf16.mxu0 0
  %3865 = vmatpush1.bf16.msra.mxu0 %v2916
  %3866 = vmatprep.subr.bf16.mxu0 0
  %3867 = vmatpush1.bf16.msra.mxu0 %v2917
  %3868 = vmatprep.subr.bf16.mxu0 0
  %3869 = vmatpush1.bf16.msra.mxu0 %v2918
  %3870 = vmatprep.subr.bf16.mxu0 0
  %3871 = vmatpush1.bf16.msra.mxu0 %v2919
  %3872 = vmatprep.subr.bf16.mxu0 0
  %3873 = vmatpush1.bf16.msra.mxu0 %v2920
  %3874 = vmatprep.subr.bf16.mxu0 0
  %3875 = vmatpush1.bf16.msra.mxu0 %v2921
  %3876 = vmatprep.subr.bf16.mxu0 0
  %3877 = vmatpush1.bf16.msra.mxu0 %v2922
  %3878 = vmatprep.subr.bf16.mxu0 0
  %3879 = vmatpush1.bf16.msra.mxu0 %v2923
  %3880 = vmatprep.subr.bf16.mxu0 0
  %3881 = vmatpush1.bf16.msra.mxu0 %v2924
  %3882 = vmatprep.subr.bf16.mxu0 0
  %3883 = vmatpush1.bf16.msra.mxu0 %v2925
  %3884 = vmatprep.subr.bf16.mxu0 0
  %3885 = vmatpush1.bf16.msra.mxu0 %v2926
  %3886 = vmatprep.subr.bf16.mxu0 0
  %3887 = vmatpush1.bf16.msra.mxu0 %v2927
  %3888 = vmatprep.mubr.bf16.mxu0 %v943
  %3889 = vmatmul.mubr.bf16.gmra.mrb[0].mxu0 %v929
  %v3890 = vpop.f32.mrb[0].mxu0
  %v3891 = vadd.f32 %v3851, %v3890
  %v3892 = vpop.f32.mrb[0].mxu0
  %v3893 = vpop.f32.mrb[0].mxu0
  %v3894 = vpop.f32.mrb[0].mxu0
  %3895 = vdwg.mxu0
  %3896 = vmatprep.subr.bf16.mxu0 0
  %3897 = vmatpush1.bf16.msra.mxu0 %v2928
  %3898 = vmatprep.subr.bf16.mxu0 0
  %3899 = vmatpush1.bf16.msra.mxu0 %v2929
  %3900 = vmatprep.subr.bf16.mxu0 0
  %3901 = vmatpush1.bf16.msra.mxu0 %v2930
  %3902 = vmatprep.subr.bf16.mxu0 0
  %3903 = vmatpush1.bf16.msra.mxu0 %v2931
  %3904 = vmatprep.subr.bf16.mxu0 0
  %3905 = vmatpush1.bf16.msra.mxu0 %v2932
  %3906 = vmatprep.subr.bf16.mxu0 0
  %3907 = vmatpush1.bf16.msra.mxu0 %v2933
  %3908 = vmatprep.subr.bf16.mxu0 0
  %3909 = vmatpush1.bf16.msra.mxu0 %v2934
  %3910 = vmatprep.subr.bf16.mxu0 0
  %3911 = vmatpush1.bf16.msra.mxu0 %v2935
  %3912 = vmatprep.subr.bf16.mxu0 0
  %3913 = vmatpush1.bf16.msra.mxu0 %v2936
  %3914 = vmatprep.subr.bf16.mxu0 0
  %3915 = vmatpush1.bf16.msra.mxu0 %v2937
  %3916 = vmatprep.subr.bf16.mxu0 0
  %3917 = vmatpush1.bf16.msra.mxu0 %v2938
  %3918 = vmatprep.subr.bf16.mxu0 0
  %3919 = vmatpush1.bf16.msra.mxu0 %v2939
  %3920 = vmatprep.subr.bf16.mxu0 0
  %3921 = vmatpush1.bf16.msra.mxu0 %v2940
  %3922 = vmatprep.subr.bf16.mxu0 0
  %3923 = vmatpush1.bf16.msra.mxu0 %v2941
  %3924 = vmatprep.subr.bf16.mxu0 0
  %3925 = vmatpush1.bf16.msra.mxu0 %v2942
  %3926 = vmatprep.subr.bf16.mxu0 0
  %3927 = vmatpush1.bf16.msra.mxu0 %v2943
  %3928 = vmatprep.mubr.bf16.mxu0 %v947
  %3929 = vmatmul.mubr.bf16.gmra.mrb[0].mxu0 %v945
  %v3930 = vpop.f32.mrb[0].mxu0
  %v3931 = vadd.f32 %v3891, %v3930
  %v3932 = vpop.f32.mrb[0].mxu0
  %v3933 = vpop.f32.mrb[0].mxu0
  %v3934 = vpop.f32.mrb[0].mxu0
  %3935 = vdwg.mxu0
  %3936 = vmatprep.subr.bf16.mxu0 0
  %3937 = vmatpush1.bf16.msra.mxu0 %v2944
  %3938 = vmatprep.subr.bf16.mxu0 0
  %3939 = vmatpush1.bf16.msra.mxu0 %v2945
  %3940 = vmatprep.subr.bf16.mxu0 0
  %3941 = vmatpush1.bf16.msra.mxu0 %v2946
  %3942 = vmatprep.subr.bf16.mxu0 0
  %3943 = vmatpush1.bf16.msra.mxu0 %v2947
  %3944 = vmatprep.subr.bf16.mxu0 0
  %3945 = vmatpush1.bf16.msra.mxu0 %v2948
  %3946 = vmatprep.subr.bf16.mxu0 0
  %3947 = vmatpush1.bf16.msra.mxu0 %v2949
  %3948 = vmatprep.subr.bf16.mxu0 0
  %3949 = vmatpush1.bf16.msra.mxu0 %v2950
  %3950 = vmatprep.subr.bf16.mxu0 0
  %3951 = vmatpush1.bf16.msra.mxu0 %v2951
  %3952 = vmatprep.subr.bf16.mxu0 0
  %3953 = vmatpush1.bf16.msra.mxu0 %v2952
  %3954 = vmatprep.subr.bf16.mxu0 0
  %3955 = vmatpush1.bf16.msra.mxu0 %v2953
  %3956 = vmatprep.subr.bf16.mxu0 0
  %3957 = vmatpush1.bf16.msra.mxu0 %v2954
  %3958 = vmatprep.subr.bf16.mxu0 0
  %3959 = vmatpush1.bf16.msra.mxu0 %v2955
  %3960 = vmatprep.subr.bf16.mxu0 0
  %3961 = vmatpush1.bf16.msra.mxu0 %v2956
  %3962 = vmatprep.subr.bf16.mxu0 0
  %3963 = vmatpush1.bf16.msra.mxu0 %v2957
  %3964 = vmatprep.subr.bf16.mxu0 0
  %3965 = vmatpush1.bf16.msra.mxu0 %v2958
  %3966 = vmatprep.subr.bf16.mxu0 0
  %3967 = vmatpush1.bf16.msra.mxu0 %v2959
  %3968 = vmatprep.mubr.bf16.mxu0 %v985
  %3969 = vmatmul.mubr.bf16.gmra.mrb[0].mxu0 %v971
  %v3970 = vpop.f32.mrb[0].mxu0
  %v3971 = vadd.f32 %v3931, %v3970
  %v3972 = vpop.f32.mrb[0].mxu0
  %v3973 = vpop.f32.mrb[0].mxu0
  %v3974 = vpop.f32.mrb[0].mxu0
  %3975 = vdwg.mxu0
  %3976 = vmatprep.subr.bf16.mxu0 0
  %3977 = vmatpush1.bf16.msra.mxu0 %v2960
  %3978 = vmatprep.subr.bf16.mxu0 0
  %3979 = vmatpush1.bf16.msra.mxu0 %v2961
  %3980 = vmatprep.subr.bf16.mxu0 0
  %3981 = vmatpush1.bf16.msra.mxu0 %v2962
  %3982 = vmatprep.subr.bf16.mxu0 0
  %3983 = vmatpush1.bf16.msra.mxu0 %v2963
  %3984 = vmatprep.subr.bf16.mxu0 0
  %3985 = vmatpush1.bf16.msra.mxu0 %v2964
  %3986 = vmatprep.subr.bf16.mxu0 0
  %3987 = vmatpush1.bf16.msra.mxu0 %v2965
  %3988 = vmatprep.subr.bf16.mxu0 0
  %3989 = vmatpush1.bf16.msra.mxu0 %v2966
  %3990 = vmatprep.subr.bf16.mxu0 0
  %3991 = vmatpush1.bf16.msra.mxu0 %v2967
  %3992 = vmatprep.subr.bf16.mxu0 0
  %3993 = vmatpush1.bf16.msra.mxu0 %v2968
  %3994 = vmatprep.subr.bf16.mxu0 0
  %3995 = vmatpush1.bf16.msra.mxu0 %v2969
  %3996 = vmatprep.subr.bf16.mxu0 0
  %3997 = vmatpush1.bf16.msra.mxu0 %v2970
  %3998 = vmatprep.subr.bf16.mxu0 0
  %3999 = vmatpush1.bf16.msra.mxu0 %v2971
  %4000 = vmatprep.subr.bf16.mxu0 0
  %4001 = vmatpush1.bf16.msra.mxu0 %v2972
  %4002 = vmatprep.subr.bf16.mxu0 0
  %4003 = vmatpush1.bf16.msra.mxu0 %v2973
  %4004 = vmatprep.subr.bf16.mxu0 0
  %4005 = vmatpush1.bf16.msra.mxu0 %v2974
  %4006 = vmatprep.subr.bf16.mxu0 0
  %4007 = vmatpush1.bf16.msra.mxu0 %v2975
  %4008 = vmatprep.mubr.bf16.mxu0 %v995
  %4009 = vmatmul.mubr.bf16.gmra.mrb[0].mxu0 %v993
  %v4010 = vpop.f32.mrb[0].mxu0
  %v4011 = vadd.f32 %v3971, %v4010
  %v4012 = vpop.f32.mrb[0].mxu0
  %v4013 = vpop.f32.mrb[0].mxu0
  %v4014 = vpop.f32.mrb[0].mxu0
  %4015 = vdwg.mxu0
  %4016 = vmatprep.subr.bf16.mxu0 0
  %4017 = vmatpush1.bf16.msra.mxu0 %v2976
  %4018 = vmatprep.subr.bf16.mxu0 0
  %4019 = vmatpush1.bf16.msra.mxu0 %v2977
  %4020 = vmatprep.subr.bf16.mxu0 0
  %4021 = vmatpush1.bf16.msra.mxu0 %v2978
  %4022 = vmatprep.subr.bf16.mxu0 0
  %4023 = vmatpush1.bf16.msra.mxu0 %v2979
  %4024 = vmatprep.subr.bf16.mxu0 0
  %4025 = vmatpush1.bf16.msra.mxu0 %v2980
  %4026 = vmatprep.subr.bf16.mxu0 0
  %4027 = vmatpush1.bf16.msra.mxu0 %v2981
  %4028 = vmatprep.subr.bf16.mxu0 0
  %4029 = vmatpush1.bf16.msra.mxu0 %v2982
  %4030 = vmatprep.subr.bf16.mxu0 0
  %4031 = vmatpush1.bf16.msra.mxu0 %v2983
  %4032 = vmatprep.subr.bf16.mxu0 0
  %4033 = vmatpush1.bf16.msra.mxu0 %v2984
  %4034 = vmatprep.subr.bf16.mxu0 0
  %4035 = vmatpush1.bf16.msra.mxu0 %v2985
  %4036 = vmatprep.subr.bf16.mxu0 0
  %4037 = vmatpush1.bf16.msra.mxu0 %v2986
  %4038 = vmatprep.subr.bf16.mxu0 0
  %4039 = vmatpush1.bf16.msra.mxu0 %v2987
  %4040 = vmatprep.subr.bf16.mxu0 0
  %4041 = vmatpush1.bf16.msra.mxu0 %v2988
  %4042 = vmatprep.subr.bf16.mxu0 0
  %4043 = vmatpush1.bf16.msra.mxu0 %v2989
  %4044 = vmatprep.subr.bf16.mxu0 0
  %4045 = vmatpush1.bf16.msra.mxu0 %v2990
  %4046 = vmatprep.subr.bf16.mxu0 0
  %4047 = vmatpush1.bf16.msra.mxu0 %v2991
  %4048 = vmatprep.mubr.bf16.mxu0 %v992
  %4049 = vmatmul.mubr.bf16.gmra.mrb[0].mxu0 %v978
  %v4050 = vpop.f32.mrb[0].mxu0
  %v4051 = vadd.f32 %v4011, %v4050
  %v4052 = vpop.f32.mrb[0].mxu0
  %v4053 = vpop.f32.mrb[0].mxu0
  %v4054 = vpop.f32.mrb[0].mxu0
  %4055 = vdwg.mxu0
  %4056 = vmatprep.subr.bf16.mxu0 0
  %4057 = vmatpush1.bf16.msra.mxu0 %v2992
  %4058 = vmatprep.subr.bf16.mxu0 0
  %4059 = vmatpush1.bf16.msra.mxu0 %v2993
  %4060 = vmatprep.subr.bf16.mxu0 0
  %4061 = vmatpush1.bf16.msra.mxu0 %v2994
  %4062 = vmatprep.subr.bf16.mxu0 0
  %4063 = vmatpush1.bf16.msra.mxu0 %v2995
  %4064 = vmatprep.subr.bf16.mxu0 0
  %4065 = vmatpush1.bf16.msra.mxu0 %v2996
  %4066 = vmatprep.subr.bf16.mxu0 0
  %4067 = vmatpush1.bf16.msra.mxu0 %v2997
  %4068 = vmatprep.subr.bf16.mxu0 0
  %4069 = vmatpush1.bf16.msra.mxu0 %v2998
  %4070 = vmatprep.subr.bf16.mxu0 0
  %4071 = vmatpush1.bf16.msra.mxu0 %v2999
  %4072 = vmatprep.subr.bf16.mxu0 0
  %4073 = vmatpush1.bf16.msra.mxu0 %v3000
  %4074 = vmatprep.subr.bf16.mxu0 0
  %4075 = vmatpush1.bf16.msra.mxu0 %v3001
  %4076 = vmatprep.subr.bf16.mxu0 0
  %4077 = vmatpush1.bf16.msra.mxu0 %v3002
  %4078 = vmatprep.subr.bf16.mxu0 0
  %4079 = vmatpush1.bf16.msra.mxu0 %v3003
  %4080 = vmatprep.subr.bf16.mxu0 0
  %4081 = vmatpush1.bf16.msra.mxu0 %v3004
  %4082 = vmatprep.subr.bf16.mxu0 0
  %4083 = vmatpush1.bf16.msra.mxu0 %v3005
  %4084 = vmatprep.subr.bf16.mxu0 0
  %4085 = vmatpush1.bf16.msra.mxu0 %v3006
  %4086 = vmatprep.subr.bf16.mxu0 0
  %4087 = vmatpush1.bf16.msra.mxu0 %v3007
  %4088 = vmatprep.mubr.bf16.mxu0 %v996
  %4089 = vmatmul.mubr.bf16.gmra.mrb[0].mxu0 %v994
  %v4090 = vpop.f32.mrb[0].mxu0
  %v4091 = vadd.f32 %v4051, %v4090
  %v4092 = vpop.f32.mrb[0].mxu0
  %v4093 = vpop.f32.mrb[0].mxu0
  %v4094 = vpop.f32.mrb[0].mxu0
  %4095 = vdwg.mxu0
  %4096 = vmatprep.subr.bf16.mxu0 0
  %4097 = vmatpush1.bf16.msra.mxu0 %v3008
  %4098 = vmatprep.subr.bf16.mxu0 0
  %4099 = vmatpush1.bf16.msra.mxu0 %v3009
  %4100 = vmatprep.subr.bf16.mxu0 0
  %4101 = vmatpush1.bf16.msra.mxu0 %v3010
  %4102 = vmatprep.subr.bf16.mxu0 0
  %4103 = vmatpush1.bf16.msra.mxu0 %v3011
  %4104 = vmatprep.subr.bf16.mxu0 0
  %4105 = vmatpush1.bf16.msra.mxu0 %v3012
  %4106 = vmatprep.subr.bf16.mxu0 0
  %4107 = vmatpush1.bf16.msra.mxu0 %v3013
  %4108 = vmatprep.subr.bf16.mxu0 0
  %4109 = vmatpush1.bf16.msra.mxu0 %v3014
  %4110 = vmatprep.subr.bf16.mxu0 0
  %4111 = vmatpush1.bf16.msra.mxu0 %v3015
  %4112 = vmatprep.subr.bf16.mxu0 0
  %4113 = vmatpush1.bf16.msra.mxu0 %v3016
  %4114 = vmatprep.subr.bf16.mxu0 0
  %4115 = vmatpush1.bf16.msra.mxu0 %v3017
  %4116 = vmatprep.subr.bf16.mxu0 0
  %4117 = vmatpush1.bf16.msra.mxu0 %v3018
  %4118 = vmatprep.subr.bf16.mxu0 0
  %4119 = vmatpush1.bf16.msra.mxu0 %v3019
  %4120 = vmatprep.subr.bf16.mxu0 0
  %4121 = vmatpush1.bf16.msra.mxu0 %v3020
  %4122 = vmatprep.subr.bf16.mxu0 0
  %4123 = vmatpush1.bf16.msra.mxu0 %v3021
  %4124 = vmatprep.subr.bf16.mxu0 0
  %4125 = vmatpush1.bf16.msra.mxu0 %v3022
  %4126 = vmatprep.subr.bf16.mxu0 0
  %4127 = vmatpush1.bf16.msra.mxu0 %v3023
  %4128 = vmatprep.mubr.bf16.mxu0 %v1034
  %4129 = vmatmul.mubr.bf16.gmra.mrb[0].mxu0 %v1020
  %v4130 = vpop.f32.mrb[0].mxu0
  %v4131 = vadd.f32 %v4091, %v4130
  %v4132 = vpop.f32.mrb[0].mxu0
  %v4133 = vpop.f32.mrb[0].mxu0
  %v4134 = vpop.f32.mrb[0].mxu0
  %4135 = vdwg.mxu0
  %4136 = vmatprep.subr.bf16.mxu0 0
  %4137 = vmatpush1.bf16.msra.mxu0 %v3024
  %4138 = vmatprep.subr.bf16.mxu0 0
  %4139 = vmatpush1.bf16.msra.mxu0 %v3025
  %4140 = vmatprep.subr.bf16.mxu0 0
  %4141 = vmatpush1.bf16.msra.mxu0 %v3026
  %4142 = vmatprep.subr.bf16.mxu0 0
  %4143 = vmatpush1.bf16.msra.mxu0 %v3027
  %4144 = vmatprep.subr.bf16.mxu0 0
  %4145 = vmatpush1.bf16.msra.mxu0 %v3028
  %4146 = vmatprep.subr.bf16.mxu0 0
  %4147 = vmatpush1.bf16.msra.mxu0 %v3029
  %4148 = vmatprep.subr.bf16.mxu0 0
  %4149 = vmatpush1.bf16.msra.mxu0 %v3030
  %4150 = vmatprep.subr.bf16.mxu0 0
  %4151 = vmatpush1.bf16.msra.mxu0 %v3031
  %4152 = vmatprep.subr.bf16.mxu0 0
  %4153 = vmatpush1.bf16.msra.mxu0 %v3032
  %4154 = vmatprep.subr.bf16.mxu0 0
  %4155 = vmatpush1.bf16.msra.mxu0 %v3033
  %4156 = vmatprep.subr.bf16.mxu0 0
  %4157 = vmatpush1.bf16.msra.mxu0 %v3034
  %4158 = vmatprep.subr.bf16.mxu0 0
  %4159 = vmatpush1.bf16.msra.mxu0 %v3035
  %4160 = vmatprep.subr.bf16.mxu0 0
  %4161 = vmatpush1.bf16.msra.mxu0 %v3036
  %4162 = vmatprep.subr.bf16.mxu0 0
  %4163 = vmatpush1.bf16.msra.mxu0 %v3037
  %4164 = vmatprep.subr.bf16.mxu0 0
  %4165 = vmatpush1.bf16.msra.mxu0 %v3038
  %4166 = vmatprep.subr.bf16.mxu0 0
  %4167 = vmatpush1.bf16.msra.mxu0 %v3039
  %4168 = vmatprep.mubr.bf16.mxu0 %v1044
  %4169 = vmatmul.mubr.bf16.gmra.mrb[0].mxu0 %v1042
  %v4170 = vpop.f32.mrb[0].mxu0
  %v4171 = vadd.f32 %v4131, %v4170
  %v4172 = vpop.f32.mrb[0].mxu0
  %v4173 = vpop.f32.mrb[0].mxu0
  %v4174 = vpop.f32.mrb[0].mxu0
  %4175 = vdwg.mxu0
  %4176 = vmatprep.subr.bf16.mxu0 0
  %4177 = vmatpush1.bf16.msra.mxu0 %v3040
  %4178 = vmatprep.subr.bf16.mxu0 0
  %4179 = vmatpush1.bf16.msra.mxu0 %v3041
  %4180 = vmatprep.subr.bf16.mxu0 0
  %4181 = vmatpush1.bf16.msra.mxu0 %v3042
  %4182 = vmatprep.subr.bf16.mxu0 0
  %4183 = vmatpush1.bf16.msra.mxu0 %v3043
  %4184 = vmatprep.subr.bf16.mxu0 0
  %4185 = vmatpush1.bf16.msra.mxu0 %v3044
  %4186 = vmatprep.subr.bf16.mxu0 0
  %4187 = vmatpush1.bf16.msra.mxu0 %v3045
  %4188 = vmatprep.subr.bf16.mxu0 0
  %4189 = vmatpush1.bf16.msra.mxu0 %v3046
  %4190 = vmatprep.subr.bf16.mxu0 0
  %4191 = vmatpush1.bf16.msra.mxu0 %v3047
  %4192 = vmatprep.subr.bf16.mxu0 0
  %4193 = vmatpush1.bf16.msra.mxu0 %v3048
  %4194 = vmatprep.subr.bf16.mxu0 0
  %4195 = vmatpush1.bf16.msra.mxu0 %v3049
  %4196 = vmatprep.subr.bf16.mxu0 0
  %4197 = vmatpush1.bf16.msra.mxu0 %v3050
  %4198 = vmatprep.subr.bf16.mxu0 0
  %4199 = vmatpush1.bf16.msra.mxu0 %v3051
  %4200 = vmatprep.subr.bf16.mxu0 0
  %4201 = vmatpush1.bf16.msra.mxu0 %v3052
  %4202 = vmatprep.subr.bf16.mxu0 0
  %4203 = vmatpush1.bf16.msra.mxu0 %v3053
  %4204 = vmatprep.subr.bf16.mxu0 0
  %4205 = vmatpush1.bf16.msra.mxu0 %v3054
  %4206 = vmatprep.subr.bf16.mxu0 0
  %4207 = vmatpush1.bf16.msra.mxu0 %v3055
  %4208 = vmatprep.mubr.bf16.mxu0 %v1041
  %4209 = vmatmul.mubr.bf16.gmra.mrb[0].mxu0 %v1027
  %v4210 = vpop.f32.mrb[0].mxu0
  %v4211 = vadd.f32 %v4171, %v4210
  %v4212 = vpop.f32.mrb[0].mxu0
  %v4213 = vpop.f32.mrb[0].mxu0
  %v4214 = vpop.f32.mrb[0].mxu0
  %4215 = vdwg.mxu0
  %4216 = vmatprep.subr.bf16.mxu0 0
  %4217 = vmatpush1.bf16.msra.mxu0 %v3056
  %4218 = vmatprep.subr.bf16.mxu0 0
  %4219 = vmatpush1.bf16.msra.mxu0 %v3057
  %4220 = vmatprep.subr.bf16.mxu0 0
  %4221 = vmatpush1.bf16.msra.mxu0 %v3058
  %4222 = vmatprep.subr.bf16.mxu0 0
  %4223 = vmatpush1.bf16.msra.mxu0 %v3059
  %4224 = vmatprep.subr.bf16.mxu0 0
  %4225 = vmatpush1.bf16.msra.mxu0 %v3060
  %4226 = vmatprep.subr.bf16.mxu0 0
  %4227 = vmatpush1.bf16.msra.mxu0 %v3061
  %4228 = vmatprep.subr.bf16.mxu0 0
  %4229 = vmatpush1.bf16.msra.mxu0 %v3062
  %4230 = vmatprep.subr.bf16.mxu0 0
  %4231 = vmatpush1.bf16.msra.mxu0 %v3063
  %4232 = vmatprep.subr.bf16.mxu0 0
  %4233 = vmatpush1.bf16.msra.mxu0 %v3064
  %4234 = vmatprep.subr.bf16.mxu0 0
  %4235 = vmatpush1.bf16.msra.mxu0 %v3065
  %4236 = vmatprep.subr.bf16.mxu0 0
  %4237 = vmatpush1.bf16.msra.mxu0 %v3066
  %4238 = vmatprep.subr.bf16.mxu0 0
  %4239 = vmatpush1.bf16.msra.mxu0 %v3067
  %4240 = vmatprep.subr.bf16.mxu0 0
  %4241 = vmatpush1.bf16.msra.mxu0 %v3068
  %4242 = vmatprep.subr.bf16.mxu0 0
  %4243 = vmatpush1.bf16.msra.mxu0 %v3069
  %4244 = vmatprep.subr.bf16.mxu0 0
  %4245 = vmatpush1.bf16.msra.mxu0 %v3070
  %4246 = vmatprep.subr.bf16.mxu0 0
  %4247 = vmatpush1.bf16.msra.mxu0 %v3071
  %4248 = vmatprep.mubr.bf16.mxu0 %v1045
  %4249 = vmatmul.mubr.bf16.gmra.mrb[0].mxu0 %v1043
  %v4250 = vpop.f32.mrb[0].mxu0
  %v4251 = vadd.f32 %v4211, %v4250
  %v4252 = vpop.f32.mrb[0].mxu0
  %v4253 = vpop.f32.mrb[0].mxu0
  %v4254 = vpop.f32.mrb[0].mxu0
  %4255 = vdwg.mxu0
  %4256 = vmatprep.subr.bf16.mxu0 0
  %4257 = vmatpush1.bf16.msra.mxu0 %v3072
  %4258 = vmatprep.subr.bf16.mxu0 0
  %4259 = vmatpush1.bf16.msra.mxu0 %v3073
  %4260 = vmatprep.subr.bf16.mxu0 0
  %4261 = vmatpush1.bf16.msra.mxu0 %v3074
  %4262 = vmatprep.subr.bf16.mxu0 0
  %4263 = vmatpush1.bf16.msra.mxu0 %v3075
  %4264 = vmatprep.subr.bf16.mxu0 0
  %4265 = vmatpush1.bf16.msra.mxu0 %v3076
  %4266 = vmatprep.subr.bf16.mxu0 0
  %4267 = vmatpush1.bf16.msra.mxu0 %v3077
  %4268 = vmatprep.subr.bf16.mxu0 0
  %4269 = vmatpush1.bf16.msra.mxu0 %v3078
  %4270 = vmatprep.subr.bf16.mxu0 0
  %4271 = vmatpush1.bf16.msra.mxu0 %v3079
  %4272 = vmatprep.subr.bf16.mxu0 0
  %4273 = vmatpush1.bf16.msra.mxu0 %v3080
  %4274 = vmatprep.subr.bf16.mxu0 0
  %4275 = vmatpush1.bf16.msra.mxu0 %v3081
  %4276 = vmatprep.subr.bf16.mxu0 0
  %4277 = vmatpush1.bf16.msra.mxu0 %v3082
  %4278 = vmatprep.subr.bf16.mxu0 0
  %4279 = vmatpush1.bf16.msra.mxu0 %v3083
  %4280 = vmatprep.subr.bf16.mxu0 0
  %4281 = vmatpush1.bf16.msra.mxu0 %v3084
  %4282 = vmatprep.subr.bf16.mxu0 0
  %4283 = vmatpush1.bf16.msra.mxu0 %v3085
  %4284 = vmatprep.subr.bf16.mxu0 0
  %4285 = vmatpush1.bf16.msra.mxu0 %v3086
  %4286 = vmatprep.subr.bf16.mxu0 0
  %4287 = vmatpush1.bf16.msra.mxu0 %v3087
  %4288 = vmatprep.mubr.bf16.mxu0 %v1083
  %4289 = vmatmul.mubr.bf16.gmra.mrb[0].mxu0 %v1069
  %v4290 = vpop.f32.mrb[0].mxu0
  %v4291 = vadd.f32 %v4251, %v4290
  %v4292 = vpop.f32.mrb[0].mxu0
  %v4293 = vpop.f32.mrb[0].mxu0
  %v4294 = vpop.f32.mrb[0].mxu0
  %4295 = vdwg.mxu0
  %4296 = vmatprep.subr.bf16.mxu0 0
  %4297 = vmatpush1.bf16.msra.mxu0 %v3088
  %4298 = vmatprep.subr.bf16.mxu0 0
  %4299 = vmatpush1.bf16.msra.mxu0 %v3089
  %4300 = vmatprep.subr.bf16.mxu0 0
  %4301 = vmatpush1.bf16.msra.mxu0 %v3090
  %4302 = vmatprep.subr.bf16.mxu0 0
  %4303 = vmatpush1.bf16.msra.mxu0 %v3091
  %4304 = vmatprep.subr.bf16.mxu0 0
  %4305 = vmatpush1.bf16.msra.mxu0 %v3092
  %4306 = vmatprep.subr.bf16.mxu0 0
  %4307 = vmatpush1.bf16.msra.mxu0 %v3093
  %4308 = vmatprep.subr.bf16.mxu0 0
  %4309 = vmatpush1.bf16.msra.mxu0 %v3094
  %4310 = vmatprep.subr.bf16.mxu0 0
  %4311 = vmatpush1.bf16.msra.mxu0 %v3095
  %4312 = vmatprep.subr.bf16.mxu0 0
  %4313 = vmatpush1.bf16.msra.mxu0 %v3096
  %4314 = vmatprep.subr.bf16.mxu0 0
  %4315 = vmatpush1.bf16.msra.mxu0 %v3097
  %4316 = vmatprep.subr.bf16.mxu0 0
  %4317 = vmatpush1.bf16.msra.mxu0 %v3098
  %4318 = vmatprep.subr.bf16.mxu0 0
  %4319 = vmatpush1.bf16.msra.mxu0 %v3099
  %4320 = vmatprep.subr.bf16.mxu0 0
  %4321 = vmatpush1.bf16.msra.mxu0 %v3100
  %4322 = vmatprep.subr.bf16.mxu0 0
  %4323 = vmatpush1.bf16.msra.mxu0 %v3101
  %4324 = vmatprep.subr.bf16.mxu0 0
  %4325 = vmatpush1.bf16.msra.mxu0 %v3102
  %4326 = vmatprep.subr.bf16.mxu0 0
  %4327 = vmatpush1.bf16.msra.mxu0 %v3103
  %4328 = vmatprep.mubr.bf16.mxu0 %v1093
  %4329 = vmatmul.mubr.bf16.gmra.mrb[0].mxu0 %v1091
  %v4330 = vpop.f32.mrb[0].mxu0
  %v4331 = vadd.f32 %v4291, %v4330
  %v4332 = vpop.f32.mrb[0].mxu0
  %v4333 = vpop.f32.mrb[0].mxu0
  %v4334 = vpop.f32.mrb[0].mxu0
  %4335 = vdwg.mxu0
  %4336 = vmatprep.subr.bf16.mxu0 0
  %4337 = vmatpush1.bf16.msra.mxu0 %v3104
  %4338 = vmatprep.subr.bf16.mxu0 0
  %4339 = vmatpush1.bf16.msra.mxu0 %v3105
  %4340 = vmatprep.subr.bf16.mxu0 0
  %4341 = vmatpush1.bf16.msra.mxu0 %v3106
  %4342 = vmatprep.subr.bf16.mxu0 0
  %4343 = vmatpush1.bf16.msra.mxu0 %v3107
  %4344 = vmatprep.subr.bf16.mxu0 0
  %4345 = vmatpush1.bf16.msra.mxu0 %v3108
  %4346 = vmatprep.subr.bf16.mxu0 0
  %4347 = vmatpush1.bf16.msra.mxu0 %v3109
  %4348 = vmatprep.subr.bf16.mxu0 0
  %4349 = vmatpush1.bf16.msra.mxu0 %v3110
  %4350 = vmatprep.subr.bf16.mxu0 0
  %4351 = vmatpush1.bf16.msra.mxu0 %v3111
  %4352 = vmatprep.subr.bf16.mxu0 0
  %4353 = vmatpush1.bf16.msra.mxu0 %v3112
  %4354 = vmatprep.subr.bf16.mxu0 0
  %4355 = vmatpush1.bf16.msra.mxu0 %v3113
  %4356 = vmatprep.subr.bf16.mxu0 0
  %4357 = vmatpush1.bf16.msra.mxu0 %v3114
  %4358 = vmatprep.subr.bf16.mxu0 0
  %4359 = vmatpush1.bf16.msra.mxu0 %v3115
  %4360 = vmatprep.subr.bf16.mxu0 0
  %4361 = vmatpush1.bf16.msra.mxu0 %v3116
  %4362 = vmatprep.subr.bf16.mxu0 0
  %4363 = vmatpush1.bf16.msra.mxu0 %v3117
  %4364 = vmatprep.subr.bf16.mxu0 0
  %4365 = vmatpush1.bf16.msra.mxu0 %v3118
  %4366 = vmatprep.subr.bf16.mxu0 0
  %4367 = vmatpush1.bf16.msra.mxu0 %v3119
  %4368 = vmatprep.mubr.bf16.mxu0 %v1090
  %4369 = vmatmul.mubr.bf16.gmra.mrb[0].mxu0 %v1076
  %v4370 = vpop.f32.mrb[0].mxu0
  %v4371 = vadd.f32 %v4331, %v4370
  %v4372 = vpop.f32.mrb[0].mxu0
  %v4373 = vpop.f32.mrb[0].mxu0
  %v4374 = vpop.f32.mrb[0].mxu0
  %4375 = vdwg.mxu0
  %4376 = vmatprep.subr.bf16.mxu0 0
  %4377 = vmatpush1.bf16.msra.mxu0 %v3120
  %4378 = vmatprep.subr.bf16.mxu0 0
  %4379 = vmatpush1.bf16.msra.mxu0 %v3121
  %4380 = vmatprep.subr.bf16.mxu0 0
  %4381 = vmatpush1.bf16.msra.mxu0 %v3122
  %4382 = vmatprep.subr.bf16.mxu0 0
  %4383 = vmatpush1.bf16.msra.mxu0 %v3123
  %4384 = vmatprep.subr.bf16.mxu0 0
  %4385 = vmatpush1.bf16.msra.mxu0 %v3124
  %4386 = vmatprep.subr.bf16.mxu0 0
  %4387 = vmatpush1.bf16.msra.mxu0 %v3125
  %4388 = vmatprep.subr.bf16.mxu0 0
  %4389 = vmatpush1.bf16.msra.mxu0 %v3126
  %4390 = vmatprep.subr.bf16.mxu0 0
  %4391 = vmatpush1.bf16.msra.mxu0 %v3127
  %4392 = vmatprep.subr.bf16.mxu0 0
  %4393 = vmatpush1.bf16.msra.mxu0 %v3128
  %4394 = vmatprep.subr.bf16.mxu0 0
  %4395 = vmatpush1.bf16.msra.mxu0 %v3129
  %4396 = vmatprep.subr.bf16.mxu0 0
  %4397 = vmatpush1.bf16.msra.mxu0 %v3130
  %4398 = vmatprep.subr.bf16.mxu0 0
  %4399 = vmatpush1.bf16.msra.mxu0 %v3131
  %4400 = vmatprep.subr.bf16.mxu0 0
  %4401 = vmatpush1.bf16.msra.mxu0 %v3132
  %4402 = vmatprep.subr.bf16.mxu0 0
  %4403 = vmatpush1.bf16.msra.mxu0 %v3133
  %4404 = vmatprep.subr.bf16.mxu0 0
  %4405 = vmatpush1.bf16.msra.mxu0 %v3134
  %4406 = vmatprep.subr.bf16.mxu0 0
  %4407 = vmatpush1.bf16.msra.mxu0 %v3135
  %4408 = vmatprep.mubr.bf16.mxu0 %v1094
  %4409 = vmatmul.mubr.bf16.gmra.mrb[0].mxu0 %v1092
  %v4410 = vpop.f32.mrb[0].mxu0
  %v4411 = vadd.f32 %v4371, %v4410
  %v4412 = vpop.f32.mrb[0].mxu0
  %v4413 = vpop.f32.mrb[0].mxu0
  %v4414 = vpop.f32.mrb[0].mxu0
  %4415 = vdwg.mxu0
  %4416 = vmatprep.subr.bf16.mxu0 0
  %4417 = vmatpush1.bf16.msra.mxu0 %v3136
  %4418 = vmatprep.subr.bf16.mxu0 0
  %4419 = vmatpush1.bf16.msra.mxu0 %v3137
  %4420 = vmatprep.subr.bf16.mxu0 0
  %4421 = vmatpush1.bf16.msra.mxu0 %v3138
  %4422 = vmatprep.subr.bf16.mxu0 0
  %4423 = vmatpush1.bf16.msra.mxu0 %v3139
  %4424 = vmatprep.subr.bf16.mxu0 0
  %4425 = vmatpush1.bf16.msra.mxu0 %v3140
  %4426 = vmatprep.subr.bf16.mxu0 0
  %4427 = vmatpush1.bf16.msra.mxu0 %v3141
  %4428 = vmatprep.subr.bf16.mxu0 0
  %4429 = vmatpush1.bf16.msra.mxu0 %v3142
  %4430 = vmatprep.subr.bf16.mxu0 0
  %4431 = vmatpush1.bf16.msra.mxu0 %v3143
  %4432 = vmatprep.subr.bf16.mxu0 0
  %4433 = vmatpush1.bf16.msra.mxu0 %v3144
  %4434 = vmatprep.subr.bf16.mxu0 0
  %4435 = vmatpush1.bf16.msra.mxu0 %v3145
  %4436 = vmatprep.subr.bf16.mxu0 0
  %4437 = vmatpush1.bf16.msra.mxu0 %v3146
  %4438 = vmatprep.subr.bf16.mxu0 0
  %4439 = vmatpush1.bf16.msra.mxu0 %v3147
  %4440 = vmatprep.subr.bf16.mxu0 0
  %4441 = vmatpush1.bf16.msra.mxu0 %v3148
  %4442 = vmatprep.subr.bf16.mxu0 0
  %4443 = vmatpush1.bf16.msra.mxu0 %v3149
  %4444 = vmatprep.subr.bf16.mxu0 0
  %4445 = vmatpush1.bf16.msra.mxu0 %v3150
  %4446 = vmatprep.subr.bf16.mxu0 0
  %4447 = vmatpush1.bf16.msra.mxu0 %v3151
  %4448 = vmatprep.mubr.bf16.mxu0 %v1132
  %4449 = vmatmul.mubr.bf16.gmra.mrb[0].mxu0 %v1118
  %v4450 = vpop.f32.mrb[0].mxu0
  %v4451 = vadd.f32 %v4411, %v4450
  %v4452 = vpop.f32.mrb[0].mxu0
  %v4453 = vpop.f32.mrb[0].mxu0
  %v4454 = vpop.f32.mrb[0].mxu0
  %4455 = vdwg.mxu0
  %4456 = vmatprep.subr.bf16.mxu0 0
  %4457 = vmatpush1.bf16.msra.mxu0 %v3152
  %4458 = vmatprep.subr.bf16.mxu0 0
  %4459 = vmatpush1.bf16.msra.mxu0 %v3153
  %4460 = vmatprep.subr.bf16.mxu0 0
  %4461 = vmatpush1.bf16.msra.mxu0 %v3154
  %4462 = vmatprep.subr.bf16.mxu0 0
  %4463 = vmatpush1.bf16.msra.mxu0 %v3155
  %4464 = vmatprep.subr.bf16.mxu0 0
  %4465 = vmatpush1.bf16.msra.mxu0 %v3156
  %4466 = vmatprep.subr.bf16.mxu0 0
  %4467 = vmatpush1.bf16.msra.mxu0 %v3157
  %4468 = vmatprep.subr.bf16.mxu0 0
  %4469 = vmatpush1.bf16.msra.mxu0 %v3158
  %4470 = vmatprep.subr.bf16.mxu0 0
  %4471 = vmatpush1.bf16.msra.mxu0 %v3159
  %4472 = vmatprep.subr.bf16.mxu0 0
  %4473 = vmatpush1.bf16.msra.mxu0 %v3160
  %4474 = vmatprep.subr.bf16.mxu0 0
  %4475 = vmatpush1.bf16.msra.mxu0 %v3161
  %4476 = vmatprep.subr.bf16.mxu0 0
  %4477 = vmatpush1.bf16.msra.mxu0 %v3162
  %4478 = vmatprep.subr.bf16.mxu0 0
  %4479 = vmatpush1.bf16.msra.mxu0 %v3163
  %4480 = vmatprep.subr.bf16.mxu0 0
  %4481 = vmatpush1.bf16.msra.mxu0 %v3164
  %4482 = vmatprep.subr.bf16.mxu0 0
  %4483 = vmatpush1.bf16.msra.mxu0 %v3165
  %4484 = vmatprep.subr.bf16.mxu0 0
  %4485 = vmatpush1.bf16.msra.mxu0 %v3166
  %4486 = vmatprep.subr.bf16.mxu0 0
  %4487 = vmatpush1.bf16.msra.mxu0 %v3167
  %4488 = vmatprep.mubr.bf16.mxu0 %v1142
  %4489 = vmatmul.mubr.bf16.gmra.mrb[0].mxu0 %v1140
  %v4490 = vpop.f32.mrb[0].mxu0
  %v4491 = vadd.f32 %v4451, %v4490
  %v4492 = vpop.f32.mrb[0].mxu0
  %v4493 = vpop.f32.mrb[0].mxu0
  %v4494 = vpop.f32.mrb[0].mxu0
  %4495 = vdwg.mxu0
  %4496 = vmatprep.subr.bf16.mxu0 0
  %4497 = vmatpush1.bf16.msra.mxu0 %v3168
  %4498 = vmatprep.subr.bf16.mxu0 0
  %4499 = vmatpush1.bf16.msra.mxu0 %v3169
  %4500 = vmatprep.subr.bf16.mxu0 0
  %4501 = vmatpush1.bf16.msra.mxu0 %v3170
  %4502 = vmatprep.subr.bf16.mxu0 0
  %4503 = vmatpush1.bf16.msra.mxu0 %v3171
  %4504 = vmatprep.subr.bf16.mxu0 0
  %4505 = vmatpush1.bf16.msra.mxu0 %v3172
  %4506 = vmatprep.subr.bf16.mxu0 0
  %4507 = vmatpush1.bf16.msra.mxu0 %v3173
  %4508 = vmatprep.subr.bf16.mxu0 0
  %4509 = vmatpush1.bf16.msra.mxu0 %v3174
  %4510 = vmatprep.subr.bf16.mxu0 0
  %4511 = vmatpush1.bf16.msra.mxu0 %v3175
  %4512 = vmatprep.subr.bf16.mxu0 0
  %4513 = vmatpush1.bf16.msra.mxu0 %v3176
  %4514 = vmatprep.subr.bf16.mxu0 0
  %4515 = vmatpush1.bf16.msra.mxu0 %v3177
  %4516 = vmatprep.subr.bf16.mxu0 0
  %4517 = vmatpush1.bf16.msra.mxu0 %v3178
  %4518 = vmatprep.subr.bf16.mxu0 0
  %4519 = vmatpush1.bf16.msra.mxu0 %v3179
  %4520 = vmatprep.subr.bf16.mxu0 0
  %4521 = vmatpush1.bf16.msra.mxu0 %v3180
  %4522 = vmatprep.subr.bf16.mxu0 0
  %4523 = vmatpush1.bf16.msra.mxu0 %v3181
  %4524 = vmatprep.subr.bf16.mxu0 0
  %4525 = vmatpush1.bf16.msra.mxu0 %v3182
  %4526 = vmatprep.subr.bf16.mxu0 0
  %4527 = vmatpush1.bf16.msra.mxu0 %v3183
  %4528 = vmatprep.mubr.bf16.mxu0 %v1139
  %4529 = vmatmul.mubr.bf16.gmra.mrb[0].mxu0 %v1125
  %v4530 = vpop.f32.mrb[0].mxu0
  %v4531 = vadd.f32 %v4491, %v4530
  %v4532 = vpop.f32.mrb[0].mxu0
  %v4533 = vpop.f32.mrb[0].mxu0
  %v4534 = vpop.f32.mrb[0].mxu0
  %4535 = vdwg.mxu0
  %4536 = vmatprep.subr.bf16.mxu0 0
  %4537 = vmatpush1.bf16.msra.mxu0 %v3184
  %4538 = vmatprep.subr.bf16.mxu0 0
  %4539 = vmatpush1.bf16.msra.mxu0 %v3185
  %4540 = vmatprep.subr.bf16.mxu0 0
  %4541 = vmatpush1.bf16.msra.mxu0 %v3186
  %4542 = vmatprep.subr.bf16.mxu0 0
  %4543 = vmatpush1.bf16.msra.mxu0 %v3187
  %4544 = vmatprep.subr.bf16.mxu0 0
  %4545 = vmatpush1.bf16.msra.mxu0 %v3188
  %4546 = vmatprep.subr.bf16.mxu0 0
  %4547 = vmatpush1.bf16.msra.mxu0 %v3189
  %4548 = vmatprep.subr.bf16.mxu0 0
  %4549 = vmatpush1.bf16.msra.mxu0 %v3190
  %4550 = vmatprep.subr.bf16.mxu0 0
  %4551 = vmatpush1.bf16.msra.mxu0 %v3191
  %4552 = vmatprep.subr.bf16.mxu0 0
  %4553 = vmatpush1.bf16.msra.mxu0 %v3192
  %4554 = vmatprep.subr.bf16.mxu0 0
  %4555 = vmatpush1.bf16.msra.mxu0 %v3193
  %4556 = vmatprep.subr.bf16.mxu0 0
  %4557 = vmatpush1.bf16.msra.mxu0 %v3194
  %4558 = vmatprep.subr.bf16.mxu0 0
  %4559 = vmatpush1.bf16.msra.mxu0 %v3195
  %4560 = vmatprep.subr.bf16.mxu0 0
  %4561 = vmatpush1.bf16.msra.mxu0 %v3196
  %4562 = vmatprep.subr.bf16.mxu0 0
  %4563 = vmatpush1.bf16.msra.mxu0 %v3197
  %4564 = vmatprep.subr.bf16.mxu0 0
  %4565 = vmatpush1.bf16.msra.mxu0 %v3198
  %4566 = vmatprep.subr.bf16.mxu0 0
  %4567 = vmatpush1.bf16.msra.mxu0 %v3199
  %4568 = vmatprep.mubr.bf16.mxu0 %v1143
  %4569 = vmatmul.mubr.bf16.gmra.mrb[0].mxu0 %v1141
  %v4570 = vpop.f32.mrb[0].mxu0
  %v4571 = vadd.f32 %v4531, %v4570
  %v4572 = vpop.f32.mrb[0].mxu0
  %v4573 = vpop.f32.mrb[0].mxu0
  %v4574 = vpop.f32.mrb[0].mxu0
  %4575 = vdwg.mxu0
  %4576 = vmatprep.subr.bf16.mxu0 0
  %4577 = vmatpush1.bf16.msra.mxu0 %v3200
  %4578 = vmatprep.subr.bf16.mxu0 0
  %4579 = vmatpush1.bf16.msra.mxu0 %v3201
  %4580 = vmatprep.subr.bf16.mxu0 0
  %4581 = vmatpush1.bf16.msra.mxu0 %v3202
  %4582 = vmatprep.subr.bf16.mxu0 0
  %4583 = vmatpush1.bf16.msra.mxu0 %v3203
  %4584 = vmatprep.subr.bf16.mxu0 0
  %4585 = vmatpush1.bf16.msra.mxu0 %v3204
  %4586 = vmatprep.subr.bf16.mxu0 0
  %4587 = vmatpush1.bf16.msra.mxu0 %v3205
  %4588 = vmatprep.subr.bf16.mxu0 0
  %4589 = vmatpush1.bf16.msra.mxu0 %v3206
  %4590 = vmatprep.subr.bf16.mxu0 0
  %4591 = vmatpush1.bf16.msra.mxu0 %v3207
  %4592 = vmatprep.subr.bf16.mxu0 0
  %4593 = vmatpush1.bf16.msra.mxu0 %v3208
  %4594 = vmatprep.subr.bf16.mxu0 0
  %4595 = vmatpush1.bf16.msra.mxu0 %v3209
  %4596 = vmatprep.subr.bf16.mxu0 0
  %4597 = vmatpush1.bf16.msra.mxu0 %v3210
  %4598 = vmatprep.subr.bf16.mxu0 0
  %4599 = vmatpush1.bf16.msra.mxu0 %v3211
  %4600 = vmatprep.subr.bf16.mxu0 0
  %4601 = vmatpush1.bf16.msra.mxu0 %v3212
  %4602 = vmatprep.subr.bf16.mxu0 0
  %4603 = vmatpush1.bf16.msra.mxu0 %v3213
  %4604 = vmatprep.subr.bf16.mxu0 0
  %4605 = vmatpush1.bf16.msra.mxu0 %v3214
  %4606 = vmatprep.subr.bf16.mxu0 0
  %4607 = vmatpush1.bf16.msra.mxu0 %v3215
  %4608 = vmatprep.mubr.bf16.mxu0 %v1165
  %4609 = vmatmul.mubr.bf16.gmra.mrb[0].mxu0 %v1158
  %v4610 = vpop.f32.mrb[0].mxu0
  %v4611 = vadd.f32 %v4571, %v4610
  %v4612 = vpop.f32.mrb[0].mxu0
  %v4613 = vpop.f32.mrb[0].mxu0
  %v4614 = vpop.f32.mrb[0].mxu0
  %4615 = vdwg.mxu0
  %v4616 = vmax.f32 %v4611, 0.0
  %v4617 = vpack.c.bf16 %v4616, %v4616
  %v4618 = vld [vmem:[%s3] sm:$0xf]
  %v4619 = vld [vmem:[%s3 + $0x4] sm:$0xf]
  %v4620 = vld [vmem:[%s3 + $0x8] sm:$0xf]
  %v4621 = vld [vmem:[%s3 + $0xc] sm:$0xf]
  %v4622 = vld [vmem:[%s3 + $0x10] sm:$0xf]
  %v4623 = vld [vmem:[%s3 + $0x14] sm:$0xf]
  %v4624 = vld [vmem:[%s3 + $0x18] sm:$0xf]
  %v4625 = vld [vmem:[%s3 + $0x1c] sm:$0xf]
  %v4626 = vld [vmem:[%s3 + $0x20] sm:$0xf]
  %v4627 = vld [vmem:[%s3 + $0x24] sm:$0xf]
  %v4628 = vld [vmem:[%s3 + $0x28] sm:$0xf]
  %v4629 = vld [vmem:[%s3 + $0x2c] sm:$0xf]
  %v4630 = vld [vmem:[%s3 + $0x30] sm:$0x3]
  %v4631 = vld [vmem:[%s4] sm:$0x1]
  %v4633 = vlaneseq
  %v4634 = vshrl.u32 %v4633, 7
  %v4635 = vsub.s32 0, %v4634
  %v4636 = vrot.slane %v4631, %v4635
  %v4651 = vunpack.c.l.b16 %v4618
  %v4652 = vunpack.c.l.b16 %v4619
  %v4653 = vunpack.c.l.b16 %v4620
  %v4654 = vunpack.c.l.b16 %v4621
  %v4655 = vunpack.c.l.b16 %v4622
  %v4656 = vunpack.c.l.b16 %v4623
  %v4657 = vunpack.c.l.b16 %v4624
  %v4658 = vunpack.c.l.b16 %v4625
  %v4659 = vunpack.c.l.b16 %v4626
  %v4660 = vunpack.c.l.b16 %v4627
  %v4661 = vunpack.c.l.b16 %v4628
  %v4662 = vunpack.c.l.b16 %v4629
  %v4663 = vunpack.c.l.b16 %v4630
  %v4664 = vpack.c.b16 %v4652, %v4651
  %v4665 = vpack.c.b16 %v4654, %v4653
  %v4666 = vpack.c.b16 %v4656, %v4655
  %v4667 = vpack.c.b16 %v4658, %v4657
  %v4668 = vpack.c.b16 %v4660, %v4659
  %v4669 = vpack.c.b16 %v4662, %v4661
  %v4670 = vpack.c.b16 %v4663, %v4663
  %vm4677 = vcmask 818176
  %v4679 = vsel %vm4677, %v4617, 0
  %vm4681 = vcmask 1041408
  %v4683 = vsel %vm4681, %v4670, 0
  %4685 = vmatprep.subr.bf16.mxu0 0
  %4686 = vmatpush1.bf16.msra.mxu0 %v4664
  %4687 = vmatprep.subr.bf16.mxu0 0
  %4688 = vmatpush1.bf16.msra.mxu0 %v4665
  %4689 = vmatprep.subr.bf16.mxu0 0
  %4690 = vmatpush1.bf16.msra.mxu0 %v4666
  %4691 = vmatprep.subr.bf16.mxu0 0
  %4692 = vmatpush1.bf16.msra.mxu0 %v4667
  %4693 = vmatprep.subr.bf16.mxu0 0
  %4694 = vmatpush1.bf16.msra.mxu0 %v4668
  %4695 = vmatprep.subr.bf16.mxu0 0
  %4696 = vmatpush1.bf16.msra.mxu0 %v4669
  %4697 = vmatprep.subr.bf16.mxu0 0
  %4698 = vmatpush1.bf16.msra.mxu0 %v4683
  %4699 = vmatprep.subr.bf16.mxu0 0
  %4700 = vmatpush1.bf16.msra.mxu0 0
  %4701 = vmatprep.subr.bf16.mxu0 0
  %4702 = vmatpush1.bf16.msra.mxu0 0
  %4703 = vmatprep.subr.bf16.mxu0 0
  %4704 = vmatpush1.bf16.msra.mxu0 0
  %4705 = vmatprep.subr.bf16.mxu0 0
  %4706 = vmatpush1.bf16.msra.mxu0 0
  %4707 = vmatprep.subr.bf16.mxu0 0
  %4708 = vmatpush1.bf16.msra.mxu0 0
  %4709 = vmatprep.subr.bf16.mxu0 0
  %4710 = vmatpush1.bf16.msra.mxu0 0
  %4711 = vmatprep.subr.bf16.mxu0 0
  %4712 = vmatpush1.bf16.msra.mxu0 0
  %4713 = vmatprep.subr.bf16.mxu0 0
  %4714 = vmatpush1.bf16.msra.mxu0 0
  %4715 = vmatprep.subr.bf16.mxu0 0
  %4716 = vmatpush1.bf16.msra.mxu0 0
  %4717 = vmatprep.mubr.bf16.mxu0 0
  %4718 = vmatmul.mubr.bf16.gmra.mrb[0].mxu0 %v4679
  %v4719 = vpop.f32.mrb[0].mxu0
  %v4720 = vadd.f32 %v4636, %v4719
  %v4721 = vpop.f32.mrb[0].mxu0
  %v4722 = vpop.f32.mrb[0].mxu0
  %v4723 = vpop.f32.mrb[0].mxu0
  %4724 = vdwg.mxu0
  %v4725 = vmax.f32 %v4720, 0.0
  %v4726 = vld [vmem:[%s5] sm:$0x1]
  %v4728 = vlaneseq
  %v4729 = vshrl.u32 %v4728, 7
  %v4730 = vsub.s32 0, %v4729
  %v4731 = vrot.slane %v4726, %v4730
  %v4733 = vmul.f32 %v4725, %v4731
  %vm4734 = vcmask 517120
  %v4735 = vsel %vm4734, %v4733, 0.0
  %4736 = vadd.xlane.f32.xlu0 %v4735
  %v4737 = vpop.xlane.xlu0 %4736
  %v4738 = vld [vmem:[#allocation2] sm:$0x1]
  %v4740 = vlaneseq
  %v4741 = vshrl.u32 %v4740, 7
  %v4742 = vsub.s32 0, %v4741
  %v4743 = vrot.slane %v4738, %v4742
  %v4745 = vadd.f32 %v4737, %v4743
  %v4746 = vsub.f32 0.0, %v4745
  %v4747 = vmul.f32 %v4746, 1.442695
  %v4748 = vpow.pop %v4747
  %v4749 = vadd.f32 %v4748, 1.0
  %v4750 = vrcp.pop %v4749
  %v4751 = vmul.f32 1.0, %v4750
  %vm4752 = vcmask 1024
  %4753 = vst.msk [vmem:[%s7] sm:$0x3] %vm4752, %v4751
  // Predicated region
  $region30: #{multi_cnn_forward.3} parent=0 // pred_check
    _
  $region31: #{multi_cnn_forward.3} parent=0 // pred_check_branch
    %4755 = sbr.rel (0) target = $region33
  $region32: #{multi_cnn_forward.3} parent=0 // pred_region
    _
  $region33: #{multi_cnn_forward.3} parent=0 // pred_fallthru
    _
  // Predicated region
  $region34: #{multi_cnn_forward.3} parent=0 // pred_check
    _
  $region35: #{multi_cnn_forward.3} parent=0 // pred_check_branch
    %4757 = sbr.rel (0) target = $region37
  $region36: #{multi_cnn_forward.3} parent=0 // pred_region
    _
  $region37: #{multi_cnn_forward.3} parent=0 // pred_fallthru
    _

</llo_original>
